<compile_context>
chip_gen: v7x
topology: tpu7x:2x2x1
jax: 0.10.0
libtpu: 0.0.40
codegen_flags: <defaults>
</compile_context>

<pallas_src>
import jax
import jax.numpy as jnp
import numpy as np
from jax.experimental import pallas as pl
from jax.experimental.pallas import tpu as pltpu

# ---------------------------- scaled-down config -----------------------------
BATCH = 2
CH = 64            # last-conv channels (512 in real VGG16, /8)
HW_IN = 14         # last-conv spatial size (VGG16: 14x14 for 224 input)
HP = WP = HW_IN // 2   # 7x7 after the 2x2/2 max pool (avgpool(7,7) is identity)
FC_HIDDEN = 256    # scaled stand-in for 4096
NUM_CLASSES = 128  # scaled stand-in for 1000
FLAT_DIM = CH * HP * WP   # 3136 (real: 25088)

_ROW = HW_IN * CH  # lanes per image row in the lane-flat layout (896)


# ------------------------------ the fused kernel ------------------------------
def _vgg16prune_kernel(x_ref, m_ref, w1_ref, b1_ref, w2_ref, b2_ref,
                       w3_ref, b3_ref, pen_ref, out_ref):
    """x_ref : (B, H*W*C) f32, lane index = (y*W + x)*C + c
       m_ref : (1, W*C)  f32, per-channel mask tiled over x (mask[c] at x*C+c)
       w1_ref: (49*C, HID) bf16, row index = (i*7+j)*C + c   (permuted FC1)
       w2_ref: (HID, HID) bf16,  w3_ref: (HID, NCLS) bf16
       b*_ref: (1, ...)   f32 biases
       pen_ref: (B, HID) f32,  out_ref: (B, NCLS) f32"""
    m = m_ref[...]                                              # (1, W*C)
    h1 = jnp.zeros((BATCH, FC_HIDDEN), jnp.float32)

    # masked 2x2/2 max-pool + FC1, fused: 49 pooled (B, C) pieces, each consumed
    # immediately by a small MXU dot against its (C, HID) weight block.
    for i in range(HP):                                         # pooled row
        top = x_ref[:, (2 * i) * _ROW:(2 * i + 1) * _ROW] * m   # y = 2i   (masked)
        bot = x_ref[:, (2 * i + 1) * _ROW:(2 * i + 2) * _ROW] * m  # y = 2i+1
        rm = jnp.maximum(top, bot)                              # (B, W*C)
        for j in range(WP):                                     # pooled col
            p = jnp.maximum(rm[:, (2 * j) * CH:(2 * j + 1) * CH],
                            rm[:, (2 * j + 1) * CH:(2 * j + 2) * CH])  # (B, C)
            k0 = (i * WP + j) * CH
            h1 = h1 + jnp.dot(p.astype(jnp.bfloat16),
                              w1_ref[k0:k0 + CH, :],
                              preferred_element_type=jnp.float32)

    # classifier_0: Linear+ReLU, Dropout, Linear+ReLU, Dropout
    # TODO(synk): nn.Dropout treated as identity (eval mode); train-mode RNG not reproduced.
    h1 = jnp.maximum(h1 + b1_ref[...], 0.0)
    h2 = jnp.dot(h1.astype(jnp.bfloat16), w2_ref[...],
                 preferred_element_type=jnp.float32)
    h2 = jnp.maximum(h2 + b2_ref[...], 0.0)
    pen_ref[...] = h2                                           # penultimate
    # classifier_1: final Linear
    out_ref[...] = jnp.dot(h2.astype(jnp.bfloat16), w3_ref[...],
                           preferred_element_type=jnp.float32) + b3_ref[...]


_VMEM_SPEC = pl.BlockSpec(memory_space=pltpu.MemorySpace.VMEM)

_VGG_CALL = pl.pallas_call(
    _vgg16prune_kernel,
    out_shape=(jax.ShapeDtypeStruct((BATCH, FC_HIDDEN), jnp.float32),
               jax.ShapeDtypeStruct((BATCH, NUM_CLASSES), jnp.float32)),
    in_specs=[_VMEM_SPEC] * 8,
    out_specs=(_VMEM_SPEC, _VMEM_SPEC),
)


# ------------------------------ params / packing ------------------------------
def init_params(key):
    """Deterministic synthetic classifier weights at the scaled VGG16 shapes.
    Linear weights stored as (in, out); biases as (1, out).
    (Pretrained torchvision / OSF weights can't be downloaded here.)"""
    dims = [(FLAT_DIM, FC_HIDDEN), (FC_HIDDEN, FC_HIDDEN), (FC_HIDDEN, NUM_CLASSES)]
    params = []
    for din, dout in dims:
        key, kw, kb = jax.random.split(key, 3)
        w = jax.random.normal(kw, (din, dout), jnp.float32) * jnp.sqrt(2.0 / din)
        b = jax.random.normal(kb, (1, dout), jnp.float32) * 0.01
        params.append((w, b))
    return params


def pack_params(params):
    """One-time preprocessing (outside jit):
      * FC1 rows permuted from PyTorch flatten order c*49 + (i*7+j) to the
        kernel's pooled-piece order (i*7+j)*C + c (exact reindexing);
      * matmul weights cast to bf16 (f32 biases / epilogues)."""
    (w1, b1), (w2, b2), (w3, b3) = params
    w1p = (w1.reshape(CH, HP * WP, FC_HIDDEN)
             .transpose(1, 0, 2)
             .reshape(HP * WP * CH, FC_HIDDEN)
             .astype(jnp.bfloat16))
    return (w1p, b1.astype(jnp.float32),
            w2.astype(jnp.bfloat16), b2.astype(jnp.float32),
            w3.astype(jnp.bfloat16), b3.astype(jnp.float32))


# --------------------------------- forward ------------------------------------
@jax.jit
def vgg16prune_forward(packed, input_img, mask):
    """input_img: (B, C, H, W) last-conv feature map (NCHW); mask: (C,) per-channel.
    Returns (penultimate (B, FC_HIDDEN), last_fc (B, NUM_CLASSES))."""
    # Layout plumbing only: NCHW -> NHWC -> lane-flat (B, H*W*C).
    x2 = jnp.transpose(input_img, (0, 2, 3, 1)).astype(jnp.float32).reshape(
        BATCH, HW_IN * HW_IN * CH)
    m_row = jnp.tile(mask.astype(jnp.float32), (HW_IN,)).reshape(1, _ROW)
    w1p, b1, w2, b2, w3, b3 = packed
    penult, last_fc = _VGG_CALL(x2, m_row, w1p, b1, w2, b2, w3, b3)
    # TODO(synk): .detach().cpu().numpy() host transfer left to the caller.
    return penult, last_fc


# ------------------------------ pure-JAX reference ----------------------------
def _reference(params, input_img, mask):
    x = input_img.astype(jnp.float32) * mask.astype(jnp.float32)[None, :, None, None]
    xp = x.reshape(BATCH, CH, HP, 2, WP, 2).max(axis=(3, 5))   # MaxPool2d(2,2)
    flat = xp.reshape(BATCH, FLAT_DIM)                         # avgpool(7,7)=id, flatten

    def lin(a, w, b):
        return jnp.dot(a.astype(jnp.bfloat16), w.astype(jnp.bfloat16),
                       preferred_element_type=jnp.float32) + b

    (w1, b1), (w2, b2), (w3, b3) = params
    h1 = jnp.maximum(lin(flat, w1, b1), 0.0)
    h2 = jnp.maximum(lin(h1, w2, b2), 0.0)
    return h2, lin(h2, w3, b3)


if __name__ == "__main__":
    key = jax.random.PRNGKey(0)
    kx, km, kp = jax.random.split(key, 3)
    input_img = jax.random.normal(kx, (BATCH, CH, HW_IN, HW_IN), jnp.float32)  # NCHW
    mask = (jax.random.uniform(km, (CH,)) > 0.5).astype(jnp.float32)           # per-channel prune mask
    params = init_params(kp)
    packed = pack_params(params)          # one-time weight packing (outside jit)

    penult, last_fc = vgg16prune_forward(packed, input_img, mask)
    jax.block_until_ready((penult, last_fc))

    assert penult.shape == (BATCH, FC_HIDDEN)
    assert last_fc.shape == (BATCH, NUM_CLASSES)
    pen_ref, fc_ref = _reference(params, input_img, mask)
    np.testing.assert_allclose(np.asarray(penult), np.asarray(pen_ref), rtol=2e-2, atol=2e-2)
    np.testing.assert_allclose(np.asarray(last_fc), np.asarray(fc_ref), rtol=2e-2, atol=2e-2)
    print("KERNEL_OK")
</pallas_src>

<mosaic_0001>
module attributes {stable_mosaic.version = 11 : i64} {
  func.func @_vgg16prune_kernel(%arg0: memref<2x12544xf32, #tpu.memory_space<vmem>>, %arg1: memref<1x896xf32, #tpu.memory_space<vmem>>, %arg2: memref<3136x256xbf16, #tpu.memory_space<vmem>>, %arg3: memref<1x256xf32, #tpu.memory_space<vmem>>, %arg4: memref<256x256xbf16, #tpu.memory_space<vmem>>, %arg5: memref<1x256xf32, #tpu.memory_space<vmem>>, %arg6: memref<256x128xbf16, #tpu.memory_space<vmem>>, %arg7: memref<1x128xf32, #tpu.memory_space<vmem>>, %arg8: memref<2x256xf32, #tpu.memory_space<vmem>>, %arg9: memref<2x128xf32, #tpu.memory_space<vmem>>) attributes {dimension_semantics = [], scalar_prefetch = 0 : i64, scratch_operands = 0 : i64, tpu.core_type = #tpu.core_type<tc>} {
    %c0 = arith.constant 0 : index
    %c0_0 = arith.constant 0 : index
    %0 = vector.load %arg1[%c0, %c0_0] : memref<1x896xf32, #tpu.memory_space<vmem>>, vector<1x896xf32>
    %cst = arith.constant 0.000000e+00 : f32
    %1 = vector.broadcast %cst : f32 to vector<2x256xf32>
    %c0_1 = arith.constant 0 : index
    %c0_2 = arith.constant 0 : index
    %2 = vector.load %arg0[%c0_1, %c0_2] : memref<2x12544xf32, #tpu.memory_space<vmem>>, vector<2x896xf32>
    %3 = vector.broadcast %0 : vector<1x896xf32> to vector<2x896xf32>
    %4 = arith.mulf %2, %3 : vector<2x896xf32>
    %c0_3 = arith.constant 0 : index
    %c896 = arith.constant 896 : index
    %5 = vector.load %arg0[%c0_3, %c896] : memref<2x12544xf32, #tpu.memory_space<vmem>>, vector<2x896xf32>
    %6 = vector.broadcast %0 : vector<1x896xf32> to vector<2x896xf32>
    %7 = arith.mulf %5, %6 : vector<2x896xf32>
    %8 = arith.maximumf %4, %7 : vector<2x896xf32>
    %9 = vector.extract_strided_slice %8 {offsets = [0, 0], sizes = [2, 64], strides = [1, 1]} : vector<2x896xf32> to vector<2x64xf32>
    %10 = vector.extract_strided_slice %8 {offsets = [0, 64], sizes = [2, 64], strides = [1, 1]} : vector<2x896xf32> to vector<2x64xf32>
    %11 = arith.maximumf %9, %10 : vector<2x64xf32>
    %12 = arith.truncf %11 : vector<2x64xf32> to vector<2x64xbf16>
    %c0_4 = arith.constant 0 : index
    %c0_5 = arith.constant 0 : index
    %13 = vector.load %arg2[%c0_4, %c0_5] : memref<3136x256xbf16, #tpu.memory_space<vmem>>, vector<64x256xbf16>
    %cst_6 = arith.constant dense<0.000000e+00> : vector<2x256xf32>
    %14 = tpu.matmul %12, %13, %cst_6 {dimension_numbers = #tpu.dot_dimension_numbers<[1], [0], [0], [1], [0, 0, 1, 1], [], []>} : vector<2x64xbf16>, vector<64x256xbf16>, vector<2x256xf32> -> vector<2x256xf32>
    %15 = arith.addf %1, %14 : vector<2x256xf32>
    %16 = vector.extract_strided_slice %8 {offsets = [0, 128], sizes = [2, 64], strides = [1, 1]} : vector<2x896xf32> to vector<2x64xf32>
    %17 = vector.extract_strided_slice %8 {offsets = [0, 192], sizes = [2, 64], strides = [1, 1]} : vector<2x896xf32> to vector<2x64xf32>
    %18 = arith.maximumf %16, %17 : vector<2x64xf32>
    %19 = arith.truncf %18 : vector<2x64xf32> to vector<2x64xbf16>
    %c64 = arith.constant 64 : index
    %c0_7 = arith.constant 0 : index
    %20 = vector.load %arg2[%c64, %c0_7] : memref<3136x256xbf16, #tpu.memory_space<vmem>>, vector<64x256xbf16>
    %cst_8 = arith.constant dense<0.000000e+00> : vector<2x256xf32>
    %21 = tpu.matmul %19, %20, %cst_8 {dimension_numbers = #tpu.dot_dimension_numbers<[1], [0], [0], [1], [0, 0, 1, 1], [], []>} : vector<2x64xbf16>, vector<64x256xbf16>, vector<2x256xf32> -> vector<2x256xf32>
    %22 = arith.addf %15, %21 : vector<2x256xf32>
    %23 = vector.extract_strided_slice %8 {offsets = [0, 256], sizes = [2, 64], strides = [1, 1]} : vector<2x896xf32> to vector<2x64xf32>
    %24 = vector.extract_strided_slice %8 {offsets = [0, 320], sizes = [2, 64], strides = [1, 1]} : vector<2x896xf32> to vector<2x64xf32>
    %25 = arith.maximumf %23, %24 : vector<2x64xf32>
    %26 = arith.truncf %25 : vector<2x64xf32> to vector<2x64xbf16>
    %c128 = arith.constant 128 : index
    %c0_9 = arith.constant 0 : index
    %27 = vector.load %arg2[%c128, %c0_9] : memref<3136x256xbf16, #tpu.memory_space<vmem>>, vector<64x256xbf16>
    %cst_10 = arith.constant dense<0.000000e+00> : vector<2x256xf32>
    %28 = tpu.matmul %26, %27, %cst_10 {dimension_numbers = #tpu.dot_dimension_numbers<[1], [0], [0], [1], [0, 0, 1, 1], [], []>} : vector<2x64xbf16>, vector<64x256xbf16>, vector<2x256xf32> -> vector<2x256xf32>
    %29 = arith.addf %22, %28 : vector<2x256xf32>
    %30 = vector.extract_strided_slice %8 {offsets = [0, 384], sizes = [2, 64], strides = [1, 1]} : vector<2x896xf32> to vector<2x64xf32>
    %31 = vector.extract_strided_slice %8 {offsets = [0, 448], sizes = [2, 64], strides = [1, 1]} : vector<2x896xf32> to vector<2x64xf32>
    %32 = arith.maximumf %30, %31 : vector<2x64xf32>
    %33 = arith.truncf %32 : vector<2x64xf32> to vector<2x64xbf16>
    %c192 = arith.constant 192 : index
    %c0_11 = arith.constant 0 : index
    %34 = vector.load %arg2[%c192, %c0_11] : memref<3136x256xbf16, #tpu.memory_space<vmem>>, vector<64x256xbf16>
    %cst_12 = arith.constant dense<0.000000e+00> : vector<2x256xf32>
    %35 = tpu.matmul %33, %34, %cst_12 {dimension_numbers = #tpu.dot_dimension_numbers<[1], [0], [0], [1], [0, 0, 1, 1], [], []>} : vector<2x64xbf16>, vector<64x256xbf16>, vector<2x256xf32> -> vector<2x256xf32>
    %36 = arith.addf %29, %35 : vector<2x256xf32>
    %37 = vector.extract_strided_slice %8 {offsets = [0, 512], sizes = [2, 64], strides = [1, 1]} : vector<2x896xf32> to vector<2x64xf32>
    %38 = vector.extract_strided_slice %8 {offsets = [0, 576], sizes = [2, 64], strides = [1, 1]} : vector<2x896xf32> to vector<2x64xf32>
    %39 = arith.maximumf %37, %38 : vector<2x64xf32>
    %40 = arith.truncf %39 : vector<2x64xf32> to vector<2x64xbf16>
    %c256 = arith.constant 256 : index
    %c0_13 = arith.constant 0 : index
    %41 = vector.load %arg2[%c256, %c0_13] : memref<3136x256xbf16, #tpu.memory_space<vmem>>, vector<64x256xbf16>
    %cst_14 = arith.constant dense<0.000000e+00> : vector<2x256xf32>
    %42 = tpu.matmul %40, %41, %cst_14 {dimension_numbers = #tpu.dot_dimension_numbers<[1], [0], [0], [1], [0, 0, 1, 1], [], []>} : vector<2x64xbf16>, vector<64x256xbf16>, vector<2x256xf32> -> vector<2x256xf32>
    %43 = arith.addf %36, %42 : vector<2x256xf32>
    %44 = vector.extract_strided_slice %8 {offsets = [0, 640], sizes = [2, 64], strides = [1, 1]} : vector<2x896xf32> to vector<2x64xf32>
    %45 = vector.extract_strided_slice %8 {offsets = [0, 704], sizes = [2, 64], strides = [1, 1]} : vector<2x896xf32> to vector<2x64xf32>
    %46 = arith.maximumf %44, %45 : vector<2x64xf32>
    %47 = arith.truncf %46 : vector<2x64xf32> to vector<2x64xbf16>
    %c320 = arith.constant 320 : index
    %c0_15 = arith.constant 0 : index
    %48 = vector.load %arg2[%c320, %c0_15] : memref<3136x256xbf16, #tpu.memory_space<vmem>>, vector<64x256xbf16>
    %cst_16 = arith.constant dense<0.000000e+00> : vector<2x256xf32>
    %49 = tpu.matmul %47, %48, %cst_16 {dimension_numbers = #tpu.dot_dimension_numbers<[1], [0], [0], [1], [0, 0, 1, 1], [], []>} : vector<2x64xbf16>, vector<64x256xbf16>, vector<2x256xf32> -> vector<2x256xf32>
    %50 = arith.addf %43, %49 : vector<2x256xf32>
    %51 = vector.extract_strided_slice %8 {offsets = [0, 768], sizes = [2, 64], strides = [1, 1]} : vector<2x896xf32> to vector<2x64xf32>
    %52 = vector.extract_strided_slice %8 {offsets = [0, 832], sizes = [2, 64], strides = [1, 1]} : vector<2x896xf32> to vector<2x64xf32>
    %53 = arith.maximumf %51, %52 : vector<2x64xf32>
    %54 = arith.truncf %53 : vector<2x64xf32> to vector<2x64xbf16>
    %c384 = arith.constant 384 : index
    %c0_17 = arith.constant 0 : index
    %55 = vector.load %arg2[%c384, %c0_17] : memref<3136x256xbf16, #tpu.memory_space<vmem>>, vector<64x256xbf16>
    %cst_18 = arith.constant dense<0.000000e+00> : vector<2x256xf32>
    %56 = tpu.matmul %54, %55, %cst_18 {dimension_numbers = #tpu.dot_dimension_numbers<[1], [0], [0], [1], [0, 0, 1, 1], [], []>} : vector<2x64xbf16>, vector<64x256xbf16>, vector<2x256xf32> -> vector<2x256xf32>
    %57 = arith.addf %50, %56 : vector<2x256xf32>
    %c0_19 = arith.constant 0 : index
    %c1792 = arith.constant 1792 : index
    %58 = vector.load %arg0[%c0_19, %c1792] : memref<2x12544xf32, #tpu.memory_space<vmem>>, vector<2x896xf32>
    %59 = vector.broadcast %0 : vector<1x896xf32> to vector<2x896xf32>
    %60 = arith.mulf %58, %59 : vector<2x896xf32>
    %c0_20 = arith.constant 0 : index
    %c2688 = arith.constant 2688 : index
    %61 = vector.load %arg0[%c0_20, %c2688] : memref<2x12544xf32, #tpu.memory_space<vmem>>, vector<2x896xf32>
    %62 = vector.broadcast %0 : vector<1x896xf32> to vector<2x896xf32>
    %63 = arith.mulf %61, %62 : vector<2x896xf32>
    %64 = arith.maximumf %60, %63 : vector<2x896xf32>
    %65 = vector.extract_strided_slice %64 {offsets = [0, 0], sizes = [2, 64], strides = [1, 1]} : vector<2x896xf32> to vector<2x64xf32>
    %66 = vector.extract_strided_slice %64 {offsets = [0, 64], sizes = [2, 64], strides = [1, 1]} : vector<2x896xf32> to vector<2x64xf32>
    %67 = arith.maximumf %65, %66 : vector<2x64xf32>
    %68 = arith.truncf %67 : vector<2x64xf32> to vector<2x64xbf16>
    %c448 = arith.constant 448 : index
    %c0_21 = arith.constant 0 : index
    %69 = vector.load %arg2[%c448, %c0_21] : memref<3136x256xbf16, #tpu.memory_space<vmem>>, vector<64x256xbf16>
    %cst_22 = arith.constant dense<0.000000e+00> : vector<2x256xf32>
    %70 = tpu.matmul %68, %69, %cst_22 {dimension_numbers = #tpu.dot_dimension_numbers<[1], [0], [0], [1], [0, 0, 1, 1], [], []>} : vector<2x64xbf16>, vector<64x256xbf16>, vector<2x256xf32> -> vector<2x256xf32>
    %71 = arith.addf %57, %70 : vector<2x256xf32>
    %72 = vector.extract_strided_slice %64 {offsets = [0, 128], sizes = [2, 64], strides = [1, 1]} : vector<2x896xf32> to vector<2x64xf32>
    %73 = vector.extract_strided_slice %64 {offsets = [0, 192], sizes = [2, 64], strides = [1, 1]} : vector<2x896xf32> to vector<2x64xf32>
    %74 = arith.maximumf %72, %73 : vector<2x64xf32>
    %75 = arith.truncf %74 : vector<2x64xf32> to vector<2x64xbf16>
    %c512 = arith.constant 512 : index
    %c0_23 = arith.constant 0 : index
    %76 = vector.load %arg2[%c512, %c0_23] : memref<3136x256xbf16, #tpu.memory_space<vmem>>, vector<64x256xbf16>
    %cst_24 = arith.constant dense<0.000000e+00> : vector<2x256xf32>
    %77 = tpu.matmul %75, %76, %cst_24 {dimension_numbers = #tpu.dot_dimension_numbers<[1], [0], [0], [1], [0, 0, 1, 1], [], []>} : vector<2x64xbf16>, vector<64x256xbf16>, vector<2x256xf32> -> vector<2x256xf32>
    %78 = arith.addf %71, %77 : vector<2x256xf32>
    %79 = vector.extract_strided_slice %64 {offsets = [0, 256], sizes = [2, 64], strides = [1, 1]} : vector<2x896xf32> to vector<2x64xf32>
    %80 = vector.extract_strided_slice %64 {offsets = [0, 320], sizes = [2, 64], strides = [1, 1]} : vector<2x896xf32> to vector<2x64xf32>
    %81 = arith.maximumf %79, %80 : vector<2x64xf32>
    %82 = arith.truncf %81 : vector<2x64xf32> to vector<2x64xbf16>
    %c576 = arith.constant 576 : index
    %c0_25 = arith.constant 0 : index
    %83 = vector.load %arg2[%c576, %c0_25] : memref<3136x256xbf16, #tpu.memory_space<vmem>>, vector<64x256xbf16>
    %cst_26 = arith.constant dense<0.000000e+00> : vector<2x256xf32>
    %84 = tpu.matmul %82, %83, %cst_26 {dimension_numbers = #tpu.dot_dimension_numbers<[1], [0], [0], [1], [0, 0, 1, 1], [], []>} : vector<2x64xbf16>, vector<64x256xbf16>, vector<2x256xf32> -> vector<2x256xf32>
    %85 = arith.addf %78, %84 : vector<2x256xf32>
    %86 = vector.extract_strided_slice %64 {offsets = [0, 384], sizes = [2, 64], strides = [1, 1]} : vector<2x896xf32> to vector<2x64xf32>
    %87 = vector.extract_strided_slice %64 {offsets = [0, 448], sizes = [2, 64], strides = [1, 1]} : vector<2x896xf32> to vector<2x64xf32>
    %88 = arith.maximumf %86, %87 : vector<2x64xf32>
    %89 = arith.truncf %88 : vector<2x64xf32> to vector<2x64xbf16>
    %c640 = arith.constant 640 : index
    %c0_27 = arith.constant 0 : index
    %90 = vector.load %arg2[%c640, %c0_27] : memref<3136x256xbf16, #tpu.memory_space<vmem>>, vector<64x256xbf16>
    %cst_28 = arith.constant dense<0.000000e+00> : vector<2x256xf32>
    %91 = tpu.matmul %89, %90, %cst_28 {dimension_numbers = #tpu.dot_dimension_numbers<[1], [0], [0], [1], [0, 0, 1, 1], [], []>} : vector<2x64xbf16>, vector<64x256xbf16>, vector<2x256xf32> -> vector<2x256xf32>
    %92 = arith.addf %85, %91 : vector<2x256xf32>
    %93 = vector.extract_strided_slice %64 {offsets = [0, 512], sizes = [2, 64], strides = [1, 1]} : vector<2x896xf32> to vector<2x64xf32>
    %94 = vector.extract_strided_slice %64 {offsets = [0, 576], sizes = [2, 64], strides = [1, 1]} : vector<2x896xf32> to vector<2x64xf32>
    %95 = arith.maximumf %93, %94 : vector<2x64xf32>
    %96 = arith.truncf %95 : vector<2x64xf32> to vector<2x64xbf16>
    %c704 = arith.constant 704 : index
    %c0_29 = arith.constant 0 : index
    %97 = vector.load %arg2[%c704, %c0_29] : memref<3136x256xbf16, #tpu.memory_space<vmem>>, vector<64x256xbf16>
    %cst_30 = arith.constant dense<0.000000e+00> : vector<2x256xf32>
    %98 = tpu.matmul %96, %97, %cst_30 {dimension_numbers = #tpu.dot_dimension_numbers<[1], [0], [0], [1], [0, 0, 1, 1], [], []>} : vector<2x64xbf16>, vector<64x256xbf16>, vector<2x256xf32> -> vector<2x256xf32>
    %99 = arith.addf %92, %98 : vector<2x256xf32>
    %100 = vector.extract_strided_slice %64 {offsets = [0, 640], sizes = [2, 64], strides = [1, 1]} : vector<2x896xf32> to vector<2x64xf32>
    %101 = vector.extract_strided_slice %64 {offsets = [0, 704], sizes = [2, 64], strides = [1, 1]} : vector<2x896xf32> to vector<2x64xf32>
    %102 = arith.maximumf %100, %101 : vector<2x64xf32>
    %103 = arith.truncf %102 : vector<2x64xf32> to vector<2x64xbf16>
    %c768 = arith.constant 768 : index
    %c0_31 = arith.constant 0 : index
    %104 = vector.load %arg2[%c768, %c0_31] : memref<3136x256xbf16, #tpu.memory_space<vmem>>, vector<64x256xbf16>
    %cst_32 = arith.constant dense<0.000000e+00> : vector<2x256xf32>
    %105 = tpu.matmul %103, %104, %cst_32 {dimension_numbers = #tpu.dot_dimension_numbers<[1], [0], [0], [1], [0, 0, 1, 1], [], []>} : vector<2x64xbf16>, vector<64x256xbf16>, vector<2x256xf32> -> vector<2x256xf32>
    %106 = arith.addf %99, %105 : vector<2x256xf32>
    %107 = vector.extract_strided_slice %64 {offsets = [0, 768], sizes = [2, 64], strides = [1, 1]} : vector<2x896xf32> to vector<2x64xf32>
    %108 = vector.extract_strided_slice %64 {offsets = [0, 832], sizes = [2, 64], strides = [1, 1]} : vector<2x896xf32> to vector<2x64xf32>
    %109 = arith.maximumf %107, %108 : vector<2x64xf32>
    %110 = arith.truncf %109 : vector<2x64xf32> to vector<2x64xbf16>
    %c832 = arith.constant 832 : index
    %c0_33 = arith.constant 0 : index
    %111 = vector.load %arg2[%c832, %c0_33] : memref<3136x256xbf16, #tpu.memory_space<vmem>>, vector<64x256xbf16>
    %cst_34 = arith.constant dense<0.000000e+00> : vector<2x256xf32>
    %112 = tpu.matmul %110, %111, %cst_34 {dimension_numbers = #tpu.dot_dimension_numbers<[1], [0], [0], [1], [0, 0, 1, 1], [], []>} : vector<2x64xbf16>, vector<64x256xbf16>, vector<2x256xf32> -> vector<2x256xf32>
    %113 = arith.addf %106, %112 : vector<2x256xf32>
    %c0_35 = arith.constant 0 : index
    %c3584 = arith.constant 3584 : index
    %114 = vector.load %arg0[%c0_35, %c3584] : memref<2x12544xf32, #tpu.memory_space<vmem>>, vector<2x896xf32>
    %115 = vector.broadcast %0 : vector<1x896xf32> to vector<2x896xf32>
    %116 = arith.mulf %114, %115 : vector<2x896xf32>
    %c0_36 = arith.constant 0 : index
    %c4480 = arith.constant 4480 : index
    %117 = vector.load %arg0[%c0_36, %c4480] : memref<2x12544xf32, #tpu.memory_space<vmem>>, vector<2x896xf32>
    %118 = vector.broadcast %0 : vector<1x896xf32> to vector<2x896xf32>
    %119 = arith.mulf %117, %118 : vector<2x896xf32>
    %120 = arith.maximumf %116, %119 : vector<2x896xf32>
    %121 = vector.extract_strided_slice %120 {offsets = [0, 0], sizes = [2, 64], strides = [1, 1]} : vector<2x896xf32> to vector<2x64xf32>
    %122 = vector.extract_strided_slice %120 {offsets = [0, 64], sizes = [2, 64], strides = [1, 1]} : vector<2x896xf32> to vector<2x64xf32>
    %123 = arith.maximumf %121, %122 : vector<2x64xf32>
    %124 = arith.truncf %123 : vector<2x64xf32> to vector<2x64xbf16>
    %c896_37 = arith.constant 896 : index
    %c0_38 = arith.constant 0 : index
    %125 = vector.load %arg2[%c896_37, %c0_38] : memref<3136x256xbf16, #tpu.memory_space<vmem>>, vector<64x256xbf16>
    %cst_39 = arith.constant dense<0.000000e+00> : vector<2x256xf32>
    %126 = tpu.matmul %124, %125, %cst_39 {dimension_numbers = #tpu.dot_dimension_numbers<[1], [0], [0], [1], [0, 0, 1, 1], [], []>} : vector<2x64xbf16>, vector<64x256xbf16>, vector<2x256xf32> -> vector<2x256xf32>
    %127 = arith.addf %113, %126 : vector<2x256xf32>
    %128 = vector.extract_strided_slice %120 {offsets = [0, 128], sizes = [2, 64], strides = [1, 1]} : vector<2x896xf32> to vector<2x64xf32>
    %129 = vector.extract_strided_slice %120 {offsets = [0, 192], sizes = [2, 64], strides = [1, 1]} : vector<2x896xf32> to vector<2x64xf32>
    %130 = arith.maximumf %128, %129 : vector<2x64xf32>
    %131 = arith.truncf %130 : vector<2x64xf32> to vector<2x64xbf16>
    %c960 = arith.constant 960 : index
    %c0_40 = arith.constant 0 : index
    %132 = vector.load %arg2[%c960, %c0_40] : memref<3136x256xbf16, #tpu.memory_space<vmem>>, vector<64x256xbf16>
    %cst_41 = arith.constant dense<0.000000e+00> : vector<2x256xf32>
    %133 = tpu.matmul %131, %132, %cst_41 {dimension_numbers = #tpu.dot_dimension_numbers<[1], [0], [0], [1], [0, 0, 1, 1], [], []>} : vector<2x64xbf16>, vector<64x256xbf16>, vector<2x256xf32> -> vector<2x256xf32>
    %134 = arith.addf %127, %133 : vector<2x256xf32>
    %135 = vector.extract_strided_slice %120 {offsets = [0, 256], sizes = [2, 64], strides = [1, 1]} : vector<2x896xf32> to vector<2x64xf32>
    %136 = vector.extract_strided_slice %120 {offsets = [0, 320], sizes = [2, 64], strides = [1, 1]} : vector<2x896xf32> to vector<2x64xf32>
    %137 = arith.maximumf %135, %136 : vector<2x64xf32>
    %138 = arith.truncf %137 : vector<2x64xf32> to vector<2x64xbf16>
    %c1024 = arith.constant 1024 : index
    %c0_42 = arith.constant 0 : index
    %139 = vector.load %arg2[%c1024, %c0_42] : memref<3136x256xbf16, #tpu.memory_space<vmem>>, vector<64x256xbf16>
    %cst_43 = arith.constant dense<0.000000e+00> : vector<2x256xf32>
    %140 = tpu.matmul %138, %139, %cst_43 {dimension_numbers = #tpu.dot_dimension_numbers<[1], [0], [0], [1], [0, 0, 1, 1], [], []>} : vector<2x64xbf16>, vector<64x256xbf16>, vector<2x256xf32> -> vector<2x256xf32>
    %141 = arith.addf %134, %140 : vector<2x256xf32>
    %142 = vector.extract_strided_slice %120 {offsets = [0, 384], sizes = [2, 64], strides = [1, 1]} : vector<2x896xf32> to vector<2x64xf32>
    %143 = vector.extract_strided_slice %120 {offsets = [0, 448], sizes = [2, 64], strides = [1, 1]} : vector<2x896xf32> to vector<2x64xf32>
    %144 = arith.maximumf %142, %143 : vector<2x64xf32>
    %145 = arith.truncf %144 : vector<2x64xf32> to vector<2x64xbf16>
    %c1088 = arith.constant 1088 : index
    %c0_44 = arith.constant 0 : index
    %146 = vector.load %arg2[%c1088, %c0_44] : memref<3136x256xbf16, #tpu.memory_space<vmem>>, vector<64x256xbf16>
    %cst_45 = arith.constant dense<0.000000e+00> : vector<2x256xf32>
    %147 = tpu.matmul %145, %146, %cst_45 {dimension_numbers = #tpu.dot_dimension_numbers<[1], [0], [0], [1], [0, 0, 1, 1], [], []>} : vector<2x64xbf16>, vector<64x256xbf16>, vector<2x256xf32> -> vector<2x256xf32>
    %148 = arith.addf %141, %147 : vector<2x256xf32>
    %149 = vector.extract_strided_slice %120 {offsets = [0, 512], sizes = [2, 64], strides = [1, 1]} : vector<2x896xf32> to vector<2x64xf32>
    %150 = vector.extract_strided_slice %120 {offsets = [0, 576], sizes = [2, 64], strides = [1, 1]} : vector<2x896xf32> to vector<2x64xf32>
    %151 = arith.maximumf %149, %150 : vector<2x64xf32>
    %152 = arith.truncf %151 : vector<2x64xf32> to vector<2x64xbf16>
    %c1152 = arith.constant 1152 : index
    %c0_46 = arith.constant 0 : index
    %153 = vector.load %arg2[%c1152, %c0_46] : memref<3136x256xbf16, #tpu.memory_space<vmem>>, vector<64x256xbf16>
    %cst_47 = arith.constant dense<0.000000e+00> : vector<2x256xf32>
    %154 = tpu.matmul %152, %153, %cst_47 {dimension_numbers = #tpu.dot_dimension_numbers<[1], [0], [0], [1], [0, 0, 1, 1], [], []>} : vector<2x64xbf16>, vector<64x256xbf16>, vector<2x256xf32> -> vector<2x256xf32>
    %155 = arith.addf %148, %154 : vector<2x256xf32>
    %156 = vector.extract_strided_slice %120 {offsets = [0, 640], sizes = [2, 64], strides = [1, 1]} : vector<2x896xf32> to vector<2x64xf32>
    %157 = vector.extract_strided_slice %120 {offsets = [0, 704], sizes = [2, 64], strides = [1, 1]} : vector<2x896xf32> to vector<2x64xf32>
    %158 = arith.maximumf %156, %157 : vector<2x64xf32>
    %159 = arith.truncf %158 : vector<2x64xf32> to vector<2x64xbf16>
    %c1216 = arith.constant 1216 : index
    %c0_48 = arith.constant 0 : index
    %160 = vector.load %arg2[%c1216, %c0_48] : memref<3136x256xbf16, #tpu.memory_space<vmem>>, vector<64x256xbf16>
    %cst_49 = arith.constant dense<0.000000e+00> : vector<2x256xf32>
    %161 = tpu.matmul %159, %160, %cst_49 {dimension_numbers = #tpu.dot_dimension_numbers<[1], [0], [0], [1], [0, 0, 1, 1], [], []>} : vector<2x64xbf16>, vector<64x256xbf16>, vector<2x256xf32> -> vector<2x256xf32>
    %162 = arith.addf %155, %161 : vector<2x256xf32>
    %163 = vector.extract_strided_slice %120 {offsets = [0, 768], sizes = [2, 64], strides = [1, 1]} : vector<2x896xf32> to vector<2x64xf32>
    %164 = vector.extract_strided_slice %120 {offsets = [0, 832], sizes = [2, 64], strides = [1, 1]} : vector<2x896xf32> to vector<2x64xf32>
    %165 = arith.maximumf %163, %164 : vector<2x64xf32>
    %166 = arith.truncf %165 : vector<2x64xf32> to vector<2x64xbf16>
    %c1280 = arith.constant 1280 : index
    %c0_50 = arith.constant 0 : index
    %167 = vector.load %arg2[%c1280, %c0_50] : memref<3136x256xbf16, #tpu.memory_space<vmem>>, vector<64x256xbf16>
    %cst_51 = arith.constant dense<0.000000e+00> : vector<2x256xf32>
    %168 = tpu.matmul %166, %167, %cst_51 {dimension_numbers = #tpu.dot_dimension_numbers<[1], [0], [0], [1], [0, 0, 1, 1], [], []>} : vector<2x64xbf16>, vector<64x256xbf16>, vector<2x256xf32> -> vector<2x256xf32>
    %169 = arith.addf %162, %168 : vector<2x256xf32>
    %c0_52 = arith.constant 0 : index
    %c5376 = arith.constant 5376 : index
    %170 = vector.load %arg0[%c0_52, %c5376] : memref<2x12544xf32, #tpu.memory_space<vmem>>, vector<2x896xf32>
    %171 = vector.broadcast %0 : vector<1x896xf32> to vector<2x896xf32>
    %172 = arith.mulf %170, %171 : vector<2x896xf32>
    %c0_53 = arith.constant 0 : index
    %c6272 = arith.constant 6272 : index
    %173 = vector.load %arg0[%c0_53, %c6272] : memref<2x12544xf32, #tpu.memory_space<vmem>>, vector<2x896xf32>
    %174 = vector.broadcast %0 : vector<1x896xf32> to vector<2x896xf32>
    %175 = arith.mulf %173, %174 : vector<2x896xf32>
    %176 = arith.maximumf %172, %175 : vector<2x896xf32>
    %177 = vector.extract_strided_slice %176 {offsets = [0, 0], sizes = [2, 64], strides = [1, 1]} : vector<2x896xf32> to vector<2x64xf32>
    %178 = vector.extract_strided_slice %176 {offsets = [0, 64], sizes = [2, 64], strides = [1, 1]} : vector<2x896xf32> to vector<2x64xf32>
    %179 = arith.maximumf %177, %178 : vector<2x64xf32>
    %180 = arith.truncf %179 : vector<2x64xf32> to vector<2x64xbf16>
    %c1344 = arith.constant 1344 : index
    %c0_54 = arith.constant 0 : index
    %181 = vector.load %arg2[%c1344, %c0_54] : memref<3136x256xbf16, #tpu.memory_space<vmem>>, vector<64x256xbf16>
    %cst_55 = arith.constant dense<0.000000e+00> : vector<2x256xf32>
    %182 = tpu.matmul %180, %181, %cst_55 {dimension_numbers = #tpu.dot_dimension_numbers<[1], [0], [0], [1], [0, 0, 1, 1], [], []>} : vector<2x64xbf16>, vector<64x256xbf16>, vector<2x256xf32> -> vector<2x256xf32>
    %183 = arith.addf %169, %182 : vector<2x256xf32>
    %184 = vector.extract_strided_slice %176 {offsets = [0, 128], sizes = [2, 64], strides = [1, 1]} : vector<2x896xf32> to vector<2x64xf32>
    %185 = vector.extract_strided_slice %176 {offsets = [0, 192], sizes = [2, 64], strides = [1, 1]} : vector<2x896xf32> to vector<2x64xf32>
    %186 = arith.maximumf %184, %185 : vector<2x64xf32>
    %187 = arith.truncf %186 : vector<2x64xf32> to vector<2x64xbf16>
    %c1408 = arith.constant 1408 : index
    %c0_56 = arith.constant 0 : index
    %188 = vector.load %arg2[%c1408, %c0_56] : memref<3136x256xbf16, #tpu.memory_space<vmem>>, vector<64x256xbf16>
    %cst_57 = arith.constant dense<0.000000e+00> : vector<2x256xf32>
    %189 = tpu.matmul %187, %188, %cst_57 {dimension_numbers = #tpu.dot_dimension_numbers<[1], [0], [0], [1], [0, 0, 1, 1], [], []>} : vector<2x64xbf16>, vector<64x256xbf16>, vector<2x256xf32> -> vector<2x256xf32>
    %190 = arith.addf %183, %189 : vector<2x256xf32>
    %191 = vector.extract_strided_slice %176 {offsets = [0, 256], sizes = [2, 64], strides = [1, 1]} : vector<2x896xf32> to vector<2x64xf32>
    %192 = vector.extract_strided_slice %176 {offsets = [0, 320], sizes = [2, 64], strides = [1, 1]} : vector<2x896xf32> to vector<2x64xf32>
    %193 = arith.maximumf %191, %192 : vector<2x64xf32>
    %194 = arith.truncf %193 : vector<2x64xf32> to vector<2x64xbf16>
    %c1472 = arith.constant 1472 : index
    %c0_58 = arith.constant 0 : index
    %195 = vector.load %arg2[%c1472, %c0_58] : memref<3136x256xbf16, #tpu.memory_space<vmem>>, vector<64x256xbf16>
    %cst_59 = arith.constant dense<0.000000e+00> : vector<2x256xf32>
    %196 = tpu.matmul %194, %195, %cst_59 {dimension_numbers = #tpu.dot_dimension_numbers<[1], [0], [0], [1], [0, 0, 1, 1], [], []>} : vector<2x64xbf16>, vector<64x256xbf16>, vector<2x256xf32> -> vector<2x256xf32>
    %197 = arith.addf %190, %196 : vector<2x256xf32>
    %198 = vector.extract_strided_slice %176 {offsets = [0, 384], sizes = [2, 64], strides = [1, 1]} : vector<2x896xf32> to vector<2x64xf32>
    %199 = vector.extract_strided_slice %176 {offsets = [0, 448], sizes = [2, 64], strides = [1, 1]} : vector<2x896xf32> to vector<2x64xf32>
    %200 = arith.maximumf %198, %199 : vector<2x64xf32>
    %201 = arith.truncf %200 : vector<2x64xf32> to vector<2x64xbf16>
    %c1536 = arith.constant 1536 : index
    %c0_60 = arith.constant 0 : index
    %202 = vector.load %arg2[%c1536, %c0_60] : memref<3136x256xbf16, #tpu.memory_space<vmem>>, vector<64x256xbf16>
    %cst_61 = arith.constant dense<0.000000e+00> : vector<2x256xf32>
    %203 = tpu.matmul %201, %202, %cst_61 {dimension_numbers = #tpu.dot_dimension_numbers<[1], [0], [0], [1], [0, 0, 1, 1], [], []>} : vector<2x64xbf16>, vector<64x256xbf16>, vector<2x256xf32> -> vector<2x256xf32>
    %204 = arith.addf %197, %203 : vector<2x256xf32>
    %205 = vector.extract_strided_slice %176 {offsets = [0, 512], sizes = [2, 64], strides = [1, 1]} : vector<2x896xf32> to vector<2x64xf32>
    %206 = vector.extract_strided_slice %176 {offsets = [0, 576], sizes = [2, 64], strides = [1, 1]} : vector<2x896xf32> to vector<2x64xf32>
    %207 = arith.maximumf %205, %206 : vector<2x64xf32>
    %208 = arith.truncf %207 : vector<2x64xf32> to vector<2x64xbf16>
    %c1600 = arith.constant 1600 : index
    %c0_62 = arith.constant 0 : index
    %209 = vector.load %arg2[%c1600, %c0_62] : memref<3136x256xbf16, #tpu.memory_space<vmem>>, vector<64x256xbf16>
    %cst_63 = arith.constant dense<0.000000e+00> : vector<2x256xf32>
    %210 = tpu.matmul %208, %209, %cst_63 {dimension_numbers = #tpu.dot_dimension_numbers<[1], [0], [0], [1], [0, 0, 1, 1], [], []>} : vector<2x64xbf16>, vector<64x256xbf16>, vector<2x256xf32> -> vector<2x256xf32>
    %211 = arith.addf %204, %210 : vector<2x256xf32>
    %212 = vector.extract_strided_slice %176 {offsets = [0, 640], sizes = [2, 64], strides = [1, 1]} : vector<2x896xf32> to vector<2x64xf32>
    %213 = vector.extract_strided_slice %176 {offsets = [0, 704], sizes = [2, 64], strides = [1, 1]} : vector<2x896xf32> to vector<2x64xf32>
    %214 = arith.maximumf %212, %213 : vector<2x64xf32>
    %215 = arith.truncf %214 : vector<2x64xf32> to vector<2x64xbf16>
    %c1664 = arith.constant 1664 : index
    %c0_64 = arith.constant 0 : index
    %216 = vector.load %arg2[%c1664, %c0_64] : memref<3136x256xbf16, #tpu.memory_space<vmem>>, vector<64x256xbf16>
    %cst_65 = arith.constant dense<0.000000e+00> : vector<2x256xf32>
    %217 = tpu.matmul %215, %216, %cst_65 {dimension_numbers = #tpu.dot_dimension_numbers<[1], [0], [0], [1], [0, 0, 1, 1], [], []>} : vector<2x64xbf16>, vector<64x256xbf16>, vector<2x256xf32> -> vector<2x256xf32>
    %218 = arith.addf %211, %217 : vector<2x256xf32>
    %219 = vector.extract_strided_slice %176 {offsets = [0, 768], sizes = [2, 64], strides = [1, 1]} : vector<2x896xf32> to vector<2x64xf32>
    %220 = vector.extract_strided_slice %176 {offsets = [0, 832], sizes = [2, 64], strides = [1, 1]} : vector<2x896xf32> to vector<2x64xf32>
    %221 = arith.maximumf %219, %220 : vector<2x64xf32>
    %222 = arith.truncf %221 : vector<2x64xf32> to vector<2x64xbf16>
    %c1728 = arith.constant 1728 : index
    %c0_66 = arith.constant 0 : index
    %223 = vector.load %arg2[%c1728, %c0_66] : memref<3136x256xbf16, #tpu.memory_space<vmem>>, vector<64x256xbf16>
    %cst_67 = arith.constant dense<0.000000e+00> : vector<2x256xf32>
    %224 = tpu.matmul %222, %223, %cst_67 {dimension_numbers = #tpu.dot_dimension_numbers<[1], [0], [0], [1], [0, 0, 1, 1], [], []>} : vector<2x64xbf16>, vector<64x256xbf16>, vector<2x256xf32> -> vector<2x256xf32>
    %225 = arith.addf %218, %224 : vector<2x256xf32>
    %c0_68 = arith.constant 0 : index
    %c7168 = arith.constant 7168 : index
    %226 = vector.load %arg0[%c0_68, %c7168] : memref<2x12544xf32, #tpu.memory_space<vmem>>, vector<2x896xf32>
    %227 = vector.broadcast %0 : vector<1x896xf32> to vector<2x896xf32>
    %228 = arith.mulf %226, %227 : vector<2x896xf32>
    %c0_69 = arith.constant 0 : index
    %c8064 = arith.constant 8064 : index
    %229 = vector.load %arg0[%c0_69, %c8064] : memref<2x12544xf32, #tpu.memory_space<vmem>>, vector<2x896xf32>
    %230 = vector.broadcast %0 : vector<1x896xf32> to vector<2x896xf32>
    %231 = arith.mulf %229, %230 : vector<2x896xf32>
    %232 = arith.maximumf %228, %231 : vector<2x896xf32>
    %233 = vector.extract_strided_slice %232 {offsets = [0, 0], sizes = [2, 64], strides = [1, 1]} : vector<2x896xf32> to vector<2x64xf32>
    %234 = vector.extract_strided_slice %232 {offsets = [0, 64], sizes = [2, 64], strides = [1, 1]} : vector<2x896xf32> to vector<2x64xf32>
    %235 = arith.maximumf %233, %234 : vector<2x64xf32>
    %236 = arith.truncf %235 : vector<2x64xf32> to vector<2x64xbf16>
    %c1792_70 = arith.constant 1792 : index
    %c0_71 = arith.constant 0 : index
    %237 = vector.load %arg2[%c1792_70, %c0_71] : memref<3136x256xbf16, #tpu.memory_space<vmem>>, vector<64x256xbf16>
    %cst_72 = arith.constant dense<0.000000e+00> : vector<2x256xf32>
    %238 = tpu.matmul %236, %237, %cst_72 {dimension_numbers = #tpu.dot_dimension_numbers<[1], [0], [0], [1], [0, 0, 1, 1], [], []>} : vector<2x64xbf16>, vector<64x256xbf16>, vector<2x256xf32> -> vector<2x256xf32>
    %239 = arith.addf %225, %238 : vector<2x256xf32>
    %240 = vector.extract_strided_slice %232 {offsets = [0, 128], sizes = [2, 64], strides = [1, 1]} : vector<2x896xf32> to vector<2x64xf32>
    %241 = vector.extract_strided_slice %232 {offsets = [0, 192], sizes = [2, 64], strides = [1, 1]} : vector<2x896xf32> to vector<2x64xf32>
    %242 = arith.maximumf %240, %241 : vector<2x64xf32>
    %243 = arith.truncf %242 : vector<2x64xf32> to vector<2x64xbf16>
    %c1856 = arith.constant 1856 : index
    %c0_73 = arith.constant 0 : index
    %244 = vector.load %arg2[%c1856, %c0_73] : memref<3136x256xbf16, #tpu.memory_space<vmem>>, vector<64x256xbf16>
    %cst_74 = arith.constant dense<0.000000e+00> : vector<2x256xf32>
    %245 = tpu.matmul %243, %244, %cst_74 {dimension_numbers = #tpu.dot_dimension_numbers<[1], [0], [0], [1], [0, 0, 1, 1], [], []>} : vector<2x64xbf16>, vector<64x256xbf16>, vector<2x256xf32> -> vector<2x256xf32>
    %246 = arith.addf %239, %245 : vector<2x256xf32>
    %247 = vector.extract_strided_slice %232 {offsets = [0, 256], sizes = [2, 64], strides = [1, 1]} : vector<2x896xf32> to vector<2x64xf32>
    %248 = vector.extract_strided_slice %232 {offsets = [0, 320], sizes = [2, 64], strides = [1, 1]} : vector<2x896xf32> to vector<2x64xf32>
    %249 = arith.maximumf %247, %248 : vector<2x64xf32>
    %250 = arith.truncf %249 : vector<2x64xf32> to vector<2x64xbf16>
    %c1920 = arith.constant 1920 : index
    %c0_75 = arith.constant 0 : index
    %251 = vector.load %arg2[%c1920, %c0_75] : memref<3136x256xbf16, #tpu.memory_space<vmem>>, vector<64x256xbf16>
    %cst_76 = arith.constant dense<0.000000e+00> : vector<2x256xf32>
    %252 = tpu.matmul %250, %251, %cst_76 {dimension_numbers = #tpu.dot_dimension_numbers<[1], [0], [0], [1], [0, 0, 1, 1], [], []>} : vector<2x64xbf16>, vector<64x256xbf16>, vector<2x256xf32> -> vector<2x256xf32>
    %253 = arith.addf %246, %252 : vector<2x256xf32>
    %254 = vector.extract_strided_slice %232 {offsets = [0, 384], sizes = [2, 64], strides = [1, 1]} : vector<2x896xf32> to vector<2x64xf32>
    %255 = vector.extract_strided_slice %232 {offsets = [0, 448], sizes = [2, 64], strides = [1, 1]} : vector<2x896xf32> to vector<2x64xf32>
    %256 = arith.maximumf %254, %255 : vector<2x64xf32>
    %257 = arith.truncf %256 : vector<2x64xf32> to vector<2x64xbf16>
    %c1984 = arith.constant 1984 : index
    %c0_77 = arith.constant 0 : index
    %258 = vector.load %arg2[%c1984, %c0_77] : memref<3136x256xbf16, #tpu.memory_space<vmem>>, vector<64x256xbf16>
    %cst_78 = arith.constant dense<0.000000e+00> : vector<2x256xf32>
    %259 = tpu.matmul %257, %258, %cst_78 {dimension_numbers = #tpu.dot_dimension_numbers<[1], [0], [0], [1], [0, 0, 1, 1], [], []>} : vector<2x64xbf16>, vector<64x256xbf16>, vector<2x256xf32> -> vector<2x256xf32>
    %260 = arith.addf %253, %259 : vector<2x256xf32>
    %261 = vector.extract_strided_slice %232 {offsets = [0, 512], sizes = [2, 64], strides = [1, 1]} : vector<2x896xf32> to vector<2x64xf32>
    %262 = vector.extract_strided_slice %232 {offsets = [0, 576], sizes = [2, 64], strides = [1, 1]} : vector<2x896xf32> to vector<2x64xf32>
    %263 = arith.maximumf %261, %262 : vector<2x64xf32>
    %264 = arith.truncf %263 : vector<2x64xf32> to vector<2x64xbf16>
    %c2048 = arith.constant 2048 : index
    %c0_79 = arith.constant 0 : index
    %265 = vector.load %arg2[%c2048, %c0_79] : memref<3136x256xbf16, #tpu.memory_space<vmem>>, vector<64x256xbf16>
    %cst_80 = arith.constant dense<0.000000e+00> : vector<2x256xf32>
    %266 = tpu.matmul %264, %265, %cst_80 {dimension_numbers = #tpu.dot_dimension_numbers<[1], [0], [0], [1], [0, 0, 1, 1], [], []>} : vector<2x64xbf16>, vector<64x256xbf16>, vector<2x256xf32> -> vector<2x256xf32>
    %267 = arith.addf %260, %266 : vector<2x256xf32>
    %268 = vector.extract_strided_slice %232 {offsets = [0, 640], sizes = [2, 64], strides = [1, 1]} : vector<2x896xf32> to vector<2x64xf32>
    %269 = vector.extract_strided_slice %232 {offsets = [0, 704], sizes = [2, 64], strides = [1, 1]} : vector<2x896xf32> to vector<2x64xf32>
    %270 = arith.maximumf %268, %269 : vector<2x64xf32>
    %271 = arith.truncf %270 : vector<2x64xf32> to vector<2x64xbf16>
    %c2112 = arith.constant 2112 : index
    %c0_81 = arith.constant 0 : index
    %272 = vector.load %arg2[%c2112, %c0_81] : memref<3136x256xbf16, #tpu.memory_space<vmem>>, vector<64x256xbf16>
    %cst_82 = arith.constant dense<0.000000e+00> : vector<2x256xf32>
    %273 = tpu.matmul %271, %272, %cst_82 {dimension_numbers = #tpu.dot_dimension_numbers<[1], [0], [0], [1], [0, 0, 1, 1], [], []>} : vector<2x64xbf16>, vector<64x256xbf16>, vector<2x256xf32> -> vector<2x256xf32>
    %274 = arith.addf %267, %273 : vector<2x256xf32>
    %275 = vector.extract_strided_slice %232 {offsets = [0, 768], sizes = [2, 64], strides = [1, 1]} : vector<2x896xf32> to vector<2x64xf32>
    %276 = vector.extract_strided_slice %232 {offsets = [0, 832], sizes = [2, 64], strides = [1, 1]} : vector<2x896xf32> to vector<2x64xf32>
    %277 = arith.maximumf %275, %276 : vector<2x64xf32>
    %278 = arith.truncf %277 : vector<2x64xf32> to vector<2x64xbf16>
    %c2176 = arith.constant 2176 : index
    %c0_83 = arith.constant 0 : index
    %279 = vector.load %arg2[%c2176, %c0_83] : memref<3136x256xbf16, #tpu.memory_space<vmem>>, vector<64x256xbf16>
    %cst_84 = arith.constant dense<0.000000e+00> : vector<2x256xf32>
    %280 = tpu.matmul %278, %279, %cst_84 {dimension_numbers = #tpu.dot_dimension_numbers<[1], [0], [0], [1], [0, 0, 1, 1], [], []>} : vector<2x64xbf16>, vector<64x256xbf16>, vector<2x256xf32> -> vector<2x256xf32>
    %281 = arith.addf %274, %280 : vector<2x256xf32>
    %c0_85 = arith.constant 0 : index
    %c8960 = arith.constant 8960 : index
    %282 = vector.load %arg0[%c0_85, %c8960] : memref<2x12544xf32, #tpu.memory_space<vmem>>, vector<2x896xf32>
    %283 = vector.broadcast %0 : vector<1x896xf32> to vector<2x896xf32>
    %284 = arith.mulf %282, %283 : vector<2x896xf32>
    %c0_86 = arith.constant 0 : index
    %c9856 = arith.constant 9856 : index
    %285 = vector.load %arg0[%c0_86, %c9856] : memref<2x12544xf32, #tpu.memory_space<vmem>>, vector<2x896xf32>
    %286 = vector.broadcast %0 : vector<1x896xf32> to vector<2x896xf32>
    %287 = arith.mulf %285, %286 : vector<2x896xf32>
    %288 = arith.maximumf %284, %287 : vector<2x896xf32>
    %289 = vector.extract_strided_slice %288 {offsets = [0, 0], sizes = [2, 64], strides = [1, 1]} : vector<2x896xf32> to vector<2x64xf32>
    %290 = vector.extract_strided_slice %288 {offsets = [0, 64], sizes = [2, 64], strides = [1, 1]} : vector<2x896xf32> to vector<2x64xf32>
    %291 = arith.maximumf %289, %290 : vector<2x64xf32>
    %292 = arith.truncf %291 : vector<2x64xf32> to vector<2x64xbf16>
    %c2240 = arith.constant 2240 : index
    %c0_87 = arith.constant 0 : index
    %293 = vector.load %arg2[%c2240, %c0_87] : memref<3136x256xbf16, #tpu.memory_space<vmem>>, vector<64x256xbf16>
    %cst_88 = arith.constant dense<0.000000e+00> : vector<2x256xf32>
    %294 = tpu.matmul %292, %293, %cst_88 {dimension_numbers = #tpu.dot_dimension_numbers<[1], [0], [0], [1], [0, 0, 1, 1], [], []>} : vector<2x64xbf16>, vector<64x256xbf16>, vector<2x256xf32> -> vector<2x256xf32>
    %295 = arith.addf %281, %294 : vector<2x256xf32>
    %296 = vector.extract_strided_slice %288 {offsets = [0, 128], sizes = [2, 64], strides = [1, 1]} : vector<2x896xf32> to vector<2x64xf32>
    %297 = vector.extract_strided_slice %288 {offsets = [0, 192], sizes = [2, 64], strides = [1, 1]} : vector<2x896xf32> to vector<2x64xf32>
    %298 = arith.maximumf %296, %297 : vector<2x64xf32>
    %299 = arith.truncf %298 : vector<2x64xf32> to vector<2x64xbf16>
    %c2304 = arith.constant 2304 : index
    %c0_89 = arith.constant 0 : index
    %300 = vector.load %arg2[%c2304, %c0_89] : memref<3136x256xbf16, #tpu.memory_space<vmem>>, vector<64x256xbf16>
    %cst_90 = arith.constant dense<0.000000e+00> : vector<2x256xf32>
    %301 = tpu.matmul %299, %300, %cst_90 {dimension_numbers = #tpu.dot_dimension_numbers<[1], [0], [0], [1], [0, 0, 1, 1], [], []>} : vector<2x64xbf16>, vector<64x256xbf16>, vector<2x256xf32> -> vector<2x256xf32>
    %302 = arith.addf %295, %301 : vector<2x256xf32>
    %303 = vector.extract_strided_slice %288 {offsets = [0, 256], sizes = [2, 64], strides = [1, 1]} : vector<2x896xf32> to vector<2x64xf32>
    %304 = vector.extract_strided_slice %288 {offsets = [0, 320], sizes = [2, 64], strides = [1, 1]} : vector<2x896xf32> to vector<2x64xf32>
    %305 = arith.maximumf %303, %304 : vector<2x64xf32>
    %306 = arith.truncf %305 : vector<2x64xf32> to vector<2x64xbf16>
    %c2368 = arith.constant 2368 : index
    %c0_91 = arith.constant 0 : index
    %307 = vector.load %arg2[%c2368, %c0_91] : memref<3136x256xbf16, #tpu.memory_space<vmem>>, vector<64x256xbf16>
    %cst_92 = arith.constant dense<0.000000e+00> : vector<2x256xf32>
    %308 = tpu.matmul %306, %307, %cst_92 {dimension_numbers = #tpu.dot_dimension_numbers<[1], [0], [0], [1], [0, 0, 1, 1], [], []>} : vector<2x64xbf16>, vector<64x256xbf16>, vector<2x256xf32> -> vector<2x256xf32>
    %309 = arith.addf %302, %308 : vector<2x256xf32>
    %310 = vector.extract_strided_slice %288 {offsets = [0, 384], sizes = [2, 64], strides = [1, 1]} : vector<2x896xf32> to vector<2x64xf32>
    %311 = vector.extract_strided_slice %288 {offsets = [0, 448], sizes = [2, 64], strides = [1, 1]} : vector<2x896xf32> to vector<2x64xf32>
    %312 = arith.maximumf %310, %311 : vector<2x64xf32>
    %313 = arith.truncf %312 : vector<2x64xf32> to vector<2x64xbf16>
    %c2432 = arith.constant 2432 : index
    %c0_93 = arith.constant 0 : index
    %314 = vector.load %arg2[%c2432, %c0_93] : memref<3136x256xbf16, #tpu.memory_space<vmem>>, vector<64x256xbf16>
    %cst_94 = arith.constant dense<0.000000e+00> : vector<2x256xf32>
    %315 = tpu.matmul %313, %314, %cst_94 {dimension_numbers = #tpu.dot_dimension_numbers<[1], [0], [0], [1], [0, 0, 1, 1], [], []>} : vector<2x64xbf16>, vector<64x256xbf16>, vector<2x256xf32> -> vector<2x256xf32>
    %316 = arith.addf %309, %315 : vector<2x256xf32>
    %317 = vector.extract_strided_slice %288 {offsets = [0, 512], sizes = [2, 64], strides = [1, 1]} : vector<2x896xf32> to vector<2x64xf32>
    %318 = vector.extract_strided_slice %288 {offsets = [0, 576], sizes = [2, 64], strides = [1, 1]} : vector<2x896xf32> to vector<2x64xf32>
    %319 = arith.maximumf %317, %318 : vector<2x64xf32>
    %320 = arith.truncf %319 : vector<2x64xf32> to vector<2x64xbf16>
    %c2496 = arith.constant 2496 : index
    %c0_95 = arith.constant 0 : index
    %321 = vector.load %arg2[%c2496, %c0_95] : memref<3136x256xbf16, #tpu.memory_space<vmem>>, vector<64x256xbf16>
    %cst_96 = arith.constant dense<0.000000e+00> : vector<2x256xf32>
    %322 = tpu.matmul %320, %321, %cst_96 {dimension_numbers = #tpu.dot_dimension_numbers<[1], [0], [0], [1], [0, 0, 1, 1], [], []>} : vector<2x64xbf16>, vector<64x256xbf16>, vector<2x256xf32> -> vector<2x256xf32>
    %323 = arith.addf %316, %322 : vector<2x256xf32>
    %324 = vector.extract_strided_slice %288 {offsets = [0, 640], sizes = [2, 64], strides = [1, 1]} : vector<2x896xf32> to vector<2x64xf32>
    %325 = vector.extract_strided_slice %288 {offsets = [0, 704], sizes = [2, 64], strides = [1, 1]} : vector<2x896xf32> to vector<2x64xf32>
    %326 = arith.maximumf %324, %325 : vector<2x64xf32>
    %327 = arith.truncf %326 : vector<2x64xf32> to vector<2x64xbf16>
    %c2560 = arith.constant 2560 : index
    %c0_97 = arith.constant 0 : index
    %328 = vector.load %arg2[%c2560, %c0_97] : memref<3136x256xbf16, #tpu.memory_space<vmem>>, vector<64x256xbf16>
    %cst_98 = arith.constant dense<0.000000e+00> : vector<2x256xf32>
    %329 = tpu.matmul %327, %328, %cst_98 {dimension_numbers = #tpu.dot_dimension_numbers<[1], [0], [0], [1], [0, 0, 1, 1], [], []>} : vector<2x64xbf16>, vector<64x256xbf16>, vector<2x256xf32> -> vector<2x256xf32>
    %330 = arith.addf %323, %329 : vector<2x256xf32>
    %331 = vector.extract_strided_slice %288 {offsets = [0, 768], sizes = [2, 64], strides = [1, 1]} : vector<2x896xf32> to vector<2x64xf32>
    %332 = vector.extract_strided_slice %288 {offsets = [0, 832], sizes = [2, 64], strides = [1, 1]} : vector<2x896xf32> to vector<2x64xf32>
    %333 = arith.maximumf %331, %332 : vector<2x64xf32>
    %334 = arith.truncf %333 : vector<2x64xf32> to vector<2x64xbf16>
    %c2624 = arith.constant 2624 : index
    %c0_99 = arith.constant 0 : index
    %335 = vector.load %arg2[%c2624, %c0_99] : memref<3136x256xbf16, #tpu.memory_space<vmem>>, vector<64x256xbf16>
    %cst_100 = arith.constant dense<0.000000e+00> : vector<2x256xf32>
    %336 = tpu.matmul %334, %335, %cst_100 {dimension_numbers = #tpu.dot_dimension_numbers<[1], [0], [0], [1], [0, 0, 1, 1], [], []>} : vector<2x64xbf16>, vector<64x256xbf16>, vector<2x256xf32> -> vector<2x256xf32>
    %337 = arith.addf %330, %336 : vector<2x256xf32>
    %c0_101 = arith.constant 0 : index
    %c10752 = arith.constant 10752 : index
    %338 = vector.load %arg0[%c0_101, %c10752] : memref<2x12544xf32, #tpu.memory_space<vmem>>, vector<2x896xf32>
    %339 = vector.broadcast %0 : vector<1x896xf32> to vector<2x896xf32>
    %340 = arith.mulf %338, %339 : vector<2x896xf32>
    %c0_102 = arith.constant 0 : index
    %c11648 = arith.constant 11648 : index
    %341 = vector.load %arg0[%c0_102, %c11648] : memref<2x12544xf32, #tpu.memory_space<vmem>>, vector<2x896xf32>
    %342 = vector.broadcast %0 : vector<1x896xf32> to vector<2x896xf32>
    %343 = arith.mulf %341, %342 : vector<2x896xf32>
    %344 = arith.maximumf %340, %343 : vector<2x896xf32>
    %345 = vector.extract_strided_slice %344 {offsets = [0, 0], sizes = [2, 64], strides = [1, 1]} : vector<2x896xf32> to vector<2x64xf32>
    %346 = vector.extract_strided_slice %344 {offsets = [0, 64], sizes = [2, 64], strides = [1, 1]} : vector<2x896xf32> to vector<2x64xf32>
    %347 = arith.maximumf %345, %346 : vector<2x64xf32>
    %348 = arith.truncf %347 : vector<2x64xf32> to vector<2x64xbf16>
    %c2688_103 = arith.constant 2688 : index
    %c0_104 = arith.constant 0 : index
    %349 = vector.load %arg2[%c2688_103, %c0_104] : memref<3136x256xbf16, #tpu.memory_space<vmem>>, vector<64x256xbf16>
    %cst_105 = arith.constant dense<0.000000e+00> : vector<2x256xf32>
    %350 = tpu.matmul %348, %349, %cst_105 {dimension_numbers = #tpu.dot_dimension_numbers<[1], [0], [0], [1], [0, 0, 1, 1], [], []>} : vector<2x64xbf16>, vector<64x256xbf16>, vector<2x256xf32> -> vector<2x256xf32>
    %351 = arith.addf %337, %350 : vector<2x256xf32>
    %352 = vector.extract_strided_slice %344 {offsets = [0, 128], sizes = [2, 64], strides = [1, 1]} : vector<2x896xf32> to vector<2x64xf32>
    %353 = vector.extract_strided_slice %344 {offsets = [0, 192], sizes = [2, 64], strides = [1, 1]} : vector<2x896xf32> to vector<2x64xf32>
    %354 = arith.maximumf %352, %353 : vector<2x64xf32>
    %355 = arith.truncf %354 : vector<2x64xf32> to vector<2x64xbf16>
    %c2752 = arith.constant 2752 : index
    %c0_106 = arith.constant 0 : index
    %356 = vector.load %arg2[%c2752, %c0_106] : memref<3136x256xbf16, #tpu.memory_space<vmem>>, vector<64x256xbf16>
    %cst_107 = arith.constant dense<0.000000e+00> : vector<2x256xf32>
    %357 = tpu.matmul %355, %356, %cst_107 {dimension_numbers = #tpu.dot_dimension_numbers<[1], [0], [0], [1], [0, 0, 1, 1], [], []>} : vector<2x64xbf16>, vector<64x256xbf16>, vector<2x256xf32> -> vector<2x256xf32>
    %358 = arith.addf %351, %357 : vector<2x256xf32>
    %359 = vector.extract_strided_slice %344 {offsets = [0, 256], sizes = [2, 64], strides = [1, 1]} : vector<2x896xf32> to vector<2x64xf32>
    %360 = vector.extract_strided_slice %344 {offsets = [0, 320], sizes = [2, 64], strides = [1, 1]} : vector<2x896xf32> to vector<2x64xf32>
    %361 = arith.maximumf %359, %360 : vector<2x64xf32>
    %362 = arith.truncf %361 : vector<2x64xf32> to vector<2x64xbf16>
    %c2816 = arith.constant 2816 : index
    %c0_108 = arith.constant 0 : index
    %363 = vector.load %arg2[%c2816, %c0_108] : memref<3136x256xbf16, #tpu.memory_space<vmem>>, vector<64x256xbf16>
    %cst_109 = arith.constant dense<0.000000e+00> : vector<2x256xf32>
    %364 = tpu.matmul %362, %363, %cst_109 {dimension_numbers = #tpu.dot_dimension_numbers<[1], [0], [0], [1], [0, 0, 1, 1], [], []>} : vector<2x64xbf16>, vector<64x256xbf16>, vector<2x256xf32> -> vector<2x256xf32>
    %365 = arith.addf %358, %364 : vector<2x256xf32>
    %366 = vector.extract_strided_slice %344 {offsets = [0, 384], sizes = [2, 64], strides = [1, 1]} : vector<2x896xf32> to vector<2x64xf32>
    %367 = vector.extract_strided_slice %344 {offsets = [0, 448], sizes = [2, 64], strides = [1, 1]} : vector<2x896xf32> to vector<2x64xf32>
    %368 = arith.maximumf %366, %367 : vector<2x64xf32>
    %369 = arith.truncf %368 : vector<2x64xf32> to vector<2x64xbf16>
    %c2880 = arith.constant 2880 : index
    %c0_110 = arith.constant 0 : index
    %370 = vector.load %arg2[%c2880, %c0_110] : memref<3136x256xbf16, #tpu.memory_space<vmem>>, vector<64x256xbf16>
    %cst_111 = arith.constant dense<0.000000e+00> : vector<2x256xf32>
    %371 = tpu.matmul %369, %370, %cst_111 {dimension_numbers = #tpu.dot_dimension_numbers<[1], [0], [0], [1], [0, 0, 1, 1], [], []>} : vector<2x64xbf16>, vector<64x256xbf16>, vector<2x256xf32> -> vector<2x256xf32>
    %372 = arith.addf %365, %371 : vector<2x256xf32>
    %373 = vector.extract_strided_slice %344 {offsets = [0, 512], sizes = [2, 64], strides = [1, 1]} : vector<2x896xf32> to vector<2x64xf32>
    %374 = vector.extract_strided_slice %344 {offsets = [0, 576], sizes = [2, 64], strides = [1, 1]} : vector<2x896xf32> to vector<2x64xf32>
    %375 = arith.maximumf %373, %374 : vector<2x64xf32>
    %376 = arith.truncf %375 : vector<2x64xf32> to vector<2x64xbf16>
    %c2944 = arith.constant 2944 : index
    %c0_112 = arith.constant 0 : index
    %377 = vector.load %arg2[%c2944, %c0_112] : memref<3136x256xbf16, #tpu.memory_space<vmem>>, vector<64x256xbf16>
    %cst_113 = arith.constant dense<0.000000e+00> : vector<2x256xf32>
    %378 = tpu.matmul %376, %377, %cst_113 {dimension_numbers = #tpu.dot_dimension_numbers<[1], [0], [0], [1], [0, 0, 1, 1], [], []>} : vector<2x64xbf16>, vector<64x256xbf16>, vector<2x256xf32> -> vector<2x256xf32>
    %379 = arith.addf %372, %378 : vector<2x256xf32>
    %380 = vector.extract_strided_slice %344 {offsets = [0, 640], sizes = [2, 64], strides = [1, 1]} : vector<2x896xf32> to vector<2x64xf32>
    %381 = vector.extract_strided_slice %344 {offsets = [0, 704], sizes = [2, 64], strides = [1, 1]} : vector<2x896xf32> to vector<2x64xf32>
    %382 = arith.maximumf %380, %381 : vector<2x64xf32>
    %383 = arith.truncf %382 : vector<2x64xf32> to vector<2x64xbf16>
    %c3008 = arith.constant 3008 : index
    %c0_114 = arith.constant 0 : index
    %384 = vector.load %arg2[%c3008, %c0_114] : memref<3136x256xbf16, #tpu.memory_space<vmem>>, vector<64x256xbf16>
    %cst_115 = arith.constant dense<0.000000e+00> : vector<2x256xf32>
    %385 = tpu.matmul %383, %384, %cst_115 {dimension_numbers = #tpu.dot_dimension_numbers<[1], [0], [0], [1], [0, 0, 1, 1], [], []>} : vector<2x64xbf16>, vector<64x256xbf16>, vector<2x256xf32> -> vector<2x256xf32>
    %386 = arith.addf %379, %385 : vector<2x256xf32>
    %387 = vector.extract_strided_slice %344 {offsets = [0, 768], sizes = [2, 64], strides = [1, 1]} : vector<2x896xf32> to vector<2x64xf32>
    %388 = vector.extract_strided_slice %344 {offsets = [0, 832], sizes = [2, 64], strides = [1, 1]} : vector<2x896xf32> to vector<2x64xf32>
    %389 = arith.maximumf %387, %388 : vector<2x64xf32>
    %390 = arith.truncf %389 : vector<2x64xf32> to vector<2x64xbf16>
    %c3072 = arith.constant 3072 : index
    %c0_116 = arith.constant 0 : index
    %391 = vector.load %arg2[%c3072, %c0_116] : memref<3136x256xbf16, #tpu.memory_space<vmem>>, vector<64x256xbf16>
    %cst_117 = arith.constant dense<0.000000e+00> : vector<2x256xf32>
    %392 = tpu.matmul %390, %391, %cst_117 {dimension_numbers = #tpu.dot_dimension_numbers<[1], [0], [0], [1], [0, 0, 1, 1], [], []>} : vector<2x64xbf16>, vector<64x256xbf16>, vector<2x256xf32> -> vector<2x256xf32>
    %393 = arith.addf %386, %392 : vector<2x256xf32>
    %c0_118 = arith.constant 0 : index
    %c0_119 = arith.constant 0 : index
    %394 = vector.load %arg3[%c0_118, %c0_119] : memref<1x256xf32, #tpu.memory_space<vmem>>, vector<1x256xf32>
    %395 = vector.broadcast %394 : vector<1x256xf32> to vector<2x256xf32>
    %396 = arith.addf %393, %395 : vector<2x256xf32>
    %cst_120 = arith.constant 0.000000e+00 : f32
    %397 = vector.broadcast %cst_120 : f32 to vector<2x256xf32>
    %398 = arith.maximumf %396, %397 : vector<2x256xf32>
    %399 = arith.truncf %398 : vector<2x256xf32> to vector<2x256xbf16>
    %c0_121 = arith.constant 0 : index
    %c0_122 = arith.constant 0 : index
    %400 = vector.load %arg4[%c0_121, %c0_122] : memref<256x256xbf16, #tpu.memory_space<vmem>>, vector<256x256xbf16>
    %cst_123 = arith.constant dense<0.000000e+00> : vector<2x256xf32>
    %401 = tpu.matmul %399, %400, %cst_123 {dimension_numbers = #tpu.dot_dimension_numbers<[1], [0], [0], [1], [0, 0, 1, 1], [], []>} : vector<2x256xbf16>, vector<256x256xbf16>, vector<2x256xf32> -> vector<2x256xf32>
    %c0_124 = arith.constant 0 : index
    %c0_125 = arith.constant 0 : index
    %402 = vector.load %arg5[%c0_124, %c0_125] : memref<1x256xf32, #tpu.memory_space<vmem>>, vector<1x256xf32>
    %403 = vector.broadcast %402 : vector<1x256xf32> to vector<2x256xf32>
    %404 = arith.addf %401, %403 : vector<2x256xf32>
    %cst_126 = arith.constant 0.000000e+00 : f32
    %405 = vector.broadcast %cst_126 : f32 to vector<2x256xf32>
    %406 = arith.maximumf %404, %405 : vector<2x256xf32>
    %c0_127 = arith.constant 0 : index
    %c0_128 = arith.constant 0 : index
    %407 = vector.load %arg8[%c0_127, %c0_128] : memref<2x256xf32, #tpu.memory_space<vmem>>, vector<2x256xf32>
    tpu.vector_store %arg8[%c0_127, %c0_128], %406 {strides = array<i32>} : memref<2x256xf32, #tpu.memory_space<vmem>>, vector<2x256xf32>,
    %408 = arith.truncf %406 : vector<2x256xf32> to vector<2x256xbf16>
    %c0_129 = arith.constant 0 : index
    %c0_130 = arith.constant 0 : index
    %409 = vector.load %arg6[%c0_129, %c0_130] : memref<256x128xbf16, #tpu.memory_space<vmem>>, vector<256x128xbf16>
    %cst_131 = arith.constant dense<0.000000e+00> : vector<2x128xf32>
    %410 = tpu.matmul %408, %409, %cst_131 {dimension_numbers = #tpu.dot_dimension_numbers<[1], [0], [0], [1], [0, 0, 1, 1], [], []>} : vector<2x256xbf16>, vector<256x128xbf16>, vector<2x128xf32> -> vector<2x128xf32>
    %c0_132 = arith.constant 0 : index
    %c0_133 = arith.constant 0 : index
    %411 = vector.load %arg7[%c0_132, %c0_133] : memref<1x128xf32, #tpu.memory_space<vmem>>, vector<1x128xf32>
    %412 = vector.broadcast %411 : vector<1x128xf32> to vector<2x128xf32>
    %413 = arith.addf %410, %412 : vector<2x128xf32>
    %c0_134 = arith.constant 0 : index
    %c0_135 = arith.constant 0 : index
    %414 = vector.load %arg9[%c0_134, %c0_135] : memref<2x128xf32, #tpu.memory_space<vmem>>, vector<2x128xf32>
    tpu.vector_store %arg9[%c0_134, %c0_135], %413 {strides = array<i32>} : memref<2x128xf32, #tpu.memory_space<vmem>>, vector<2x128xf32>,
    return
  }
}

</mosaic_0001>

<llo_original>
// kernel: tile.9
$region0: #{tile.9}
  %s0 = inlined_call_operand.vmem [shape: f32[14,64], index: 0, kind: input, shape index: {}]
  %s1 = inlined_call_operand.vmem [shape: f32[1,896], index: 1, kind: output, shape index: {}]
  $region1: #{tile.9} parent=0
    #allocation0 [shape = 'u8[28672]{0}', space=vmem, size = 0x7000, scoped, tag = 'scoped mem for output reshape']
    %v2 = vld [vmem:[%s0] ss:$2 sm:$0x7f]
    %vm3 = vcmask 523264
    %4 = vst.msk [vmem:[#allocation0] ss:$8 sm:$0xf] %vm3, %v2
    %5 = vst.msk [vmem:[#allocation0] ss:$8 sm:$0x70] %vm3, %v2
    %s6 = scalar_lea.vmem %s0, 1
    %v7 = vld [vmem:[%s6] ss:$2 sm:$0x7f]
    %8 = vrot.lane.b32.xlu0 %v7, 64
    %v9 = vpop.permute.xlu0 %8
    %vm10 = vcmask 1048064
    %11 = vst.msk [vmem:[#allocation0] ss:$8 sm:$0xf] %vm10, %v9
    %12 = vst.msk [vmem:[#allocation0] ss:$8 sm:$0x70] %vm10, %v9
    %s14 = sshllo.u32 0, 1
    %v16 = vld [vmem:[#allocation0] sm:%s14]
    %s17 = sshllo.u32 0, 1
    %18 = vst [vmem:[%s1] sm:%s17] %v16
    %s19 = scalar_lea.vmem [#allocation0], 8
    %v20 = vld [vmem:[%s19] sm:%s14]
    %s21 = sshllo.u32 0, 1
    %s22 = scalar_lea.vmem %s1, 1
    %23 = vst [vmem:[%s22] sm:%s21] %v20
    %s24 = scalar_lea.vmem [#allocation0], 16
    %v25 = vld [vmem:[%s24] sm:%s14]
    %s26 = sshllo.u32 0, 1
    %s27 = smul.addr 1, 2
    %s28 = scalar_lea.vmem %s1, %s27
    %29 = vst [vmem:[%s28] sm:%s26] %v25
    %s30 = scalar_lea.vmem [#allocation0], 24
    %v31 = vld [vmem:[%s30] sm:%s14]
    %s32 = sshllo.u32 0, 1
    %s33 = smul.addr 1, 3
    %s34 = scalar_lea.vmem %s1, %s33
    %35 = vst [vmem:[%s34] sm:%s32] %v31
    %s36 = scalar_lea.vmem [#allocation0], 32
    %v37 = vld [vmem:[%s36] sm:%s14]
    %s38 = sshllo.u32 0, 1
    %s39 = smul.addr 1, 4
    %s40 = scalar_lea.vmem %s1, %s39
    %41 = vst [vmem:[%s40] sm:%s38] %v37
    %s42 = scalar_lea.vmem [#allocation0], 40
    %v43 = vld [vmem:[%s42] sm:%s14]
    %s44 = sshllo.u32 0, 1
    %s45 = smul.addr 1, 5
    %s46 = scalar_lea.vmem %s1, %s45
    %47 = vst [vmem:[%s46] sm:%s44] %v43
    %s48 = scalar_lea.vmem [#allocation0], 48
    %v49 = vld [vmem:[%s48] sm:%s14]
    %s50 = sshllo.u32 0, 1
    %s51 = smul.addr 1, 6
    %s52 = scalar_lea.vmem %s1, %s51
    %53 = vst [vmem:[%s52] sm:%s50] %v49

// kernel: tile.8
$region0: #{tile.8}
  #allocation2 [shape = 's32[1]{0}', space=sflag, size = 0x4, scoped, tag = 'scoped memory for tile.8']
  %s0 = inlined_call_operand.hbm [shape: f32[64], index: 0, kind: input, shape index: {}]
  %s1 = inlined_call_operand.vmem [shape: f32[14,64], index: 1, kind: output, shape index: {}]
  $region1: #{tile.8} parent=0
    #allocation0 [shape = 'u8[512]{0}', space=vmem, size = 0x400, scoped, tag = 'operand span for operand 0']
    #allocation1 [shape = 's32[1]{0}', space=sflag, size = 0x4, scoped, tag = 'scoped memory for tile.8']
    %2 = vsyncpa [#allocation1], 0
    // Predicated region
    $region2: #{tile.8} parent=1 // pred_check
      _
    $region3: #{tile.8} parent=1 // pred_check_branch
      %4 = sbr.rel (0) target = $region5
    $region4: #{tile.8} parent=1 // pred_region
      %s6 = ssub.s32 16, 16
      %7 = vsyncadd [#allocation1], %s6
      %s9 = sshll.u32 [#allocation0], 4
      %s10 = int_to_ptr.vmem [resolvable:$true] %s9
      %12 = dma.hbm_to_vmem [thread:$0]  %s0, 16, %s10, [#allocation1]
    $region5: #{tile.8} parent=1 // pred_fallthru
      _
    // Predicated region
    $region6: #{tile.8} parent=1 // pred_check
      _
    $region7: #{tile.8} parent=1 // pred_check_branch
      %14 = sbr.rel (0) target = $region9
    $region8: #{tile.8} parent=1 // pred_region
      %15 = dma.done [#allocation1], 16
    $region9: #{tile.8} parent=1 // pred_fallthru
      _
    %v16 = vld [vmem:[#allocation0] ss:$0 sm:$0xff]
    %17 = vst [vmem:[%s1] sm:$0xff] %v16
    %s18 = scalar_lea.vmem %s1, 8
    %19 = vst [vmem:[%s18] sm:$0xff] %v16
    %20 = vsyncpa [#allocation1], 1

// kernel: vgg16prune_forward.1
$region0: #{vgg16prune_forward.1}
  #allocation0 [shape = 'u32[]', space=smem, size = 0x4, offset = 0x4, fixed_abs, tag = 'smem constant byte address 0x4 - core index']
  #allocation1 [shape = 'u32[144,128]{1,0:T(1,128)}', space=vmem, size = 0x12000, scoped, tag = 'internal scratch']
  %s0 = inlined_call_operand.vmem [shape: f32[2,12544], index: 0, kind: input, shape index: {}]
  %s1 = inlined_call_operand.vmem [shape: f32[1,896], index: 1, kind: input, shape index: {}]
  %s2 = inlined_call_operand.hbm [shape: bf16[3136,256], index: 2, kind: input, shape index: {}]
  %s3 = inlined_call_operand.hbm [shape: f32[1,256], index: 3, kind: input, shape index: {}]
  %s4 = inlined_call_operand.hbm [shape: bf16[256,256], index: 4, kind: input, shape index: {}]
  %s5 = inlined_call_operand.hbm [shape: f32[1,256], index: 5, kind: input, shape index: {}]
  %s6 = inlined_call_operand.hbm [shape: bf16[256,128], index: 6, kind: input, shape index: {}]
  %s7 = inlined_call_operand.hbm [shape: f32[1,128], index: 7, kind: input, shape index: {}]
  %s8 = inlined_call_operand.hbm [shape: f32[2,256], index: 8, kind: output, shape index: {0}]
  %s9 = inlined_call_operand.hbm [shape: f32[2,128], index: 9, kind: output, shape index: {1}]
  %10 = xla_tuple %s8, %s9
  %s11 = sld [smem:[#allocation0]]
  $region74: #{vgg16prune_forward.1} parent=0
    _
  %s13 = ssub.s32 1, %s11
  %s14 = scalar_select 0, %s13, %s11
  $region1: #{vgg16prune_forward.1} parent=0
    #allocation2 [shape = 'u8[1605632]{0}', space=vmem, size = 0x188000, scoped, tag = 'input window, operand 2, single buffered']
    #allocation3 [shape = 's32[1]{0}', space=sflag, size = 0x4, scoped, tag = 'scoped memory for vgg16prune_forward.1']
    #allocation4 [shape = 's32[1]{0}', space=sflag, size = 0x4, scoped, tag = 'scoped memory for vgg16prune_forward.1']
    #allocation5 [shape = 'u8[1024]{0}', space=vmem, size = 0x400, scoped, tag = 'input window, operand 3, single buffered']
    #allocation6 [shape = 's32[1]{0}', space=sflag, size = 0x4, scoped, tag = 'scoped memory for vgg16prune_forward.1']
    #allocation7 [shape = 'u8[131072]{0}', space=vmem, size = 0x20000, scoped, tag = 'input window, operand 4, single buffered']
    #allocation8 [shape = 'u8[1024]{0}', space=vmem, size = 0x400, scoped, tag = 'input window, operand 5, single buffered']
    #allocation9 [shape = 's32[1]{0}', space=sflag, size = 0x4, scoped, tag = 'scoped memory for vgg16prune_forward.1']
    #allocation10 [shape = 'u8[65536]{0}', space=vmem, size = 0x10000, scoped, tag = 'input window, operand 6, single buffered']
    #allocation11 [shape = 'u8[512]{0}', space=vmem, size = 0x400, scoped, tag = 'input window, operand 7, single buffered']
    #allocation12 [shape = 's32[1]{0}', space=sflag, size = 0x4, scoped, tag = 'scoped memory for vgg16prune_forward.1']
    #allocation13 [shape = 'u8[2048]{0}', space=vmem, size = 0x800, scoped, tag = 'output window, operand 0, single buffered']
    #allocation14 [shape = 'u8[1024]{0}', space=vmem, size = 0x400, scoped, tag = 'output window, operand 1, single buffered']
    #allocation15 [shape = 's32[1]{0}', space=sflag, size = 0x4, scoped, tag = 'scoped memory for vgg16prune_forward.1']
    %15 = vsyncpa [#allocation3], 0
    %16 = vsyncpa [#allocation6], 0
    %17 = vsyncpa [#allocation9], 0
    %18 = vsyncpa [#allocation12], 0
    %19 = vsyncpa [#allocation4], 0
    %20 = vsyncpa [#allocation15], 0
    // Predicated region
    $region2: #{vgg16prune_forward.1} parent=1 // pred_check
      _
    $region3: #{vgg16prune_forward.1} parent=1 // pred_check_branch
      %22 = sbr.rel (0) target = $region5
    $region4: #{vgg16prune_forward.1} parent=1 // pred_region
      _
    $region5: #{vgg16prune_forward.1} parent=1 // pred_fallthru
      _
    // Predicated region
    $region6: #{vgg16prune_forward.1} parent=1 // pred_check
      _
    $region7: #{vgg16prune_forward.1} parent=1 // pred_check_branch
      %24 = sbr.rel (0) target = $region9
    $region8: #{vgg16prune_forward.1} parent=1 // pred_region
      _
    $region9: #{vgg16prune_forward.1} parent=1 // pred_fallthru
      _
    // Predicated region
    $region10: #{vgg16prune_forward.1} parent=1 // pred_check
      _
    $region11: #{vgg16prune_forward.1} parent=1 // pred_check_branch
      %26 = sbr.rel (0) target = $region13
    $region12: #{vgg16prune_forward.1} parent=1 // pred_region
      %s28 = ssub.s32 50176, 50176
      %29 = vsyncadd [#allocation3], %s28
      %s30 = sshll.u32 [#allocation2], 4
      %s31 = int_to_ptr.vmem [resolvable:$true] %s30
      %36 = dma.hbm_to_vmem [thread:$0]  %s2, 50176, %s31, [#allocation3], 128, 128, 8
    $region13: #{vgg16prune_forward.1} parent=1 // pred_fallthru
      _
    // Predicated region
    $region14: #{vgg16prune_forward.1} parent=1 // pred_check
      _
    $region15: #{vgg16prune_forward.1} parent=1 // pred_check_branch
      %38 = sbr.rel (0) target = $region17
    $region16: #{vgg16prune_forward.1} parent=1 // pred_region
      %s40 = ssub.s32 32, 32
      %41 = vsyncadd [#allocation6], %s40
      %s43 = sshll.u32 [#allocation5], 4
      %s44 = int_to_ptr.vmem [resolvable:$true] %s43
      %46 = dma.hbm_to_vmem [thread:$0]  %s3, 32, %s44, [#allocation6]
    $region17: #{vgg16prune_forward.1} parent=1 // pred_fallthru
      _
    // Predicated region
    $region18: #{vgg16prune_forward.1} parent=1 // pred_check
      _
    $region19: #{vgg16prune_forward.1} parent=1 // pred_check_branch
      %48 = sbr.rel (0) target = $region21
    $region20: #{vgg16prune_forward.1} parent=1 // pred_region
      %s50 = ssub.s32 4096, 4096
      %51 = vsyncadd [#allocation6], %s50
      %s52 = sshll.u32 [#allocation7], 4
      %s53 = int_to_ptr.vmem [resolvable:$true] %s52
      %58 = dma.hbm_to_vmem [thread:$0]  %s4, 4096, %s53, [#allocation6], 128, 128, 8
    $region21: #{vgg16prune_forward.1} parent=1 // pred_fallthru
      _
    // Predicated region
    $region22: #{vgg16prune_forward.1} parent=1 // pred_check
      _
    $region23: #{vgg16prune_forward.1} parent=1 // pred_check_branch
      %60 = sbr.rel (0) target = $region25
    $region24: #{vgg16prune_forward.1} parent=1 // pred_region
      %s62 = ssub.s32 32, 32
      %63 = vsyncadd [#allocation9], %s62
      %s65 = sshll.u32 [#allocation8], 4
      %s66 = int_to_ptr.vmem [resolvable:$true] %s65
      %68 = dma.hbm_to_vmem [thread:$0]  %s5, 32, %s66, [#allocation9]
    $region25: #{vgg16prune_forward.1} parent=1 // pred_fallthru
      _
    // Predicated region
    $region26: #{vgg16prune_forward.1} parent=1 // pred_check
      _
    $region27: #{vgg16prune_forward.1} parent=1 // pred_check_branch
      %70 = sbr.rel (0) target = $region29
    $region28: #{vgg16prune_forward.1} parent=1 // pred_region
      %s72 = ssub.s32 2048, 2048
      %73 = vsyncadd [#allocation9], %s72
      %s74 = sshll.u32 [#allocation10], 4
      %s75 = int_to_ptr.vmem [resolvable:$true] %s74
      %80 = dma.hbm_to_vmem [thread:$0]  %s6, 2048, %s75, [#allocation9], 64, 64, 4
    $region29: #{vgg16prune_forward.1} parent=1 // pred_fallthru
      _
    // Predicated region
    $region30: #{vgg16prune_forward.1} parent=1 // pred_check
      _
    $region31: #{vgg16prune_forward.1} parent=1 // pred_check_branch
      %82 = sbr.rel (0) target = $region33
    $region32: #{vgg16prune_forward.1} parent=1 // pred_region
      %s84 = ssub.s32 16, 16
      %85 = vsyncadd [#allocation12], %s84
      %s87 = sshll.u32 [#allocation11], 4
      %s88 = int_to_ptr.vmem [resolvable:$true] %s87
      %90 = dma.hbm_to_vmem [thread:$0]  %s7, 16, %s88, [#allocation12]
    $region33: #{vgg16prune_forward.1} parent=1 // pred_fallthru
      _
    // Predicated region
    $region34: #{vgg16prune_forward.1} parent=1 // pred_check
      _
    $region35: #{vgg16prune_forward.1} parent=1 // pred_check_branch
      %92 = sbr.rel (0) target = $region37
    $region36: #{vgg16prune_forward.1} parent=1 // pred_region
      %93 = dma.done [#allocation3], 50176
    $region37: #{vgg16prune_forward.1} parent=1 // pred_fallthru
      _
    // Predicated region
    $region38: #{vgg16prune_forward.1} parent=1 // pred_check
      _
    $region39: #{vgg16prune_forward.1} parent=1 // pred_check_branch
      %95 = sbr.rel (0) target = $region41
    $region40: #{vgg16prune_forward.1} parent=1 // pred_region
      %96 = dma.done [#allocation6], 32
    $region41: #{vgg16prune_forward.1} parent=1 // pred_fallthru
      _
    // Predicated region
    $region42: #{vgg16prune_forward.1} parent=1 // pred_check
      _
    $region43: #{vgg16prune_forward.1} parent=1 // pred_check_branch
      %98 = sbr.rel (0) target = $region45
    $region44: #{vgg16prune_forward.1} parent=1 // pred_region
      %99 = dma.done [#allocation6], 4096
    $region45: #{vgg16prune_forward.1} parent=1 // pred_fallthru
      _
    // Predicated region
    $region46: #{vgg16prune_forward.1} parent=1 // pred_check
      _
    $region47: #{vgg16prune_forward.1} parent=1 // pred_check_branch
      %101 = sbr.rel (0) target = $region49
    $region48: #{vgg16prune_forward.1} parent=1 // pred_region
      %102 = dma.done [#allocation9], 32
    $region49: #{vgg16prune_forward.1} parent=1 // pred_fallthru
      _
    // Predicated region
    $region50: #{vgg16prune_forward.1} parent=1 // pred_check
      _
    $region51: #{vgg16prune_forward.1} parent=1 // pred_check_branch
      %104 = sbr.rel (0) target = $region53
    $region52: #{vgg16prune_forward.1} parent=1 // pred_region
      %105 = dma.done [#allocation9], 2048
    $region53: #{vgg16prune_forward.1} parent=1 // pred_fallthru
      _
    // Predicated region
    $region54: #{vgg16prune_forward.1} parent=1 // pred_check
      _
    $region55: #{vgg16prune_forward.1} parent=1 // pred_check_branch
      %107 = sbr.rel (0) target = $region57
    $region56: #{vgg16prune_forward.1} parent=1 // pred_region
      %108 = dma.done [#allocation12], 16
    $region57: #{vgg16prune_forward.1} parent=1 // pred_fallthru
      _
    %v110 = vld [vmem:[%s1] sm:$0xff]
    %v111 = vld [vmem:[%s0] sm:$0xff]
    %v112 = vld [vmem:[%s0 + $0x8] sm:$0x3f]
    %v114 = vlaneseq
    %v115 = vshrl.u32 %v114, 7
    %v116 = vsub.s32 0, %v115
    %v117 = vrot.slane %v110, %v116
    %v118 = vlaneseq
    %v119 = vshrl.u32 %v118, 7
    %v120 = vsub.s32 1, %v119
    %v121 = vrot.slane %v110, %v120
    %v122 = vlaneseq
    %v123 = vshrl.u32 %v122, 7
    %v124 = vsub.s32 2, %v123
    %v125 = vrot.slane %v110, %v124
    %v126 = vlaneseq
    %v127 = vshrl.u32 %v126, 7
    %v128 = vsub.s32 3, %v127
    %v129 = vrot.slane %v110, %v128
    %v130 = vlaneseq
    %v131 = vshrl.u32 %v130, 7
    %v132 = vsub.s32 4, %v131
    %v133 = vrot.slane %v110, %v132
    %v134 = vlaneseq
    %v135 = vshrl.u32 %v134, 7
    %v136 = vsub.s32 5, %v135
    %v137 = vrot.slane %v110, %v136
    %v138 = vlaneseq
    %v139 = vshrl.u32 %v138, 7
    %v140 = vsub.s32 6, %v139
    %v141 = vrot.slane %v110, %v140
    %v142 = vcombine.low %v117, %v121
    %v143 = vcombine.low %v125, %v129
    %v145 = vunpack.c.l.s4 1983009808
    %v146 = vunpack.c.0.s8 %v145
    %v147 = vlaneseq
    %v148 = vshrl.u32 %v147, 7
    %v149 = vsub.s32 %v146, %v148
    %v150 = vrot.slane %v142, %v149
    %v152 = vunpack.c.l.s4 1983009808
    %v153 = vunpack.c.0.s8 %v152
    %v154 = vlaneseq
    %v155 = vshrl.u32 %v154, 7
    %v156 = vsub.s32 %v153, %v155
    %v157 = vrot.slane %v143, %v156
    %v158 = vcombine.low %v150, %v157
    %v159 = vcombine.low %v133, %v137
    %v161 = vunpack.c.l.s4 1983009808
    %v162 = vunpack.c.0.s8 %v161
    %v163 = vlaneseq
    %v164 = vshrl.u32 %v163, 7
    %v165 = vsub.s32 %v162, %v164
    %v166 = vrot.slane %v159, %v165
    %v168 = vunpack.c.l.s4 1983009808
    %v169 = vunpack.c.0.s8 %v168
    %v170 = vlaneseq
    %v171 = vshrl.u32 %v170, 7
    %v172 = vsub.s32 %v169, %v171
    %v173 = vrot.slane %v141, %v172
    %v174 = vcombine.low %v166, %v173
    %v177 = vmul.f32 %v111, %v158
    %v178 = vmul.f32 %v112, %v174
    %v179 = vld [vmem:[%s0 + $0xe] sm:$0xff]
    %v180 = vld [vmem:[%s0 + $0x16] sm:$0x3f]
    %v181 = vmul.f32 %v179, %v158
    %v182 = vmul.f32 %v180, %v174
    %v183 = vmax.f32 %v177, %v181
    %v184 = vmax.f32 %v178, %v182
    %186 = vrot.lane.b32.xlu0 %v183, 64
    %v187 = vpop.permute.xlu0 %186
    %v189 = vmax.f32 %v183, %v187
    %v190 = vpack.c.bf16 %v189, %v189
    %v191 = vld [vmem:[#allocation2] sm:$0xff]
    %v192 = vld [vmem:[#allocation2 + $0x8] sm:$0xff]
    %v193 = vld [vmem:[#allocation2 + $0x10] sm:$0xff]
    %v194 = vld [vmem:[#allocation2 + $0x18] sm:$0xff]
    %v195 = vld [vmem:[#allocation2 + $0x20] sm:$0xff]
    %v196 = vld [vmem:[#allocation2 + $0x28] sm:$0xff]
    %v197 = vld [vmem:[#allocation2 + $0x30] sm:$0xff]
    %v198 = vld [vmem:[#allocation2 + $0x38] sm:$0xff]
    %v199 = vrot.slane %v183, 2
    %v201 = vrot.slane %v187, 2
    %v203 = vmax.f32 %v199, %v201
    %v204 = vpack.c.bf16 %v203, %v203
    %v205 = vld [vmem:[#allocation2 + $0x40] sm:$0xff]
    %v206 = vld [vmem:[#allocation2 + $0x48] sm:$0xff]
    %v207 = vld [vmem:[#allocation2 + $0x50] sm:$0xff]
    %v208 = vld [vmem:[#allocation2 + $0x58] sm:$0xff]
    %v209 = vld [vmem:[#allocation2 + $0x60] sm:$0xff]
    %v210 = vld [vmem:[#allocation2 + $0x68] sm:$0xff]
    %v211 = vld [vmem:[#allocation2 + $0x70] sm:$0xff]
    %v212 = vld [vmem:[#allocation2 + $0x78] sm:$0xff]
    %v221 = vunpack.c.l.b16 %v205
    %v222 = vunpack.c.h.b16 %v205
    %v223 = vunpack.c.l.b16 %v206
    %v224 = vunpack.c.h.b16 %v206
    %v225 = vunpack.c.l.b16 %v207
    %v226 = vunpack.c.h.b16 %v207
    %v227 = vunpack.c.l.b16 %v208
    %v228 = vunpack.c.h.b16 %v208
    %v229 = vunpack.c.l.b16 %v209
    %v230 = vunpack.c.h.b16 %v209
    %v231 = vunpack.c.l.b16 %v210
    %v232 = vunpack.c.h.b16 %v210
    %v233 = vunpack.c.l.b16 %v211
    %v234 = vunpack.c.h.b16 %v211
    %v235 = vunpack.c.l.b16 %v212
    %v236 = vunpack.c.h.b16 %v212
    %v237 = vpack.c.b16 %v223, %v221
    %v238 = vpack.c.b16 %v224, %v222
    %v239 = vpack.c.b16 %v227, %v225
    %v240 = vpack.c.b16 %v228, %v226
    %v241 = vpack.c.b16 %v231, %v229
    %v242 = vpack.c.b16 %v232, %v230
    %v243 = vpack.c.b16 %v235, %v233
    %v244 = vpack.c.b16 %v236, %v234
    %vm253 = vcmask 523264
    %v255 = vsel %vm253, %v204, 0
    %257 = vmatprep.subr.bf16.mxu0 %v238
    %258 = vmatpush1.bf16.msra.mxu0 %v237
    %259 = vmatprep.subr.bf16.mxu0 %v240
    %260 = vmatpush1.bf16.msra.mxu0 %v239
    %261 = vmatprep.subr.bf16.mxu0 %v242
    %262 = vmatpush1.bf16.msra.mxu0 %v241
    %263 = vmatprep.subr.bf16.mxu0 %v244
    %264 = vmatpush1.bf16.msra.mxu0 %v243
    %265 = vmatprep.subr.bf16.mxu0 0
    %266 = vmatpush1.bf16.msra.mxu0 0
    %267 = vmatprep.subr.bf16.mxu0 0
    %268 = vmatpush1.bf16.msra.mxu0 0
    %269 = vmatprep.subr.bf16.mxu0 0
    %270 = vmatpush1.bf16.msra.mxu0 0
    %271 = vmatprep.subr.bf16.mxu0 0
    %272 = vmatpush1.bf16.msra.mxu0 0
    %273 = vmatprep.subr.bf16.mxu0 0
    %274 = vmatpush1.bf16.msra.mxu0 0
    %275 = vmatprep.subr.bf16.mxu0 0
    %276 = vmatpush1.bf16.msra.mxu0 0
    %277 = vmatprep.subr.bf16.mxu0 0
    %278 = vmatpush1.bf16.msra.mxu0 0
    %279 = vmatprep.subr.bf16.mxu0 0
    %280 = vmatpush1.bf16.msra.mxu0 0
    %281 = vmatprep.subr.bf16.mxu0 0
    %282 = vmatpush1.bf16.msra.mxu0 0
    %283 = vmatprep.subr.bf16.mxu0 0
    %284 = vmatpush1.bf16.msra.mxu0 0
    %285 = vmatprep.subr.bf16.mxu0 0
    %286 = vmatpush1.bf16.msra.mxu0 0
    %287 = vmatprep.subr.bf16.mxu0 0
    %288 = vmatpush1.bf16.msra.mxu0 0
    %289 = vmatprep.mubr.bf16.mxu0 0
    %290 = vmatmul.mubr.bf16.gmra.mrb[0].mxu0 %v255
    %v291 = vpop.f32.mrb[0].mxu0
    %v292 = vadd.f32 0.0, %v291
    %v293 = vpop.f32.mrb[0].mxu0
    %v294 = vadd.f32 0.0, %v293
    %v295 = vpop.f32.mrb[0].mxu0
    %v296 = vpop.f32.mrb[0].mxu0
    %297 = vdwg.mxu0
    %v306 = vunpack.c.l.b16 %v191
    %v307 = vunpack.c.h.b16 %v191
    %v308 = vunpack.c.l.b16 %v192
    %v309 = vunpack.c.h.b16 %v192
    %v310 = vunpack.c.l.b16 %v193
    %v311 = vunpack.c.h.b16 %v193
    %v312 = vunpack.c.l.b16 %v194
    %v313 = vunpack.c.h.b16 %v194
    %v314 = vunpack.c.l.b16 %v195
    %v315 = vunpack.c.h.b16 %v195
    %v316 = vunpack.c.l.b16 %v196
    %v317 = vunpack.c.h.b16 %v196
    %v318 = vunpack.c.l.b16 %v197
    %v319 = vunpack.c.h.b16 %v197
    %v320 = vunpack.c.l.b16 %v198
    %v321 = vunpack.c.h.b16 %v198
    %v322 = vpack.c.b16 %v308, %v306
    %v323 = vpack.c.b16 %v309, %v307
    %v324 = vpack.c.b16 %v312, %v310
    %v325 = vpack.c.b16 %v313, %v311
    %v326 = vpack.c.b16 %v316, %v314
    %v327 = vpack.c.b16 %v317, %v315
    %v328 = vpack.c.b16 %v320, %v318
    %v329 = vpack.c.b16 %v321, %v319
    %v339 = vsel %vm253, %v190, 0
    %341 = vmatprep.subr.bf16.mxu0 %v323
    %342 = vmatpush1.bf16.msra.mxu0 %v322
    %343 = vmatprep.subr.bf16.mxu0 %v325
    %344 = vmatpush1.bf16.msra.mxu0 %v324
    %345 = vmatprep.subr.bf16.mxu0 %v327
    %346 = vmatpush1.bf16.msra.mxu0 %v326
    %347 = vmatprep.subr.bf16.mxu0 %v329
    %348 = vmatpush1.bf16.msra.mxu0 %v328
    %349 = vmatprep.subr.bf16.mxu0 0
    %350 = vmatpush1.bf16.msra.mxu0 0
    %351 = vmatprep.subr.bf16.mxu0 0
    %352 = vmatpush1.bf16.msra.mxu0 0
    %353 = vmatprep.subr.bf16.mxu0 0
    %354 = vmatpush1.bf16.msra.mxu0 0
    %355 = vmatprep.subr.bf16.mxu0 0
    %356 = vmatpush1.bf16.msra.mxu0 0
    %357 = vmatprep.subr.bf16.mxu0 0
    %358 = vmatpush1.bf16.msra.mxu0 0
    %359 = vmatprep.subr.bf16.mxu0 0
    %360 = vmatpush1.bf16.msra.mxu0 0
    %361 = vmatprep.subr.bf16.mxu0 0
    %362 = vmatpush1.bf16.msra.mxu0 0
    %363 = vmatprep.subr.bf16.mxu0 0
    %364 = vmatpush1.bf16.msra.mxu0 0
    %365 = vmatprep.subr.bf16.mxu0 0
    %366 = vmatpush1.bf16.msra.mxu0 0
    %367 = vmatprep.subr.bf16.mxu0 0
    %368 = vmatpush1.bf16.msra.mxu0 0
    %369 = vmatprep.subr.bf16.mxu0 0
    %370 = vmatpush1.bf16.msra.mxu0 0
    %371 = vmatprep.subr.bf16.mxu0 0
    %372 = vmatpush1.bf16.msra.mxu0 0
    %373 = vmatprep.mubr.bf16.mxu0 0
    %374 = vmatmul.mubr.bf16.gmra.mrb[0].mxu0 %v339
    %v375 = vpop.f32.mrb[0].mxu0
    %v376 = vadd.f32 %v292, %v375
    %v377 = vpop.f32.mrb[0].mxu0
    %v378 = vadd.f32 %v294, %v377
    %v379 = vpop.f32.mrb[0].mxu0
    %v380 = vpop.f32.mrb[0].mxu0
    %381 = vdwg.mxu0
    %v382 = vrot.slane %v183, 4
    %v384 = vrot.slane %v187, 4
    %v386 = vmax.f32 %v382, %v384
    %v387 = vpack.c.bf16 %v386, %v386
    %v388 = vld [vmem:[#allocation2 + $0x80] sm:$0xff]
    %v389 = vld [vmem:[#allocation2 + $0x88] sm:$0xff]
    %v390 = vld [vmem:[#allocation2 + $0x90] sm:$0xff]
    %v391 = vld [vmem:[#allocation2 + $0x98] sm:$0xff]
    %v392 = vld [vmem:[#allocation2 + $0xa0] sm:$0xff]
    %v393 = vld [vmem:[#allocation2 + $0xa8] sm:$0xff]
    %v394 = vld [vmem:[#allocation2 + $0xb0] sm:$0xff]
    %v395 = vld [vmem:[#allocation2 + $0xb8] sm:$0xff]
    %v404 = vunpack.c.l.b16 %v388
    %v405 = vunpack.c.h.b16 %v388
    %v406 = vunpack.c.l.b16 %v389
    %v407 = vunpack.c.h.b16 %v389
    %v408 = vunpack.c.l.b16 %v390
    %v409 = vunpack.c.h.b16 %v390
    %v410 = vunpack.c.l.b16 %v391
    %v411 = vunpack.c.h.b16 %v391
    %v412 = vunpack.c.l.b16 %v392
    %v413 = vunpack.c.h.b16 %v392
    %v414 = vunpack.c.l.b16 %v393
    %v415 = vunpack.c.h.b16 %v393
    %v416 = vunpack.c.l.b16 %v394
    %v417 = vunpack.c.h.b16 %v394
    %v418 = vunpack.c.l.b16 %v395
    %v419 = vunpack.c.h.b16 %v395
    %v420 = vpack.c.b16 %v406, %v404
    %v421 = vpack.c.b16 %v407, %v405
    %v422 = vpack.c.b16 %v410, %v408
    %v423 = vpack.c.b16 %v411, %v409
    %v424 = vpack.c.b16 %v414, %v412
    %v425 = vpack.c.b16 %v415, %v413
    %v426 = vpack.c.b16 %v418, %v416
    %v427 = vpack.c.b16 %v419, %v417
    %v437 = vsel %vm253, %v387, 0
    %439 = vmatprep.subr.bf16.mxu0 %v421
    %440 = vmatpush1.bf16.msra.mxu0 %v420
    %441 = vmatprep.subr.bf16.mxu0 %v423
    %442 = vmatpush1.bf16.msra.mxu0 %v422
    %443 = vmatprep.subr.bf16.mxu0 %v425
    %444 = vmatpush1.bf16.msra.mxu0 %v424
    %445 = vmatprep.subr.bf16.mxu0 %v427
    %446 = vmatpush1.bf16.msra.mxu0 %v426
    %447 = vmatprep.subr.bf16.mxu0 0
    %448 = vmatpush1.bf16.msra.mxu0 0
    %449 = vmatprep.subr.bf16.mxu0 0
    %450 = vmatpush1.bf16.msra.mxu0 0
    %451 = vmatprep.subr.bf16.mxu0 0
    %452 = vmatpush1.bf16.msra.mxu0 0
    %453 = vmatprep.subr.bf16.mxu0 0
    %454 = vmatpush1.bf16.msra.mxu0 0
    %455 = vmatprep.subr.bf16.mxu0 0
    %456 = vmatpush1.bf16.msra.mxu0 0
    %457 = vmatprep.subr.bf16.mxu0 0
    %458 = vmatpush1.bf16.msra.mxu0 0
    %459 = vmatprep.subr.bf16.mxu0 0
    %460 = vmatpush1.bf16.msra.mxu0 0
    %461 = vmatprep.subr.bf16.mxu0 0
    %462 = vmatpush1.bf16.msra.mxu0 0
    %463 = vmatprep.subr.bf16.mxu0 0
    %464 = vmatpush1.bf16.msra.mxu0 0
    %465 = vmatprep.subr.bf16.mxu0 0
    %466 = vmatpush1.bf16.msra.mxu0 0
    %467 = vmatprep.subr.bf16.mxu0 0
    %468 = vmatpush1.bf16.msra.mxu0 0
    %469 = vmatprep.subr.bf16.mxu0 0
    %470 = vmatpush1.bf16.msra.mxu0 0
    %471 = vmatprep.mubr.bf16.mxu0 0
    %472 = vmatmul.mubr.bf16.gmra.mrb[0].mxu0 %v437
    %v473 = vpop.f32.mrb[0].mxu0
    %v474 = vadd.f32 0.0, %v473
    %v475 = vpop.f32.mrb[0].mxu0
    %v476 = vadd.f32 0.0, %v475
    %v477 = vpop.f32.mrb[0].mxu0
    %v478 = vpop.f32.mrb[0].mxu0
    %479 = vdwg.mxu0
    %v480 = vadd.f32 %v376, %v474
    %v481 = vadd.f32 %v378, %v476
    %v482 = vrot.slane %v183, 6
    %v484 = vrot.slane %v187, 6
    %v486 = vmax.f32 %v482, %v484
    %v487 = vpack.c.bf16 %v486, %v486
    %v488 = vld [vmem:[#allocation2 + $0xc0] sm:$0xff]
    %v489 = vld [vmem:[#allocation2 + $0xc8] sm:$0xff]
    %v490 = vld [vmem:[#allocation2 + $0xd0] sm:$0xff]
    %v491 = vld [vmem:[#allocation2 + $0xd8] sm:$0xff]
    %v492 = vld [vmem:[#allocation2 + $0xe0] sm:$0xff]
    %v493 = vld [vmem:[#allocation2 + $0xe8] sm:$0xff]
    %v494 = vld [vmem:[#allocation2 + $0xf0] sm:$0xff]
    %v495 = vld [vmem:[#allocation2 + $0xf8] sm:$0xff]
    %v504 = vunpack.c.l.b16 %v488
    %v505 = vunpack.c.h.b16 %v488
    %v506 = vunpack.c.l.b16 %v489
    %v507 = vunpack.c.h.b16 %v489
    %v508 = vunpack.c.l.b16 %v490
    %v509 = vunpack.c.h.b16 %v490
    %v510 = vunpack.c.l.b16 %v491
    %v511 = vunpack.c.h.b16 %v491
    %v512 = vunpack.c.l.b16 %v492
    %v513 = vunpack.c.h.b16 %v492
    %v514 = vunpack.c.l.b16 %v493
    %v515 = vunpack.c.h.b16 %v493
    %v516 = vunpack.c.l.b16 %v494
    %v517 = vunpack.c.h.b16 %v494
    %v518 = vunpack.c.l.b16 %v495
    %v519 = vunpack.c.h.b16 %v495
    %v520 = vpack.c.b16 %v506, %v504
    %v521 = vpack.c.b16 %v507, %v505
    %v522 = vpack.c.b16 %v510, %v508
    %v523 = vpack.c.b16 %v511, %v509
    %v524 = vpack.c.b16 %v514, %v512
    %v525 = vpack.c.b16 %v515, %v513
    %v526 = vpack.c.b16 %v518, %v516
    %v527 = vpack.c.b16 %v519, %v517
    %v537 = vsel %vm253, %v487, 0
    %539 = vmatprep.subr.bf16.mxu0 %v521
    %540 = vmatpush1.bf16.msra.mxu0 %v520
    %541 = vmatprep.subr.bf16.mxu0 %v523
    %542 = vmatpush1.bf16.msra.mxu0 %v522
    %543 = vmatprep.subr.bf16.mxu0 %v525
    %544 = vmatpush1.bf16.msra.mxu0 %v524
    %545 = vmatprep.subr.bf16.mxu0 %v527
    %546 = vmatpush1.bf16.msra.mxu0 %v526
    %547 = vmatprep.subr.bf16.mxu0 0
    %548 = vmatpush1.bf16.msra.mxu0 0
    %549 = vmatprep.subr.bf16.mxu0 0
    %550 = vmatpush1.bf16.msra.mxu0 0
    %551 = vmatprep.subr.bf16.mxu0 0
    %552 = vmatpush1.bf16.msra.mxu0 0
    %553 = vmatprep.subr.bf16.mxu0 0
    %554 = vmatpush1.bf16.msra.mxu0 0
    %555 = vmatprep.subr.bf16.mxu0 0
    %556 = vmatpush1.bf16.msra.mxu0 0
    %557 = vmatprep.subr.bf16.mxu0 0
    %558 = vmatpush1.bf16.msra.mxu0 0
    %559 = vmatprep.subr.bf16.mxu0 0
    %560 = vmatpush1.bf16.msra.mxu0 0
    %561 = vmatprep.subr.bf16.mxu0 0
    %562 = vmatpush1.bf16.msra.mxu0 0
    %563 = vmatprep.subr.bf16.mxu0 0
    %564 = vmatpush1.bf16.msra.mxu0 0
    %565 = vmatprep.subr.bf16.mxu0 0
    %566 = vmatpush1.bf16.msra.mxu0 0
    %567 = vmatprep.subr.bf16.mxu0 0
    %568 = vmatpush1.bf16.msra.mxu0 0
    %569 = vmatprep.subr.bf16.mxu0 0
    %570 = vmatpush1.bf16.msra.mxu0 0
    %571 = vmatprep.mubr.bf16.mxu0 0
    %572 = vmatmul.mubr.bf16.gmra.mrb[0].mxu0 %v537
    %v573 = vpop.f32.mrb[0].mxu0
    %v574 = vadd.f32 0.0, %v573
    %v575 = vpop.f32.mrb[0].mxu0
    %v576 = vadd.f32 0.0, %v575
    %v577 = vpop.f32.mrb[0].mxu0
    %v578 = vpop.f32.mrb[0].mxu0
    %579 = vdwg.mxu0
    %v580 = vadd.f32 %v480, %v574
    %v581 = vadd.f32 %v481, %v576
    %583 = vrot.lane.b32.xlu0 %v184, 64
    %v584 = vpop.permute.xlu0 %583
    %v586 = vmax.f32 %v184, %v584
    %v587 = vpack.c.bf16 %v586, %v586
    %v588 = vld [vmem:[#allocation2 + $0x100] sm:$0xff]
    %v589 = vld [vmem:[#allocation2 + $0x108] sm:$0xff]
    %v590 = vld [vmem:[#allocation2 + $0x110] sm:$0xff]
    %v591 = vld [vmem:[#allocation2 + $0x118] sm:$0xff]
    %v592 = vld [vmem:[#allocation2 + $0x120] sm:$0xff]
    %v593 = vld [vmem:[#allocation2 + $0x128] sm:$0xff]
    %v594 = vld [vmem:[#allocation2 + $0x130] sm:$0xff]
    %v595 = vld [vmem:[#allocation2 + $0x138] sm:$0xff]
    %v604 = vunpack.c.l.b16 %v588
    %v605 = vunpack.c.h.b16 %v588
    %v606 = vunpack.c.l.b16 %v589
    %v607 = vunpack.c.h.b16 %v589
    %v608 = vunpack.c.l.b16 %v590
    %v609 = vunpack.c.h.b16 %v590
    %v610 = vunpack.c.l.b16 %v591
    %v611 = vunpack.c.h.b16 %v591
    %v612 = vunpack.c.l.b16 %v592
    %v613 = vunpack.c.h.b16 %v592
    %v614 = vunpack.c.l.b16 %v593
    %v615 = vunpack.c.h.b16 %v593
    %v616 = vunpack.c.l.b16 %v594
    %v617 = vunpack.c.h.b16 %v594
    %v618 = vunpack.c.l.b16 %v595
    %v619 = vunpack.c.h.b16 %v595
    %v620 = vpack.c.b16 %v606, %v604
    %v621 = vpack.c.b16 %v607, %v605
    %v622 = vpack.c.b16 %v610, %v608
    %v623 = vpack.c.b16 %v611, %v609
    %v624 = vpack.c.b16 %v614, %v612
    %v625 = vpack.c.b16 %v615, %v613
    %v626 = vpack.c.b16 %v618, %v616
    %v627 = vpack.c.b16 %v619, %v617
    %v637 = vsel %vm253, %v587, 0
    %639 = vmatprep.subr.bf16.mxu0 %v621
    %640 = vmatpush1.bf16.msra.mxu0 %v620
    %641 = vmatprep.subr.bf16.mxu0 %v623
    %642 = vmatpush1.bf16.msra.mxu0 %v622
    %643 = vmatprep.subr.bf16.mxu0 %v625
    %644 = vmatpush1.bf16.msra.mxu0 %v624
    %645 = vmatprep.subr.bf16.mxu0 %v627
    %646 = vmatpush1.bf16.msra.mxu0 %v626
    %647 = vmatprep.subr.bf16.mxu0 0
    %648 = vmatpush1.bf16.msra.mxu0 0
    %649 = vmatprep.subr.bf16.mxu0 0
    %650 = vmatpush1.bf16.msra.mxu0 0
    %651 = vmatprep.subr.bf16.mxu0 0
    %652 = vmatpush1.bf16.msra.mxu0 0
    %653 = vmatprep.subr.bf16.mxu0 0
    %654 = vmatpush1.bf16.msra.mxu0 0
    %655 = vmatprep.subr.bf16.mxu0 0
    %656 = vmatpush1.bf16.msra.mxu0 0
    %657 = vmatprep.subr.bf16.mxu0 0
    %658 = vmatpush1.bf16.msra.mxu0 0
    %659 = vmatprep.subr.bf16.mxu0 0
    %660 = vmatpush1.bf16.msra.mxu0 0
    %661 = vmatprep.subr.bf16.mxu0 0
    %662 = vmatpush1.bf16.msra.mxu0 0
    %663 = vmatprep.subr.bf16.mxu0 0
    %664 = vmatpush1.bf16.msra.mxu0 0
    %665 = vmatprep.subr.bf16.mxu0 0
    %666 = vmatpush1.bf16.msra.mxu0 0
    %667 = vmatprep.subr.bf16.mxu0 0
    %668 = vmatpush1.bf16.msra.mxu0 0
    %669 = vmatprep.subr.bf16.mxu0 0
    %670 = vmatpush1.bf16.msra.mxu0 0
    %671 = vmatprep.mubr.bf16.mxu0 0
    %672 = vmatmul.mubr.bf16.gmra.mrb[0].mxu0 %v637
    %v673 = vpop.f32.mrb[0].mxu0
    %v674 = vadd.f32 0.0, %v673
    %v675 = vpop.f32.mrb[0].mxu0
    %v676 = vadd.f32 0.0, %v675
    %v677 = vpop.f32.mrb[0].mxu0
    %v678 = vpop.f32.mrb[0].mxu0
    %679 = vdwg.mxu0
    %v680 = vadd.f32 %v580, %v674
    %v681 = vadd.f32 %v581, %v676
    %v682 = vrot.slane %v184, 2
    %v684 = vrot.slane %v584, 2
    %v686 = vmax.f32 %v682, %v684
    %v687 = vpack.c.bf16 %v686, %v686
    %v688 = vld [vmem:[#allocation2 + $0x140] sm:$0xff]
    %v689 = vld [vmem:[#allocation2 + $0x148] sm:$0xff]
    %v690 = vld [vmem:[#allocation2 + $0x150] sm:$0xff]
    %v691 = vld [vmem:[#allocation2 + $0x158] sm:$0xff]
    %v692 = vld [vmem:[#allocation2 + $0x160] sm:$0xff]
    %v693 = vld [vmem:[#allocation2 + $0x168] sm:$0xff]
    %v694 = vld [vmem:[#allocation2 + $0x170] sm:$0xff]
    %v695 = vld [vmem:[#allocation2 + $0x178] sm:$0xff]
    %v704 = vunpack.c.l.b16 %v688
    %v705 = vunpack.c.h.b16 %v688
    %v706 = vunpack.c.l.b16 %v689
    %v707 = vunpack.c.h.b16 %v689
    %v708 = vunpack.c.l.b16 %v690
    %v709 = vunpack.c.h.b16 %v690
    %v710 = vunpack.c.l.b16 %v691
    %v711 = vunpack.c.h.b16 %v691
    %v712 = vunpack.c.l.b16 %v692
    %v713 = vunpack.c.h.b16 %v692
    %v714 = vunpack.c.l.b16 %v693
    %v715 = vunpack.c.h.b16 %v693
    %v716 = vunpack.c.l.b16 %v694
    %v717 = vunpack.c.h.b16 %v694
    %v718 = vunpack.c.l.b16 %v695
    %v719 = vunpack.c.h.b16 %v695
    %v720 = vpack.c.b16 %v706, %v704
    %v721 = vpack.c.b16 %v707, %v705
    %v722 = vpack.c.b16 %v710, %v708
    %v723 = vpack.c.b16 %v711, %v709
    %v724 = vpack.c.b16 %v714, %v712
    %v725 = vpack.c.b16 %v715, %v713
    %v726 = vpack.c.b16 %v718, %v716
    %v727 = vpack.c.b16 %v719, %v717
    %v737 = vsel %vm253, %v687, 0
    %739 = vmatprep.subr.bf16.mxu0 %v721
    %740 = vmatpush1.bf16.msra.mxu0 %v720
    %741 = vmatprep.subr.bf16.mxu0 %v723
    %742 = vmatpush1.bf16.msra.mxu0 %v722
    %743 = vmatprep.subr.bf16.mxu0 %v725
    %744 = vmatpush1.bf16.msra.mxu0 %v724
    %745 = vmatprep.subr.bf16.mxu0 %v727
    %746 = vmatpush1.bf16.msra.mxu0 %v726
    %747 = vmatprep.subr.bf16.mxu0 0
    %748 = vmatpush1.bf16.msra.mxu0 0
    %749 = vmatprep.subr.bf16.mxu0 0
    %750 = vmatpush1.bf16.msra.mxu0 0
    %751 = vmatprep.subr.bf16.mxu0 0
    %752 = vmatpush1.bf16.msra.mxu0 0
    %753 = vmatprep.subr.bf16.mxu0 0
    %754 = vmatpush1.bf16.msra.mxu0 0
    %755 = vmatprep.subr.bf16.mxu0 0
    %756 = vmatpush1.bf16.msra.mxu0 0
    %757 = vmatprep.subr.bf16.mxu0 0
    %758 = vmatpush1.bf16.msra.mxu0 0
    %759 = vmatprep.subr.bf16.mxu0 0
    %760 = vmatpush1.bf16.msra.mxu0 0
    %761 = vmatprep.subr.bf16.mxu0 0
    %762 = vmatpush1.bf16.msra.mxu0 0
    %763 = vmatprep.subr.bf16.mxu0 0
    %764 = vmatpush1.bf16.msra.mxu0 0
    %765 = vmatprep.subr.bf16.mxu0 0
    %766 = vmatpush1.bf16.msra.mxu0 0
    %767 = vmatprep.subr.bf16.mxu0 0
    %768 = vmatpush1.bf16.msra.mxu0 0
    %769 = vmatprep.subr.bf16.mxu0 0
    %770 = vmatpush1.bf16.msra.mxu0 0
    %771 = vmatprep.mubr.bf16.mxu0 0
    %772 = vmatmul.mubr.bf16.gmra.mrb[0].mxu0 %v737
    %v773 = vpop.f32.mrb[0].mxu0
    %v774 = vadd.f32 0.0, %v773
    %v775 = vpop.f32.mrb[0].mxu0
    %v776 = vadd.f32 0.0, %v775
    %v777 = vpop.f32.mrb[0].mxu0
    %v778 = vpop.f32.mrb[0].mxu0
    %779 = vdwg.mxu0
    %v780 = vadd.f32 %v680, %v774
    %v781 = vadd.f32 %v681, %v776
    %v782 = vrot.slane %v184, 4
    %v784 = vrot.slane %v584, 4
    %v786 = vmax.f32 %v782, %v784
    %v787 = vpack.c.bf16 %v786, %v786
    %v788 = vld [vmem:[#allocation2 + $0x180] sm:$0xff]
    %v789 = vld [vmem:[#allocation2 + $0x188] sm:$0xff]
    %v790 = vld [vmem:[#allocation2 + $0x190] sm:$0xff]
    %v791 = vld [vmem:[#allocation2 + $0x198] sm:$0xff]
    %v792 = vld [vmem:[#allocation2 + $0x1a0] sm:$0xff]
    %v793 = vld [vmem:[#allocation2 + $0x1a8] sm:$0xff]
    %v794 = vld [vmem:[#allocation2 + $0x1b0] sm:$0xff]
    %v795 = vld [vmem:[#allocation2 + $0x1b8] sm:$0xff]
    %v804 = vunpack.c.l.b16 %v788
    %v805 = vunpack.c.h.b16 %v788
    %v806 = vunpack.c.l.b16 %v789
    %v807 = vunpack.c.h.b16 %v789
    %v808 = vunpack.c.l.b16 %v790
    %v809 = vunpack.c.h.b16 %v790
    %v810 = vunpack.c.l.b16 %v791
    %v811 = vunpack.c.h.b16 %v791
    %v812 = vunpack.c.l.b16 %v792
    %v813 = vunpack.c.h.b16 %v792
    %v814 = vunpack.c.l.b16 %v793
    %v815 = vunpack.c.h.b16 %v793
    %v816 = vunpack.c.l.b16 %v794
    %v817 = vunpack.c.h.b16 %v794
    %v818 = vunpack.c.l.b16 %v795
    %v819 = vunpack.c.h.b16 %v795
    %v820 = vpack.c.b16 %v806, %v804
    %v821 = vpack.c.b16 %v807, %v805
    %v822 = vpack.c.b16 %v810, %v808
    %v823 = vpack.c.b16 %v811, %v809
    %v824 = vpack.c.b16 %v814, %v812
    %v825 = vpack.c.b16 %v815, %v813
    %v826 = vpack.c.b16 %v818, %v816
    %v827 = vpack.c.b16 %v819, %v817
    %v837 = vsel %vm253, %v787, 0
    %839 = vmatprep.subr.bf16.mxu0 %v821
    %840 = vmatpush1.bf16.msra.mxu0 %v820
    %841 = vmatprep.subr.bf16.mxu0 %v823
    %842 = vmatpush1.bf16.msra.mxu0 %v822
    %843 = vmatprep.subr.bf16.mxu0 %v825
    %844 = vmatpush1.bf16.msra.mxu0 %v824
    %845 = vmatprep.subr.bf16.mxu0 %v827
    %846 = vmatpush1.bf16.msra.mxu0 %v826
    %847 = vmatprep.subr.bf16.mxu0 0
    %848 = vmatpush1.bf16.msra.mxu0 0
    %849 = vmatprep.subr.bf16.mxu0 0
    %850 = vmatpush1.bf16.msra.mxu0 0
    %851 = vmatprep.subr.bf16.mxu0 0
    %852 = vmatpush1.bf16.msra.mxu0 0
    %853 = vmatprep.subr.bf16.mxu0 0
    %854 = vmatpush1.bf16.msra.mxu0 0
    %855 = vmatprep.subr.bf16.mxu0 0
    %856 = vmatpush1.bf16.msra.mxu0 0
    %857 = vmatprep.subr.bf16.mxu0 0
    %858 = vmatpush1.bf16.msra.mxu0 0
    %859 = vmatprep.subr.bf16.mxu0 0
    %860 = vmatpush1.bf16.msra.mxu0 0
    %861 = vmatprep.subr.bf16.mxu0 0
    %862 = vmatpush1.bf16.msra.mxu0 0
    %863 = vmatprep.subr.bf16.mxu0 0
    %864 = vmatpush1.bf16.msra.mxu0 0
    %865 = vmatprep.subr.bf16.mxu0 0
    %866 = vmatpush1.bf16.msra.mxu0 0
    %867 = vmatprep.subr.bf16.mxu0 0
    %868 = vmatpush1.bf16.msra.mxu0 0
    %869 = vmatprep.subr.bf16.mxu0 0
    %870 = vmatpush1.bf16.msra.mxu0 0
    %871 = vmatprep.mubr.bf16.mxu0 0
    %872 = vmatmul.mubr.bf16.gmra.mrb[0].mxu0 %v837
    %v873 = vpop.f32.mrb[0].mxu0
    %v874 = vadd.f32 0.0, %v873
    %v875 = vpop.f32.mrb[0].mxu0
    %v876 = vadd.f32 0.0, %v875
    %v877 = vpop.f32.mrb[0].mxu0
    %v878 = vpop.f32.mrb[0].mxu0
    %879 = vdwg.mxu0
    %v880 = vadd.f32 %v780, %v874
    %v881 = vadd.f32 %v781, %v876
    %v882 = vld [vmem:[%s0 + $0x1c] sm:$0xff]
    %v883 = vld [vmem:[%s0 + $0x24] sm:$0x3f]
    %v884 = vmul.f32 %v882, %v158
    %v885 = vmul.f32 %v883, %v174
    %v886 = vld [vmem:[%s0 + $0x2a] sm:$0xff]
    %v887 = vld [vmem:[%s0 + $0x32] sm:$0x3f]
    %v888 = vmul.f32 %v886, %v158
    %v889 = vmul.f32 %v887, %v174
    %v890 = vmax.f32 %v884, %v888
    %v891 = vmax.f32 %v885, %v889
    %893 = vrot.lane.b32.xlu0 %v890, 64
    %v894 = vpop.permute.xlu0 %893
    %v896 = vmax.f32 %v890, %v894
    %v897 = vpack.c.bf16 %v896, %v896
    %v898 = vld [vmem:[#allocation2 + $0x1c0] sm:$0xff]
    %v899 = vld [vmem:[#allocation2 + $0x1c8] sm:$0xff]
    %v900 = vld [vmem:[#allocation2 + $0x1d0] sm:$0xff]
    %v901 = vld [vmem:[#allocation2 + $0x1d8] sm:$0xff]
    %v902 = vld [vmem:[#allocation2 + $0x1e0] sm:$0xff]
    %v903 = vld [vmem:[#allocation2 + $0x1e8] sm:$0xff]
    %v904 = vld [vmem:[#allocation2 + $0x1f0] sm:$0xff]
    %v905 = vld [vmem:[#allocation2 + $0x1f8] sm:$0xff]
    %v914 = vunpack.c.l.b16 %v898
    %v915 = vunpack.c.h.b16 %v898
    %v916 = vunpack.c.l.b16 %v899
    %v917 = vunpack.c.h.b16 %v899
    %v918 = vunpack.c.l.b16 %v900
    %v919 = vunpack.c.h.b16 %v900
    %v920 = vunpack.c.l.b16 %v901
    %v921 = vunpack.c.h.b16 %v901
    %v922 = vunpack.c.l.b16 %v902
    %v923 = vunpack.c.h.b16 %v902
    %v924 = vunpack.c.l.b16 %v903
    %v925 = vunpack.c.h.b16 %v903
    %v926 = vunpack.c.l.b16 %v904
    %v927 = vunpack.c.h.b16 %v904
    %v928 = vunpack.c.l.b16 %v905
    %v929 = vunpack.c.h.b16 %v905
    %v930 = vpack.c.b16 %v916, %v914
    %v931 = vpack.c.b16 %v917, %v915
    %v932 = vpack.c.b16 %v920, %v918
    %v933 = vpack.c.b16 %v921, %v919
    %v934 = vpack.c.b16 %v924, %v922
    %v935 = vpack.c.b16 %v925, %v923
    %v936 = vpack.c.b16 %v928, %v926
    %v937 = vpack.c.b16 %v929, %v927
    %v947 = vsel %vm253, %v897, 0
    %949 = vmatprep.subr.bf16.mxu0 %v931
    %950 = vmatpush1.bf16.msra.mxu0 %v930
    %951 = vmatprep.subr.bf16.mxu0 %v933
    %952 = vmatpush1.bf16.msra.mxu0 %v932
    %953 = vmatprep.subr.bf16.mxu0 %v935
    %954 = vmatpush1.bf16.msra.mxu0 %v934
    %955 = vmatprep.subr.bf16.mxu0 %v937
    %956 = vmatpush1.bf16.msra.mxu0 %v936
    %957 = vmatprep.subr.bf16.mxu0 0
    %958 = vmatpush1.bf16.msra.mxu0 0
    %959 = vmatprep.subr.bf16.mxu0 0
    %960 = vmatpush1.bf16.msra.mxu0 0
    %961 = vmatprep.subr.bf16.mxu0 0
    %962 = vmatpush1.bf16.msra.mxu0 0
    %963 = vmatprep.subr.bf16.mxu0 0
    %964 = vmatpush1.bf16.msra.mxu0 0
    %965 = vmatprep.subr.bf16.mxu0 0
    %966 = vmatpush1.bf16.msra.mxu0 0
    %967 = vmatprep.subr.bf16.mxu0 0
    %968 = vmatpush1.bf16.msra.mxu0 0
    %969 = vmatprep.subr.bf16.mxu0 0
    %970 = vmatpush1.bf16.msra.mxu0 0
    %971 = vmatprep.subr.bf16.mxu0 0
    %972 = vmatpush1.bf16.msra.mxu0 0
    %973 = vmatprep.subr.bf16.mxu0 0
    %974 = vmatpush1.bf16.msra.mxu0 0
    %975 = vmatprep.subr.bf16.mxu0 0
    %976 = vmatpush1.bf16.msra.mxu0 0
    %977 = vmatprep.subr.bf16.mxu0 0
    %978 = vmatpush1.bf16.msra.mxu0 0
    %979 = vmatprep.subr.bf16.mxu0 0
    %980 = vmatpush1.bf16.msra.mxu0 0
    %981 = vmatprep.mubr.bf16.mxu0 0
    %982 = vmatmul.mubr.bf16.gmra.mrb[0].mxu0 %v947
    %v983 = vpop.f32.mrb[0].mxu0
    %v984 = vadd.f32 0.0, %v983
    %v985 = vpop.f32.mrb[0].mxu0
    %v986 = vadd.f32 0.0, %v985
    %v987 = vpop.f32.mrb[0].mxu0
    %v988 = vpop.f32.mrb[0].mxu0
    %989 = vdwg.mxu0
    %v990 = vadd.f32 %v880, %v984
    %v991 = vadd.f32 %v881, %v986
    %v992 = vrot.slane %v890, 2
    %v994 = vrot.slane %v894, 2
    %v996 = vmax.f32 %v992, %v994
    %v997 = vpack.c.bf16 %v996, %v996
    %v998 = vld [vmem:[#allocation2 + $0x200] sm:$0xff]
    %v999 = vld [vmem:[#allocation2 + $0x208] sm:$0xff]
    %v1000 = vld [vmem:[#allocation2 + $0x210] sm:$0xff]
    %v1001 = vld [vmem:[#allocation2 + $0x218] sm:$0xff]
    %v1002 = vld [vmem:[#allocation2 + $0x220] sm:$0xff]
    %v1003 = vld [vmem:[#allocation2 + $0x228] sm:$0xff]
    %v1004 = vld [vmem:[#allocation2 + $0x230] sm:$0xff]
    %v1005 = vld [vmem:[#allocation2 + $0x238] sm:$0xff]
    %v1014 = vunpack.c.l.b16 %v998
    %v1015 = vunpack.c.h.b16 %v998
    %v1016 = vunpack.c.l.b16 %v999
    %v1017 = vunpack.c.h.b16 %v999
    %v1018 = vunpack.c.l.b16 %v1000
    %v1019 = vunpack.c.h.b16 %v1000
    %v1020 = vunpack.c.l.b16 %v1001
    %v1021 = vunpack.c.h.b16 %v1001
    %v1022 = vunpack.c.l.b16 %v1002
    %v1023 = vunpack.c.h.b16 %v1002
    %v1024 = vunpack.c.l.b16 %v1003
    %v1025 = vunpack.c.h.b16 %v1003
    %v1026 = vunpack.c.l.b16 %v1004
    %v1027 = vunpack.c.h.b16 %v1004
    %v1028 = vunpack.c.l.b16 %v1005
    %v1029 = vunpack.c.h.b16 %v1005
    %v1030 = vpack.c.b16 %v1016, %v1014
    %v1031 = vpack.c.b16 %v1017, %v1015
    %v1032 = vpack.c.b16 %v1020, %v1018
    %v1033 = vpack.c.b16 %v1021, %v1019
    %v1034 = vpack.c.b16 %v1024, %v1022
    %v1035 = vpack.c.b16 %v1025, %v1023
    %v1036 = vpack.c.b16 %v1028, %v1026
    %v1037 = vpack.c.b16 %v1029, %v1027
    %v1047 = vsel %vm253, %v997, 0
    %1049 = vmatprep.subr.bf16.mxu0 %v1031
    %1050 = vmatpush1.bf16.msra.mxu0 %v1030
    %1051 = vmatprep.subr.bf16.mxu0 %v1033
    %1052 = vmatpush1.bf16.msra.mxu0 %v1032
    %1053 = vmatprep.subr.bf16.mxu0 %v1035
    %1054 = vmatpush1.bf16.msra.mxu0 %v1034
    %1055 = vmatprep.subr.bf16.mxu0 %v1037
    %1056 = vmatpush1.bf16.msra.mxu0 %v1036
    %1057 = vmatprep.subr.bf16.mxu0 0
    %1058 = vmatpush1.bf16.msra.mxu0 0
    %1059 = vmatprep.subr.bf16.mxu0 0
    %1060 = vmatpush1.bf16.msra.mxu0 0
    %1061 = vmatprep.subr.bf16.mxu0 0
    %1062 = vmatpush1.bf16.msra.mxu0 0
    %1063 = vmatprep.subr.bf16.mxu0 0
    %1064 = vmatpush1.bf16.msra.mxu0 0
    %1065 = vmatprep.subr.bf16.mxu0 0
    %1066 = vmatpush1.bf16.msra.mxu0 0
    %1067 = vmatprep.subr.bf16.mxu0 0
    %1068 = vmatpush1.bf16.msra.mxu0 0
    %1069 = vmatprep.subr.bf16.mxu0 0
    %1070 = vmatpush1.bf16.msra.mxu0 0
    %1071 = vmatprep.subr.bf16.mxu0 0
    %1072 = vmatpush1.bf16.msra.mxu0 0
    %1073 = vmatprep.subr.bf16.mxu0 0
    %1074 = vmatpush1.bf16.msra.mxu0 0
    %1075 = vmatprep.subr.bf16.mxu0 0
    %1076 = vmatpush1.bf16.msra.mxu0 0
    %1077 = vmatprep.subr.bf16.mxu0 0
    %1078 = vmatpush1.bf16.msra.mxu0 0
    %1079 = vmatprep.subr.bf16.mxu0 0
    %1080 = vmatpush1.bf16.msra.mxu0 0
    %1081 = vmatprep.mubr.bf16.mxu0 0
    %1082 = vmatmul.mubr.bf16.gmra.mrb[0].mxu0 %v1047
    %v1083 = vpop.f32.mrb[0].mxu0
    %v1084 = vadd.f32 0.0, %v1083
    %v1085 = vpop.f32.mrb[0].mxu0
    %v1086 = vadd.f32 0.0, %v1085
    %v1087 = vpop.f32.mrb[0].mxu0
    %v1088 = vpop.f32.mrb[0].mxu0
    %1089 = vdwg.mxu0
    %v1090 = vadd.f32 %v990, %v1084
    %v1091 = vadd.f32 %v991, %v1086
    %v1092 = vrot.slane %v890, 4
    %v1094 = vrot.slane %v894, 4
    %v1096 = vmax.f32 %v1092, %v1094
    %v1097 = vpack.c.bf16 %v1096, %v1096
    %v1098 = vld [vmem:[#allocation2 + $0x240] sm:$0xff]
    %v1099 = vld [vmem:[#allocation2 + $0x248] sm:$0xff]
    %v1100 = vld [vmem:[#allocation2 + $0x250] sm:$0xff]
    %v1101 = vld [vmem:[#allocation2 + $0x258] sm:$0xff]
    %v1102 = vld [vmem:[#allocation2 + $0x260] sm:$0xff]
    %v1103 = vld [vmem:[#allocation2 + $0x268] sm:$0xff]
    %v1104 = vld [vmem:[#allocation2 + $0x270] sm:$0xff]
    %v1105 = vld [vmem:[#allocation2 + $0x278] sm:$0xff]
    %v1114 = vunpack.c.l.b16 %v1098
    %v1115 = vunpack.c.h.b16 %v1098
    %v1116 = vunpack.c.l.b16 %v1099
    %v1117 = vunpack.c.h.b16 %v1099
    %v1118 = vunpack.c.l.b16 %v1100
    %v1119 = vunpack.c.h.b16 %v1100
    %v1120 = vunpack.c.l.b16 %v1101
    %v1121 = vunpack.c.h.b16 %v1101
    %v1122 = vunpack.c.l.b16 %v1102
    %v1123 = vunpack.c.h.b16 %v1102
    %v1124 = vunpack.c.l.b16 %v1103
    %v1125 = vunpack.c.h.b16 %v1103
    %v1126 = vunpack.c.l.b16 %v1104
    %v1127 = vunpack.c.h.b16 %v1104
    %v1128 = vunpack.c.l.b16 %v1105
    %v1129 = vunpack.c.h.b16 %v1105
    %v1130 = vpack.c.b16 %v1116, %v1114
    %v1131 = vpack.c.b16 %v1117, %v1115
    %v1132 = vpack.c.b16 %v1120, %v1118
    %v1133 = vpack.c.b16 %v1121, %v1119
    %v1134 = vpack.c.b16 %v1124, %v1122
    %v1135 = vpack.c.b16 %v1125, %v1123
    %v1136 = vpack.c.b16 %v1128, %v1126
    %v1137 = vpack.c.b16 %v1129, %v1127
    %v1147 = vsel %vm253, %v1097, 0
    %1149 = vmatprep.subr.bf16.mxu0 %v1131
    %1150 = vmatpush1.bf16.msra.mxu0 %v1130
    %1151 = vmatprep.subr.bf16.mxu0 %v1133
    %1152 = vmatpush1.bf16.msra.mxu0 %v1132
    %1153 = vmatprep.subr.bf16.mxu0 %v1135
    %1154 = vmatpush1.bf16.msra.mxu0 %v1134
    %1155 = vmatprep.subr.bf16.mxu0 %v1137
    %1156 = vmatpush1.bf16.msra.mxu0 %v1136
    %1157 = vmatprep.subr.bf16.mxu0 0
    %1158 = vmatpush1.bf16.msra.mxu0 0
    %1159 = vmatprep.subr.bf16.mxu0 0
    %1160 = vmatpush1.bf16.msra.mxu0 0
    %1161 = vmatprep.subr.bf16.mxu0 0
    %1162 = vmatpush1.bf16.msra.mxu0 0
    %1163 = vmatprep.subr.bf16.mxu0 0
    %1164 = vmatpush1.bf16.msra.mxu0 0
    %1165 = vmatprep.subr.bf16.mxu0 0
    %1166 = vmatpush1.bf16.msra.mxu0 0
    %1167 = vmatprep.subr.bf16.mxu0 0
    %1168 = vmatpush1.bf16.msra.mxu0 0
    %1169 = vmatprep.subr.bf16.mxu0 0
    %1170 = vmatpush1.bf16.msra.mxu0 0
    %1171 = vmatprep.subr.bf16.mxu0 0
    %1172 = vmatpush1.bf16.msra.mxu0 0
    %1173 = vmatprep.subr.bf16.mxu0 0
    %1174 = vmatpush1.bf16.msra.mxu0 0
    %1175 = vmatprep.subr.bf16.mxu0 0
    %1176 = vmatpush1.bf16.msra.mxu0 0
    %1177 = vmatprep.subr.bf16.mxu0 0
    %1178 = vmatpush1.bf16.msra.mxu0 0
    %1179 = vmatprep.subr.bf16.mxu0 0
    %1180 = vmatpush1.bf16.msra.mxu0 0
    %1181 = vmatprep.mubr.bf16.mxu0 0
    %1182 = vmatmul.mubr.bf16.gmra.mrb[0].mxu0 %v1147
    %v1183 = vpop.f32.mrb[0].mxu0
    %v1184 = vadd.f32 0.0, %v1183
    %v1185 = vpop.f32.mrb[0].mxu0
    %v1186 = vadd.f32 0.0, %v1185
    %v1187 = vpop.f32.mrb[0].mxu0
    %v1188 = vpop.f32.mrb[0].mxu0
    %1189 = vdwg.mxu0
    %v1190 = vadd.f32 %v1090, %v1184
    %v1191 = vadd.f32 %v1091, %v1186
    %v1192 = vrot.slane %v890, 6
    %v1194 = vrot.slane %v894, 6
    %v1196 = vmax.f32 %v1192, %v1194
    %v1197 = vpack.c.bf16 %v1196, %v1196
    %v1198 = vld [vmem:[#allocation2 + $0x280] sm:$0xff]
    %v1199 = vld [vmem:[#allocation2 + $0x288] sm:$0xff]
    %v1200 = vld [vmem:[#allocation2 + $0x290] sm:$0xff]
    %v1201 = vld [vmem:[#allocation2 + $0x298] sm:$0xff]
    %v1202 = vld [vmem:[#allocation2 + $0x2a0] sm:$0xff]
    %v1203 = vld [vmem:[#allocation2 + $0x2a8] sm:$0xff]
    %v1204 = vld [vmem:[#allocation2 + $0x2b0] sm:$0xff]
    %v1205 = vld [vmem:[#allocation2 + $0x2b8] sm:$0xff]
    %v1214 = vunpack.c.l.b16 %v1198
    %v1215 = vunpack.c.h.b16 %v1198
    %v1216 = vunpack.c.l.b16 %v1199
    %v1217 = vunpack.c.h.b16 %v1199
    %v1218 = vunpack.c.l.b16 %v1200
    %v1219 = vunpack.c.h.b16 %v1200
    %v1220 = vunpack.c.l.b16 %v1201
    %v1221 = vunpack.c.h.b16 %v1201
    %v1222 = vunpack.c.l.b16 %v1202
    %v1223 = vunpack.c.h.b16 %v1202
    %v1224 = vunpack.c.l.b16 %v1203
    %v1225 = vunpack.c.h.b16 %v1203
    %v1226 = vunpack.c.l.b16 %v1204
    %v1227 = vunpack.c.h.b16 %v1204
    %v1228 = vunpack.c.l.b16 %v1205
    %v1229 = vunpack.c.h.b16 %v1205
    %v1230 = vpack.c.b16 %v1216, %v1214
    %v1231 = vpack.c.b16 %v1217, %v1215
    %v1232 = vpack.c.b16 %v1220, %v1218
    %v1233 = vpack.c.b16 %v1221, %v1219
    %v1234 = vpack.c.b16 %v1224, %v1222
    %v1235 = vpack.c.b16 %v1225, %v1223
    %v1236 = vpack.c.b16 %v1228, %v1226
    %v1237 = vpack.c.b16 %v1229, %v1227
    %v1247 = vsel %vm253, %v1197, 0
    %1249 = vmatprep.subr.bf16.mxu0 %v1231
    %1250 = vmatpush1.bf16.msra.mxu0 %v1230
    %1251 = vmatprep.subr.bf16.mxu0 %v1233
    %1252 = vmatpush1.bf16.msra.mxu0 %v1232
    %1253 = vmatprep.subr.bf16.mxu0 %v1235
    %1254 = vmatpush1.bf16.msra.mxu0 %v1234
    %1255 = vmatprep.subr.bf16.mxu0 %v1237
    %1256 = vmatpush1.bf16.msra.mxu0 %v1236
    %1257 = vmatprep.subr.bf16.mxu0 0
    %1258 = vmatpush1.bf16.msra.mxu0 0
    %1259 = vmatprep.subr.bf16.mxu0 0
    %1260 = vmatpush1.bf16.msra.mxu0 0
    %1261 = vmatprep.subr.bf16.mxu0 0
    %1262 = vmatpush1.bf16.msra.mxu0 0
    %1263 = vmatprep.subr.bf16.mxu0 0
    %1264 = vmatpush1.bf16.msra.mxu0 0
    %1265 = vmatprep.subr.bf16.mxu0 0
    %1266 = vmatpush1.bf16.msra.mxu0 0
    %1267 = vmatprep.subr.bf16.mxu0 0
    %1268 = vmatpush1.bf16.msra.mxu0 0
    %1269 = vmatprep.subr.bf16.mxu0 0
    %1270 = vmatpush1.bf16.msra.mxu0 0
    %1271 = vmatprep.subr.bf16.mxu0 0
    %1272 = vmatpush1.bf16.msra.mxu0 0
    %1273 = vmatprep.subr.bf16.mxu0 0
    %1274 = vmatpush1.bf16.msra.mxu0 0
    %1275 = vmatprep.subr.bf16.mxu0 0
    %1276 = vmatpush1.bf16.msra.mxu0 0
    %1277 = vmatprep.subr.bf16.mxu0 0
    %1278 = vmatpush1.bf16.msra.mxu0 0
    %1279 = vmatprep.subr.bf16.mxu0 0
    %1280 = vmatpush1.bf16.msra.mxu0 0
    %1281 = vmatprep.mubr.bf16.mxu0 0
    %1282 = vmatmul.mubr.bf16.gmra.mrb[0].mxu0 %v1247
    %v1283 = vpop.f32.mrb[0].mxu0
    %v1284 = vadd.f32 0.0, %v1283
    %v1285 = vpop.f32.mrb[0].mxu0
    %v1286 = vadd.f32 0.0, %v1285
    %v1287 = vpop.f32.mrb[0].mxu0
    %v1288 = vpop.f32.mrb[0].mxu0
    %1289 = vdwg.mxu0
    %v1290 = vadd.f32 %v1190, %v1284
    %v1291 = vadd.f32 %v1191, %v1286
    %1293 = vrot.lane.b32.xlu0 %v891, 64
    %v1294 = vpop.permute.xlu0 %1293
    %v1296 = vmax.f32 %v891, %v1294
    %v1297 = vpack.c.bf16 %v1296, %v1296
    %v1298 = vld [vmem:[#allocation2 + $0x2c0] sm:$0xff]
    %v1299 = vld [vmem:[#allocation2 + $0x2c8] sm:$0xff]
    %v1300 = vld [vmem:[#allocation2 + $0x2d0] sm:$0xff]
    %v1301 = vld [vmem:[#allocation2 + $0x2d8] sm:$0xff]
    %v1302 = vld [vmem:[#allocation2 + $0x2e0] sm:$0xff]
    %v1303 = vld [vmem:[#allocation2 + $0x2e8] sm:$0xff]
    %v1304 = vld [vmem:[#allocation2 + $0x2f0] sm:$0xff]
    %v1305 = vld [vmem:[#allocation2 + $0x2f8] sm:$0xff]
    %v1314 = vunpack.c.l.b16 %v1298
    %v1315 = vunpack.c.h.b16 %v1298
    %v1316 = vunpack.c.l.b16 %v1299
    %v1317 = vunpack.c.h.b16 %v1299
    %v1318 = vunpack.c.l.b16 %v1300
    %v1319 = vunpack.c.h.b16 %v1300
    %v1320 = vunpack.c.l.b16 %v1301
    %v1321 = vunpack.c.h.b16 %v1301
    %v1322 = vunpack.c.l.b16 %v1302
    %v1323 = vunpack.c.h.b16 %v1302
    %v1324 = vunpack.c.l.b16 %v1303
    %v1325 = vunpack.c.h.b16 %v1303
    %v1326 = vunpack.c.l.b16 %v1304
    %v1327 = vunpack.c.h.b16 %v1304
    %v1328 = vunpack.c.l.b16 %v1305
    %v1329 = vunpack.c.h.b16 %v1305
    %v1330 = vpack.c.b16 %v1316, %v1314
    %v1331 = vpack.c.b16 %v1317, %v1315
    %v1332 = vpack.c.b16 %v1320, %v1318
    %v1333 = vpack.c.b16 %v1321, %v1319
    %v1334 = vpack.c.b16 %v1324, %v1322
    %v1335 = vpack.c.b16 %v1325, %v1323
    %v1336 = vpack.c.b16 %v1328, %v1326
    %v1337 = vpack.c.b16 %v1329, %v1327
    %v1347 = vsel %vm253, %v1297, 0
    %1349 = vmatprep.subr.bf16.mxu0 %v1331
    %1350 = vmatpush1.bf16.msra.mxu0 %v1330
    %1351 = vmatprep.subr.bf16.mxu0 %v1333
    %1352 = vmatpush1.bf16.msra.mxu0 %v1332
    %1353 = vmatprep.subr.bf16.mxu0 %v1335
    %1354 = vmatpush1.bf16.msra.mxu0 %v1334
    %1355 = vmatprep.subr.bf16.mxu0 %v1337
    %1356 = vmatpush1.bf16.msra.mxu0 %v1336
    %1357 = vmatprep.subr.bf16.mxu0 0
    %1358 = vmatpush1.bf16.msra.mxu0 0
    %1359 = vmatprep.subr.bf16.mxu0 0
    %1360 = vmatpush1.bf16.msra.mxu0 0
    %1361 = vmatprep.subr.bf16.mxu0 0
    %1362 = vmatpush1.bf16.msra.mxu0 0
    %1363 = vmatprep.subr.bf16.mxu0 0
    %1364 = vmatpush1.bf16.msra.mxu0 0
    %1365 = vmatprep.subr.bf16.mxu0 0
    %1366 = vmatpush1.bf16.msra.mxu0 0
    %1367 = vmatprep.subr.bf16.mxu0 0
    %1368 = vmatpush1.bf16.msra.mxu0 0
    %1369 = vmatprep.subr.bf16.mxu0 0
    %1370 = vmatpush1.bf16.msra.mxu0 0
    %1371 = vmatprep.subr.bf16.mxu0 0
    %1372 = vmatpush1.bf16.msra.mxu0 0
    %1373 = vmatprep.subr.bf16.mxu0 0
    %1374 = vmatpush1.bf16.msra.mxu0 0
    %1375 = vmatprep.subr.bf16.mxu0 0
    %1376 = vmatpush1.bf16.msra.mxu0 0
    %1377 = vmatprep.subr.bf16.mxu0 0
    %1378 = vmatpush1.bf16.msra.mxu0 0
    %1379 = vmatprep.subr.bf16.mxu0 0
    %1380 = vmatpush1.bf16.msra.mxu0 0
    %1381 = vmatprep.mubr.bf16.mxu0 0
    %1382 = vmatmul.mubr.bf16.gmra.mrb[0].mxu0 %v1347
    %v1383 = vpop.f32.mrb[0].mxu0
    %v1384 = vadd.f32 0.0, %v1383
    %v1385 = vpop.f32.mrb[0].mxu0
    %v1386 = vadd.f32 0.0, %v1385
    %v1387 = vpop.f32.mrb[0].mxu0
    %v1388 = vpop.f32.mrb[0].mxu0
    %1389 = vdwg.mxu0
    %v1390 = vadd.f32 %v1290, %v1384
    %v1391 = vadd.f32 %v1291, %v1386
    %v1392 = vrot.slane %v891, 2
    %v1394 = vrot.slane %v1294, 2
    %v1396 = vmax.f32 %v1392, %v1394
    %v1397 = vpack.c.bf16 %v1396, %v1396
    %v1398 = vld [vmem:[#allocation2 + $0x300] sm:$0xff]
    %v1399 = vld [vmem:[#allocation2 + $0x308] sm:$0xff]
    %v1400 = vld [vmem:[#allocation2 + $0x310] sm:$0xff]
    %v1401 = vld [vmem:[#allocation2 + $0x318] sm:$0xff]
    %v1402 = vld [vmem:[#allocation2 + $0x320] sm:$0xff]
    %v1403 = vld [vmem:[#allocation2 + $0x328] sm:$0xff]
    %v1404 = vld [vmem:[#allocation2 + $0x330] sm:$0xff]
    %v1405 = vld [vmem:[#allocation2 + $0x338] sm:$0xff]
    %v1414 = vunpack.c.l.b16 %v1398
    %v1415 = vunpack.c.h.b16 %v1398
    %v1416 = vunpack.c.l.b16 %v1399
    %v1417 = vunpack.c.h.b16 %v1399
    %v1418 = vunpack.c.l.b16 %v1400
    %v1419 = vunpack.c.h.b16 %v1400
    %v1420 = vunpack.c.l.b16 %v1401
    %v1421 = vunpack.c.h.b16 %v1401
    %v1422 = vunpack.c.l.b16 %v1402
    %v1423 = vunpack.c.h.b16 %v1402
    %v1424 = vunpack.c.l.b16 %v1403
    %v1425 = vunpack.c.h.b16 %v1403
    %v1426 = vunpack.c.l.b16 %v1404
    %v1427 = vunpack.c.h.b16 %v1404
    %v1428 = vunpack.c.l.b16 %v1405
    %v1429 = vunpack.c.h.b16 %v1405
    %v1430 = vpack.c.b16 %v1416, %v1414
    %v1431 = vpack.c.b16 %v1417, %v1415
    %v1432 = vpack.c.b16 %v1420, %v1418
    %v1433 = vpack.c.b16 %v1421, %v1419
    %v1434 = vpack.c.b16 %v1424, %v1422
    %v1435 = vpack.c.b16 %v1425, %v1423
    %v1436 = vpack.c.b16 %v1428, %v1426
    %v1437 = vpack.c.b16 %v1429, %v1427
    %v1447 = vsel %vm253, %v1397, 0
    %1449 = vmatprep.subr.bf16.mxu0 %v1431
    %1450 = vmatpush1.bf16.msra.mxu0 %v1430
    %1451 = vmatprep.subr.bf16.mxu0 %v1433
    %1452 = vmatpush1.bf16.msra.mxu0 %v1432
    %1453 = vmatprep.subr.bf16.mxu0 %v1435
    %1454 = vmatpush1.bf16.msra.mxu0 %v1434
    %1455 = vmatprep.subr.bf16.mxu0 %v1437
    %1456 = vmatpush1.bf16.msra.mxu0 %v1436
    %1457 = vmatprep.subr.bf16.mxu0 0
    %1458 = vmatpush1.bf16.msra.mxu0 0
    %1459 = vmatprep.subr.bf16.mxu0 0
    %1460 = vmatpush1.bf16.msra.mxu0 0
    %1461 = vmatprep.subr.bf16.mxu0 0
    %1462 = vmatpush1.bf16.msra.mxu0 0
    %1463 = vmatprep.subr.bf16.mxu0 0
    %1464 = vmatpush1.bf16.msra.mxu0 0
    %1465 = vmatprep.subr.bf16.mxu0 0
    %1466 = vmatpush1.bf16.msra.mxu0 0
    %1467 = vmatprep.subr.bf16.mxu0 0
    %1468 = vmatpush1.bf16.msra.mxu0 0
    %1469 = vmatprep.subr.bf16.mxu0 0
    %1470 = vmatpush1.bf16.msra.mxu0 0
    %1471 = vmatprep.subr.bf16.mxu0 0
    %1472 = vmatpush1.bf16.msra.mxu0 0
    %1473 = vmatprep.subr.bf16.mxu0 0
    %1474 = vmatpush1.bf16.msra.mxu0 0
    %1475 = vmatprep.subr.bf16.mxu0 0
    %1476 = vmatpush1.bf16.msra.mxu0 0
    %1477 = vmatprep.subr.bf16.mxu0 0
    %1478 = vmatpush1.bf16.msra.mxu0 0
    %1479 = vmatprep.subr.bf16.mxu0 0
    %1480 = vmatpush1.bf16.msra.mxu0 0
    %1481 = vmatprep.mubr.bf16.mxu0 0
    %1482 = vmatmul.mubr.bf16.gmra.mrb[0].mxu0 %v1447
    %v1483 = vpop.f32.mrb[0].mxu0
    %v1484 = vadd.f32 0.0, %v1483
    %v1485 = vpop.f32.mrb[0].mxu0
    %v1486 = vadd.f32 0.0, %v1485
    %v1487 = vpop.f32.mrb[0].mxu0
    %v1488 = vpop.f32.mrb[0].mxu0
    %1489 = vdwg.mxu0
    %v1490 = vadd.f32 %v1390, %v1484
    %v1491 = vadd.f32 %v1391, %v1486
    %v1492 = vrot.slane %v891, 4
    %v1494 = vrot.slane %v1294, 4
    %v1496 = vmax.f32 %v1492, %v1494
    %v1497 = vpack.c.bf16 %v1496, %v1496
    %v1498 = vld [vmem:[#allocation2 + $0x340] sm:$0xff]
    %v1499 = vld [vmem:[#allocation2 + $0x348] sm:$0xff]
    %v1500 = vld [vmem:[#allocation2 + $0x350] sm:$0xff]
    %v1501 = vld [vmem:[#allocation2 + $0x358] sm:$0xff]
    %v1502 = vld [vmem:[#allocation2 + $0x360] sm:$0xff]
    %v1503 = vld [vmem:[#allocation2 + $0x368] sm:$0xff]
    %v1504 = vld [vmem:[#allocation2 + $0x370] sm:$0xff]
    %v1505 = vld [vmem:[#allocation2 + $0x378] sm:$0xff]
    %v1514 = vunpack.c.l.b16 %v1498
    %v1515 = vunpack.c.h.b16 %v1498
    %v1516 = vunpack.c.l.b16 %v1499
    %v1517 = vunpack.c.h.b16 %v1499
    %v1518 = vunpack.c.l.b16 %v1500
    %v1519 = vunpack.c.h.b16 %v1500
    %v1520 = vunpack.c.l.b16 %v1501
    %v1521 = vunpack.c.h.b16 %v1501
    %v1522 = vunpack.c.l.b16 %v1502
    %v1523 = vunpack.c.h.b16 %v1502
    %v1524 = vunpack.c.l.b16 %v1503
    %v1525 = vunpack.c.h.b16 %v1503
    %v1526 = vunpack.c.l.b16 %v1504
    %v1527 = vunpack.c.h.b16 %v1504
    %v1528 = vunpack.c.l.b16 %v1505
    %v1529 = vunpack.c.h.b16 %v1505
    %v1530 = vpack.c.b16 %v1516, %v1514
    %v1531 = vpack.c.b16 %v1517, %v1515
    %v1532 = vpack.c.b16 %v1520, %v1518
    %v1533 = vpack.c.b16 %v1521, %v1519
    %v1534 = vpack.c.b16 %v1524, %v1522
    %v1535 = vpack.c.b16 %v1525, %v1523
    %v1536 = vpack.c.b16 %v1528, %v1526
    %v1537 = vpack.c.b16 %v1529, %v1527
    %v1547 = vsel %vm253, %v1497, 0
    %1549 = vmatprep.subr.bf16.mxu0 %v1531
    %1550 = vmatpush1.bf16.msra.mxu0 %v1530
    %1551 = vmatprep.subr.bf16.mxu0 %v1533
    %1552 = vmatpush1.bf16.msra.mxu0 %v1532
    %1553 = vmatprep.subr.bf16.mxu0 %v1535
    %1554 = vmatpush1.bf16.msra.mxu0 %v1534
    %1555 = vmatprep.subr.bf16.mxu0 %v1537
    %1556 = vmatpush1.bf16.msra.mxu0 %v1536
    %1557 = vmatprep.subr.bf16.mxu0 0
    %1558 = vmatpush1.bf16.msra.mxu0 0
    %1559 = vmatprep.subr.bf16.mxu0 0
    %1560 = vmatpush1.bf16.msra.mxu0 0
    %1561 = vmatprep.subr.bf16.mxu0 0
    %1562 = vmatpush1.bf16.msra.mxu0 0
    %1563 = vmatprep.subr.bf16.mxu0 0
    %1564 = vmatpush1.bf16.msra.mxu0 0
    %1565 = vmatprep.subr.bf16.mxu0 0
    %1566 = vmatpush1.bf16.msra.mxu0 0
    %1567 = vmatprep.subr.bf16.mxu0 0
    %1568 = vmatpush1.bf16.msra.mxu0 0
    %1569 = vmatprep.subr.bf16.mxu0 0
    %1570 = vmatpush1.bf16.msra.mxu0 0
    %1571 = vmatprep.subr.bf16.mxu0 0
    %1572 = vmatpush1.bf16.msra.mxu0 0
    %1573 = vmatprep.subr.bf16.mxu0 0
    %1574 = vmatpush1.bf16.msra.mxu0 0
    %1575 = vmatprep.subr.bf16.mxu0 0
    %1576 = vmatpush1.bf16.msra.mxu0 0
    %1577 = vmatprep.subr.bf16.mxu0 0
    %1578 = vmatpush1.bf16.msra.mxu0 0
    %1579 = vmatprep.subr.bf16.mxu0 0
    %1580 = vmatpush1.bf16.msra.mxu0 0
    %1581 = vmatprep.mubr.bf16.mxu0 0
    %1582 = vmatmul.mubr.bf16.gmra.mrb[0].mxu0 %v1547
    %v1583 = vpop.f32.mrb[0].mxu0
    %v1584 = vadd.f32 0.0, %v1583
    %v1585 = vpop.f32.mrb[0].mxu0
    %v1586 = vadd.f32 0.0, %v1585
    %v1587 = vpop.f32.mrb[0].mxu0
    %v1588 = vpop.f32.mrb[0].mxu0
    %1589 = vdwg.mxu0
    %v1590 = vadd.f32 %v1490, %v1584
    %v1591 = vadd.f32 %v1491, %v1586
    %v1592 = vld [vmem:[%s0 + $0x38] sm:$0xff]
    %v1593 = vld [vmem:[%s0 + $0x40] sm:$0x3f]
    %v1594 = vmul.f32 %v1592, %v158
    %v1595 = vmul.f32 %v1593, %v174
    %v1596 = vld [vmem:[%s0 + $0x46] sm:$0xff]
    %v1597 = vld [vmem:[%s0 + $0x4e] sm:$0x3f]
    %v1598 = vmul.f32 %v1596, %v158
    %v1599 = vmul.f32 %v1597, %v174
    %v1600 = vmax.f32 %v1594, %v1598
    %v1601 = vmax.f32 %v1595, %v1599
    %1603 = vrot.lane.b32.xlu0 %v1600, 64
    %v1604 = vpop.permute.xlu0 %1603
    %v1606 = vmax.f32 %v1600, %v1604
    %v1607 = vpack.c.bf16 %v1606, %v1606
    %v1608 = vld [vmem:[#allocation2 + $0x380] sm:$0xff]
    %v1609 = vld [vmem:[#allocation2 + $0x388] sm:$0xff]
    %v1610 = vld [vmem:[#allocation2 + $0x390] sm:$0xff]
    %v1611 = vld [vmem:[#allocation2 + $0x398] sm:$0xff]
    %v1612 = vld [vmem:[#allocation2 + $0x3a0] sm:$0xff]
    %v1613 = vld [vmem:[#allocation2 + $0x3a8] sm:$0xff]
    %v1614 = vld [vmem:[#allocation2 + $0x3b0] sm:$0xff]
    %v1615 = vld [vmem:[#allocation2 + $0x3b8] sm:$0xff]
    %v1624 = vunpack.c.l.b16 %v1608
    %v1625 = vunpack.c.h.b16 %v1608
    %v1626 = vunpack.c.l.b16 %v1609
    %v1627 = vunpack.c.h.b16 %v1609
    %v1628 = vunpack.c.l.b16 %v1610
    %v1629 = vunpack.c.h.b16 %v1610
    %v1630 = vunpack.c.l.b16 %v1611
    %v1631 = vunpack.c.h.b16 %v1611
    %v1632 = vunpack.c.l.b16 %v1612
    %v1633 = vunpack.c.h.b16 %v1612
    %v1634 = vunpack.c.l.b16 %v1613
    %v1635 = vunpack.c.h.b16 %v1613
    %v1636 = vunpack.c.l.b16 %v1614
    %v1637 = vunpack.c.h.b16 %v1614
    %v1638 = vunpack.c.l.b16 %v1615
    %v1639 = vunpack.c.h.b16 %v1615
    %v1640 = vpack.c.b16 %v1626, %v1624
    %v1641 = vpack.c.b16 %v1627, %v1625
    %v1642 = vpack.c.b16 %v1630, %v1628
    %v1643 = vpack.c.b16 %v1631, %v1629
    %v1644 = vpack.c.b16 %v1634, %v1632
    %v1645 = vpack.c.b16 %v1635, %v1633
    %v1646 = vpack.c.b16 %v1638, %v1636
    %v1647 = vpack.c.b16 %v1639, %v1637
    %v1657 = vsel %vm253, %v1607, 0
    %1659 = vmatprep.subr.bf16.mxu0 %v1641
    %1660 = vmatpush1.bf16.msra.mxu0 %v1640
    %1661 = vmatprep.subr.bf16.mxu0 %v1643
    %1662 = vmatpush1.bf16.msra.mxu0 %v1642
    %1663 = vmatprep.subr.bf16.mxu0 %v1645
    %1664 = vmatpush1.bf16.msra.mxu0 %v1644
    %1665 = vmatprep.subr.bf16.mxu0 %v1647
    %1666 = vmatpush1.bf16.msra.mxu0 %v1646
    %1667 = vmatprep.subr.bf16.mxu0 0
    %1668 = vmatpush1.bf16.msra.mxu0 0
    %1669 = vmatprep.subr.bf16.mxu0 0
    %1670 = vmatpush1.bf16.msra.mxu0 0
    %1671 = vmatprep.subr.bf16.mxu0 0
    %1672 = vmatpush1.bf16.msra.mxu0 0
    %1673 = vmatprep.subr.bf16.mxu0 0
    %1674 = vmatpush1.bf16.msra.mxu0 0
    %1675 = vmatprep.subr.bf16.mxu0 0
    %1676 = vmatpush1.bf16.msra.mxu0 0
    %1677 = vmatprep.subr.bf16.mxu0 0
    %1678 = vmatpush1.bf16.msra.mxu0 0
    %1679 = vmatprep.subr.bf16.mxu0 0
    %1680 = vmatpush1.bf16.msra.mxu0 0
    %1681 = vmatprep.subr.bf16.mxu0 0
    %1682 = vmatpush1.bf16.msra.mxu0 0
    %1683 = vmatprep.subr.bf16.mxu0 0
    %1684 = vmatpush1.bf16.msra.mxu0 0
    %1685 = vmatprep.subr.bf16.mxu0 0
    %1686 = vmatpush1.bf16.msra.mxu0 0
    %1687 = vmatprep.subr.bf16.mxu0 0
    %1688 = vmatpush1.bf16.msra.mxu0 0
    %1689 = vmatprep.subr.bf16.mxu0 0
    %1690 = vmatpush1.bf16.msra.mxu0 0
    %1691 = vmatprep.mubr.bf16.mxu0 0
    %1692 = vmatmul.mubr.bf16.gmra.mrb[0].mxu0 %v1657
    %v1693 = vpop.f32.mrb[0].mxu0
    %v1694 = vadd.f32 0.0, %v1693
    %v1695 = vpop.f32.mrb[0].mxu0
    %v1696 = vadd.f32 0.0, %v1695
    %v1697 = vpop.f32.mrb[0].mxu0
    %v1698 = vpop.f32.mrb[0].mxu0
    %1699 = vdwg.mxu0
    %v1700 = vadd.f32 %v1590, %v1694
    %v1701 = vadd.f32 %v1591, %v1696
    %v1702 = vrot.slane %v1600, 2
    %v1704 = vrot.slane %v1604, 2
    %v1706 = vmax.f32 %v1702, %v1704
    %v1707 = vpack.c.bf16 %v1706, %v1706
    %v1708 = vld [vmem:[#allocation2 + $0x3c0] sm:$0xff]
    %v1709 = vld [vmem:[#allocation2 + $0x3c8] sm:$0xff]
    %v1710 = vld [vmem:[#allocation2 + $0x3d0] sm:$0xff]
    %v1711 = vld [vmem:[#allocation2 + $0x3d8] sm:$0xff]
    %v1712 = vld [vmem:[#allocation2 + $0x3e0] sm:$0xff]
    %v1713 = vld [vmem:[#allocation2 + $0x3e8] sm:$0xff]
    %v1714 = vld [vmem:[#allocation2 + $0x3f0] sm:$0xff]
    %v1715 = vld [vmem:[#allocation2 + $0x3f8] sm:$0xff]
    %v1724 = vunpack.c.l.b16 %v1708
    %v1725 = vunpack.c.h.b16 %v1708
    %v1726 = vunpack.c.l.b16 %v1709
    %v1727 = vunpack.c.h.b16 %v1709
    %v1728 = vunpack.c.l.b16 %v1710
    %v1729 = vunpack.c.h.b16 %v1710
    %v1730 = vunpack.c.l.b16 %v1711
    %v1731 = vunpack.c.h.b16 %v1711
    %v1732 = vunpack.c.l.b16 %v1712
    %v1733 = vunpack.c.h.b16 %v1712
    %v1734 = vunpack.c.l.b16 %v1713
    %v1735 = vunpack.c.h.b16 %v1713
    %v1736 = vunpack.c.l.b16 %v1714
    %v1737 = vunpack.c.h.b16 %v1714
    %v1738 = vunpack.c.l.b16 %v1715
    %v1739 = vunpack.c.h.b16 %v1715
    %v1740 = vpack.c.b16 %v1726, %v1724
    %v1741 = vpack.c.b16 %v1727, %v1725
    %v1742 = vpack.c.b16 %v1730, %v1728
    %v1743 = vpack.c.b16 %v1731, %v1729
    %v1744 = vpack.c.b16 %v1734, %v1732
    %v1745 = vpack.c.b16 %v1735, %v1733
    %v1746 = vpack.c.b16 %v1738, %v1736
    %v1747 = vpack.c.b16 %v1739, %v1737
    %v1757 = vsel %vm253, %v1707, 0
    %1759 = vmatprep.subr.bf16.mxu0 %v1741
    %1760 = vmatpush1.bf16.msra.mxu0 %v1740
    %1761 = vmatprep.subr.bf16.mxu0 %v1743
    %1762 = vmatpush1.bf16.msra.mxu0 %v1742
    %1763 = vmatprep.subr.bf16.mxu0 %v1745
    %1764 = vmatpush1.bf16.msra.mxu0 %v1744
    %1765 = vmatprep.subr.bf16.mxu0 %v1747
    %1766 = vmatpush1.bf16.msra.mxu0 %v1746
    %1767 = vmatprep.subr.bf16.mxu0 0
    %1768 = vmatpush1.bf16.msra.mxu0 0
    %1769 = vmatprep.subr.bf16.mxu0 0
    %1770 = vmatpush1.bf16.msra.mxu0 0
    %1771 = vmatprep.subr.bf16.mxu0 0
    %1772 = vmatpush1.bf16.msra.mxu0 0
    %1773 = vmatprep.subr.bf16.mxu0 0
    %1774 = vmatpush1.bf16.msra.mxu0 0
    %1775 = vmatprep.subr.bf16.mxu0 0
    %1776 = vmatpush1.bf16.msra.mxu0 0
    %1777 = vmatprep.subr.bf16.mxu0 0
    %1778 = vmatpush1.bf16.msra.mxu0 0
    %1779 = vmatprep.subr.bf16.mxu0 0
    %1780 = vmatpush1.bf16.msra.mxu0 0
    %1781 = vmatprep.subr.bf16.mxu0 0
    %1782 = vmatpush1.bf16.msra.mxu0 0
    %1783 = vmatprep.subr.bf16.mxu0 0
    %1784 = vmatpush1.bf16.msra.mxu0 0
    %1785 = vmatprep.subr.bf16.mxu0 0
    %1786 = vmatpush1.bf16.msra.mxu0 0
    %1787 = vmatprep.subr.bf16.mxu0 0
    %1788 = vmatpush1.bf16.msra.mxu0 0
    %1789 = vmatprep.subr.bf16.mxu0 0
    %1790 = vmatpush1.bf16.msra.mxu0 0
    %1791 = vmatprep.mubr.bf16.mxu0 0
    %1792 = vmatmul.mubr.bf16.gmra.mrb[0].mxu0 %v1757
    %v1793 = vpop.f32.mrb[0].mxu0
    %v1794 = vadd.f32 0.0, %v1793
    %v1795 = vpop.f32.mrb[0].mxu0
    %v1796 = vadd.f32 0.0, %v1795
    %v1797 = vpop.f32.mrb[0].mxu0
    %v1798 = vpop.f32.mrb[0].mxu0
    %1799 = vdwg.mxu0
    %v1800 = vadd.f32 %v1700, %v1794
    %v1801 = vadd.f32 %v1701, %v1796
    %v1802 = vrot.slane %v1600, 4
    %v1804 = vrot.slane %v1604, 4
    %v1806 = vmax.f32 %v1802, %v1804
    %v1807 = vpack.c.bf16 %v1806, %v1806
    %v1808 = vld [vmem:[#allocation2 + $0x400] sm:$0xff]
    %v1809 = vld [vmem:[#allocation2 + $0x408] sm:$0xff]
    %v1810 = vld [vmem:[#allocation2 + $0x410] sm:$0xff]
    %v1811 = vld [vmem:[#allocation2 + $0x418] sm:$0xff]
    %v1812 = vld [vmem:[#allocation2 + $0x420] sm:$0xff]
    %v1813 = vld [vmem:[#allocation2 + $0x428] sm:$0xff]
    %v1814 = vld [vmem:[#allocation2 + $0x430] sm:$0xff]
    %v1815 = vld [vmem:[#allocation2 + $0x438] sm:$0xff]
    %v1824 = vunpack.c.l.b16 %v1808
    %v1825 = vunpack.c.h.b16 %v1808
    %v1826 = vunpack.c.l.b16 %v1809
    %v1827 = vunpack.c.h.b16 %v1809
    %v1828 = vunpack.c.l.b16 %v1810
    %v1829 = vunpack.c.h.b16 %v1810
    %v1830 = vunpack.c.l.b16 %v1811
    %v1831 = vunpack.c.h.b16 %v1811
    %v1832 = vunpack.c.l.b16 %v1812
    %v1833 = vunpack.c.h.b16 %v1812
    %v1834 = vunpack.c.l.b16 %v1813
    %v1835 = vunpack.c.h.b16 %v1813
    %v1836 = vunpack.c.l.b16 %v1814
    %v1837 = vunpack.c.h.b16 %v1814
    %v1838 = vunpack.c.l.b16 %v1815
    %v1839 = vunpack.c.h.b16 %v1815
    %v1840 = vpack.c.b16 %v1826, %v1824
    %v1841 = vpack.c.b16 %v1827, %v1825
    %v1842 = vpack.c.b16 %v1830, %v1828
    %v1843 = vpack.c.b16 %v1831, %v1829
    %v1844 = vpack.c.b16 %v1834, %v1832
    %v1845 = vpack.c.b16 %v1835, %v1833
    %v1846 = vpack.c.b16 %v1838, %v1836
    %v1847 = vpack.c.b16 %v1839, %v1837
    %v1857 = vsel %vm253, %v1807, 0
    %1859 = vmatprep.subr.bf16.mxu0 %v1841
    %1860 = vmatpush1.bf16.msra.mxu0 %v1840
    %1861 = vmatprep.subr.bf16.mxu0 %v1843
    %1862 = vmatpush1.bf16.msra.mxu0 %v1842
    %1863 = vmatprep.subr.bf16.mxu0 %v1845
    %1864 = vmatpush1.bf16.msra.mxu0 %v1844
    %1865 = vmatprep.subr.bf16.mxu0 %v1847
    %1866 = vmatpush1.bf16.msra.mxu0 %v1846
    %1867 = vmatprep.subr.bf16.mxu0 0
    %1868 = vmatpush1.bf16.msra.mxu0 0
    %1869 = vmatprep.subr.bf16.mxu0 0
    %1870 = vmatpush1.bf16.msra.mxu0 0
    %1871 = vmatprep.subr.bf16.mxu0 0
    %1872 = vmatpush1.bf16.msra.mxu0 0
    %1873 = vmatprep.subr.bf16.mxu0 0
    %1874 = vmatpush1.bf16.msra.mxu0 0
    %1875 = vmatprep.subr.bf16.mxu0 0
    %1876 = vmatpush1.bf16.msra.mxu0 0
    %1877 = vmatprep.subr.bf16.mxu0 0
    %1878 = vmatpush1.bf16.msra.mxu0 0
    %1879 = vmatprep.subr.bf16.mxu0 0
    %1880 = vmatpush1.bf16.msra.mxu0 0
    %1881 = vmatprep.subr.bf16.mxu0 0
    %1882 = vmatpush1.bf16.msra.mxu0 0
    %1883 = vmatprep.subr.bf16.mxu0 0
    %1884 = vmatpush1.bf16.msra.mxu0 0
    %1885 = vmatprep.subr.bf16.mxu0 0
    %1886 = vmatpush1.bf16.msra.mxu0 0
    %1887 = vmatprep.subr.bf16.mxu0 0
    %1888 = vmatpush1.bf16.msra.mxu0 0
    %1889 = vmatprep.subr.bf16.mxu0 0
    %1890 = vmatpush1.bf16.msra.mxu0 0
    %1891 = vmatprep.mubr.bf16.mxu0 0
    %1892 = vmatmul.mubr.bf16.gmra.mrb[0].mxu0 %v1857
    %v1893 = vpop.f32.mrb[0].mxu0
    %v1894 = vadd.f32 0.0, %v1893
    %v1895 = vpop.f32.mrb[0].mxu0
    %v1896 = vadd.f32 0.0, %v1895
    %v1897 = vpop.f32.mrb[0].mxu0
    %v1898 = vpop.f32.mrb[0].mxu0
    %1899 = vdwg.mxu0
    %v1900 = vadd.f32 %v1800, %v1894
    %v1901 = vadd.f32 %v1801, %v1896
    %v1902 = vrot.slane %v1600, 6
    %v1904 = vrot.slane %v1604, 6
    %v1906 = vmax.f32 %v1902, %v1904
    %v1907 = vpack.c.bf16 %v1906, %v1906
    %v1908 = vld [vmem:[#allocation2 + $0x440] sm:$0xff]
    %v1909 = vld [vmem:[#allocation2 + $0x448] sm:$0xff]
    %v1910 = vld [vmem:[#allocation2 + $0x450] sm:$0xff]
    %v1911 = vld [vmem:[#allocation2 + $0x458] sm:$0xff]
    %v1912 = vld [vmem:[#allocation2 + $0x460] sm:$0xff]
    %v1913 = vld [vmem:[#allocation2 + $0x468] sm:$0xff]
    %v1914 = vld [vmem:[#allocation2 + $0x470] sm:$0xff]
    %v1915 = vld [vmem:[#allocation2 + $0x478] sm:$0xff]
    %v1924 = vunpack.c.l.b16 %v1908
    %v1925 = vunpack.c.h.b16 %v1908
    %v1926 = vunpack.c.l.b16 %v1909
    %v1927 = vunpack.c.h.b16 %v1909
    %v1928 = vunpack.c.l.b16 %v1910
    %v1929 = vunpack.c.h.b16 %v1910
    %v1930 = vunpack.c.l.b16 %v1911
    %v1931 = vunpack.c.h.b16 %v1911
    %v1932 = vunpack.c.l.b16 %v1912
    %v1933 = vunpack.c.h.b16 %v1912
    %v1934 = vunpack.c.l.b16 %v1913
    %v1935 = vunpack.c.h.b16 %v1913
    %v1936 = vunpack.c.l.b16 %v1914
    %v1937 = vunpack.c.h.b16 %v1914
    %v1938 = vunpack.c.l.b16 %v1915
    %v1939 = vunpack.c.h.b16 %v1915
    %v1940 = vpack.c.b16 %v1926, %v1924
    %v1941 = vpack.c.b16 %v1927, %v1925
    %v1942 = vpack.c.b16 %v1930, %v1928
    %v1943 = vpack.c.b16 %v1931, %v1929
    %v1944 = vpack.c.b16 %v1934, %v1932
    %v1945 = vpack.c.b16 %v1935, %v1933
    %v1946 = vpack.c.b16 %v1938, %v1936
    %v1947 = vpack.c.b16 %v1939, %v1937
    %v1957 = vsel %vm253, %v1907, 0
    %1959 = vmatprep.subr.bf16.mxu0 %v1941
    %1960 = vmatpush1.bf16.msra.mxu0 %v1940
    %1961 = vmatprep.subr.bf16.mxu0 %v1943
    %1962 = vmatpush1.bf16.msra.mxu0 %v1942
    %1963 = vmatprep.subr.bf16.mxu0 %v1945
    %1964 = vmatpush1.bf16.msra.mxu0 %v1944
    %1965 = vmatprep.subr.bf16.mxu0 %v1947
    %1966 = vmatpush1.bf16.msra.mxu0 %v1946
    %1967 = vmatprep.subr.bf16.mxu0 0
    %1968 = vmatpush1.bf16.msra.mxu0 0
    %1969 = vmatprep.subr.bf16.mxu0 0
    %1970 = vmatpush1.bf16.msra.mxu0 0
    %1971 = vmatprep.subr.bf16.mxu0 0
    %1972 = vmatpush1.bf16.msra.mxu0 0
    %1973 = vmatprep.subr.bf16.mxu0 0
    %1974 = vmatpush1.bf16.msra.mxu0 0
    %1975 = vmatprep.subr.bf16.mxu0 0
    %1976 = vmatpush1.bf16.msra.mxu0 0
    %1977 = vmatprep.subr.bf16.mxu0 0
    %1978 = vmatpush1.bf16.msra.mxu0 0
    %1979 = vmatprep.subr.bf16.mxu0 0
    %1980 = vmatpush1.bf16.msra.mxu0 0
    %1981 = vmatprep.subr.bf16.mxu0 0
    %1982 = vmatpush1.bf16.msra.mxu0 0
    %1983 = vmatprep.subr.bf16.mxu0 0
    %1984 = vmatpush1.bf16.msra.mxu0 0
    %1985 = vmatprep.subr.bf16.mxu0 0
    %1986 = vmatpush1.bf16.msra.mxu0 0
    %1987 = vmatprep.subr.bf16.mxu0 0
    %1988 = vmatpush1.bf16.msra.mxu0 0
    %1989 = vmatprep.subr.bf16.mxu0 0
    %1990 = vmatpush1.bf16.msra.mxu0 0
    %1991 = vmatprep.mubr.bf16.mxu0 0
    %1992 = vmatmul.mubr.bf16.gmra.mrb[0].mxu0 %v1957
    %v1993 = vpop.f32.mrb[0].mxu0
    %v1994 = vadd.f32 0.0, %v1993
    %v1995 = vpop.f32.mrb[0].mxu0
    %v1996 = vadd.f32 0.0, %v1995
    %v1997 = vpop.f32.mrb[0].mxu0
    %v1998 = vpop.f32.mrb[0].mxu0
    %1999 = vdwg.mxu0
    %v2000 = vadd.f32 %v1900, %v1994
    %v2001 = vadd.f32 %v1901, %v1996
    %2003 = vrot.lane.b32.xlu0 %v1601, 64
    %v2004 = vpop.permute.xlu0 %2003
    %v2006 = vmax.f32 %v1601, %v2004
    %v2007 = vpack.c.bf16 %v2006, %v2006
    %v2008 = vld [vmem:[#allocation2 + $0x480] sm:$0xff]
    %v2009 = vld [vmem:[#allocation2 + $0x488] sm:$0xff]
    %v2010 = vld [vmem:[#allocation2 + $0x490] sm:$0xff]
    %v2011 = vld [vmem:[#allocation2 + $0x498] sm:$0xff]
    %v2012 = vld [vmem:[#allocation2 + $0x4a0] sm:$0xff]
    %v2013 = vld [vmem:[#allocation2 + $0x4a8] sm:$0xff]
    %v2014 = vld [vmem:[#allocation2 + $0x4b0] sm:$0xff]
    %v2015 = vld [vmem:[#allocation2 + $0x4b8] sm:$0xff]
    %v2024 = vunpack.c.l.b16 %v2008
    %v2025 = vunpack.c.h.b16 %v2008
    %v2026 = vunpack.c.l.b16 %v2009
    %v2027 = vunpack.c.h.b16 %v2009
    %v2028 = vunpack.c.l.b16 %v2010
    %v2029 = vunpack.c.h.b16 %v2010
    %v2030 = vunpack.c.l.b16 %v2011
    %v2031 = vunpack.c.h.b16 %v2011
    %v2032 = vunpack.c.l.b16 %v2012
    %v2033 = vunpack.c.h.b16 %v2012
    %v2034 = vunpack.c.l.b16 %v2013
    %v2035 = vunpack.c.h.b16 %v2013
    %v2036 = vunpack.c.l.b16 %v2014
    %v2037 = vunpack.c.h.b16 %v2014
    %v2038 = vunpack.c.l.b16 %v2015
    %v2039 = vunpack.c.h.b16 %v2015
    %v2040 = vpack.c.b16 %v2026, %v2024
    %v2041 = vpack.c.b16 %v2027, %v2025
    %v2042 = vpack.c.b16 %v2030, %v2028
    %v2043 = vpack.c.b16 %v2031, %v2029
    %v2044 = vpack.c.b16 %v2034, %v2032
    %v2045 = vpack.c.b16 %v2035, %v2033
    %v2046 = vpack.c.b16 %v2038, %v2036
    %v2047 = vpack.c.b16 %v2039, %v2037
    %v2057 = vsel %vm253, %v2007, 0
    %2059 = vmatprep.subr.bf16.mxu0 %v2041
    %2060 = vmatpush1.bf16.msra.mxu0 %v2040
    %2061 = vmatprep.subr.bf16.mxu0 %v2043
    %2062 = vmatpush1.bf16.msra.mxu0 %v2042
    %2063 = vmatprep.subr.bf16.mxu0 %v2045
    %2064 = vmatpush1.bf16.msra.mxu0 %v2044
    %2065 = vmatprep.subr.bf16.mxu0 %v2047
    %2066 = vmatpush1.bf16.msra.mxu0 %v2046
    %2067 = vmatprep.subr.bf16.mxu0 0
    %2068 = vmatpush1.bf16.msra.mxu0 0
    %2069 = vmatprep.subr.bf16.mxu0 0
    %2070 = vmatpush1.bf16.msra.mxu0 0
    %2071 = vmatprep.subr.bf16.mxu0 0
    %2072 = vmatpush1.bf16.msra.mxu0 0
    %2073 = vmatprep.subr.bf16.mxu0 0
    %2074 = vmatpush1.bf16.msra.mxu0 0
    %2075 = vmatprep.subr.bf16.mxu0 0
    %2076 = vmatpush1.bf16.msra.mxu0 0
    %2077 = vmatprep.subr.bf16.mxu0 0
    %2078 = vmatpush1.bf16.msra.mxu0 0
    %2079 = vmatprep.subr.bf16.mxu0 0
    %2080 = vmatpush1.bf16.msra.mxu0 0
    %2081 = vmatprep.subr.bf16.mxu0 0
    %2082 = vmatpush1.bf16.msra.mxu0 0
    %2083 = vmatprep.subr.bf16.mxu0 0
    %2084 = vmatpush1.bf16.msra.mxu0 0
    %2085 = vmatprep.subr.bf16.mxu0 0
    %2086 = vmatpush1.bf16.msra.mxu0 0
    %2087 = vmatprep.subr.bf16.mxu0 0
    %2088 = vmatpush1.bf16.msra.mxu0 0
    %2089 = vmatprep.subr.bf16.mxu0 0
    %2090 = vmatpush1.bf16.msra.mxu0 0
    %2091 = vmatprep.mubr.bf16.mxu0 0
    %2092 = vmatmul.mubr.bf16.gmra.mrb[0].mxu0 %v2057
    %v2093 = vpop.f32.mrb[0].mxu0
    %v2094 = vadd.f32 0.0, %v2093
    %v2095 = vpop.f32.mrb[0].mxu0
    %v2096 = vadd.f32 0.0, %v2095
    %v2097 = vpop.f32.mrb[0].mxu0
    %v2098 = vpop.f32.mrb[0].mxu0
    %2099 = vdwg.mxu0
    %v2100 = vadd.f32 %v2000, %v2094
    %v2101 = vadd.f32 %v2001, %v2096
    %v2102 = vrot.slane %v1601, 2
    %v2104 = vrot.slane %v2004, 2
    %v2106 = vmax.f32 %v2102, %v2104
    %v2107 = vpack.c.bf16 %v2106, %v2106
    %v2108 = vld [vmem:[#allocation2 + $0x4c0] sm:$0xff]
    %v2109 = vld [vmem:[#allocation2 + $0x4c8] sm:$0xff]
    %v2110 = vld [vmem:[#allocation2 + $0x4d0] sm:$0xff]
    %v2111 = vld [vmem:[#allocation2 + $0x4d8] sm:$0xff]
    %v2112 = vld [vmem:[#allocation2 + $0x4e0] sm:$0xff]
    %v2113 = vld [vmem:[#allocation2 + $0x4e8] sm:$0xff]
    %v2114 = vld [vmem:[#allocation2 + $0x4f0] sm:$0xff]
    %v2115 = vld [vmem:[#allocation2 + $0x4f8] sm:$0xff]
    %v2124 = vunpack.c.l.b16 %v2108
    %v2125 = vunpack.c.h.b16 %v2108
    %v2126 = vunpack.c.l.b16 %v2109
    %v2127 = vunpack.c.h.b16 %v2109
    %v2128 = vunpack.c.l.b16 %v2110
    %v2129 = vunpack.c.h.b16 %v2110
    %v2130 = vunpack.c.l.b16 %v2111
    %v2131 = vunpack.c.h.b16 %v2111
    %v2132 = vunpack.c.l.b16 %v2112
    %v2133 = vunpack.c.h.b16 %v2112
    %v2134 = vunpack.c.l.b16 %v2113
    %v2135 = vunpack.c.h.b16 %v2113
    %v2136 = vunpack.c.l.b16 %v2114
    %v2137 = vunpack.c.h.b16 %v2114
    %v2138 = vunpack.c.l.b16 %v2115
    %v2139 = vunpack.c.h.b16 %v2115
    %v2140 = vpack.c.b16 %v2126, %v2124
    %v2141 = vpack.c.b16 %v2127, %v2125
    %v2142 = vpack.c.b16 %v2130, %v2128
    %v2143 = vpack.c.b16 %v2131, %v2129
    %v2144 = vpack.c.b16 %v2134, %v2132
    %v2145 = vpack.c.b16 %v2135, %v2133
    %v2146 = vpack.c.b16 %v2138, %v2136
    %v2147 = vpack.c.b16 %v2139, %v2137
    %v2157 = vsel %vm253, %v2107, 0
    %2159 = vmatprep.subr.bf16.mxu0 %v2141
    %2160 = vmatpush1.bf16.msra.mxu0 %v2140
    %2161 = vmatprep.subr.bf16.mxu0 %v2143
    %2162 = vmatpush1.bf16.msra.mxu0 %v2142
    %2163 = vmatprep.subr.bf16.mxu0 %v2145
    %2164 = vmatpush1.bf16.msra.mxu0 %v2144
    %2165 = vmatprep.subr.bf16.mxu0 %v2147
    %2166 = vmatpush1.bf16.msra.mxu0 %v2146
    %2167 = vmatprep.subr.bf16.mxu0 0
    %2168 = vmatpush1.bf16.msra.mxu0 0
    %2169 = vmatprep.subr.bf16.mxu0 0
    %2170 = vmatpush1.bf16.msra.mxu0 0
    %2171 = vmatprep.subr.bf16.mxu0 0
    %2172 = vmatpush1.bf16.msra.mxu0 0
    %2173 = vmatprep.subr.bf16.mxu0 0
    %2174 = vmatpush1.bf16.msra.mxu0 0
    %2175 = vmatprep.subr.bf16.mxu0 0
    %2176 = vmatpush1.bf16.msra.mxu0 0
    %2177 = vmatprep.subr.bf16.mxu0 0
    %2178 = vmatpush1.bf16.msra.mxu0 0
    %2179 = vmatprep.subr.bf16.mxu0 0
    %2180 = vmatpush1.bf16.msra.mxu0 0
    %2181 = vmatprep.subr.bf16.mxu0 0
    %2182 = vmatpush1.bf16.msra.mxu0 0
    %2183 = vmatprep.subr.bf16.mxu0 0
    %2184 = vmatpush1.bf16.msra.mxu0 0
    %2185 = vmatprep.subr.bf16.mxu0 0
    %2186 = vmatpush1.bf16.msra.mxu0 0
    %2187 = vmatprep.subr.bf16.mxu0 0
    %2188 = vmatpush1.bf16.msra.mxu0 0
    %2189 = vmatprep.subr.bf16.mxu0 0
    %2190 = vmatpush1.bf16.msra.mxu0 0
    %2191 = vmatprep.mubr.bf16.mxu0 0
    %2192 = vmatmul.mubr.bf16.gmra.mrb[0].mxu0 %v2157
    %v2193 = vpop.f32.mrb[0].mxu0
    %v2194 = vadd.f32 0.0, %v2193
    %v2195 = vpop.f32.mrb[0].mxu0
    %v2196 = vadd.f32 0.0, %v2195
    %v2197 = vpop.f32.mrb[0].mxu0
    %v2198 = vpop.f32.mrb[0].mxu0
    %2199 = vdwg.mxu0
    %v2200 = vadd.f32 %v2100, %v2194
    %v2201 = vadd.f32 %v2101, %v2196
    %v2202 = vrot.slane %v1601, 4
    %v2204 = vrot.slane %v2004, 4
    %v2206 = vmax.f32 %v2202, %v2204
    %v2207 = vpack.c.bf16 %v2206, %v2206
    %v2208 = vld [vmem:[#allocation2 + $0x500] sm:$0xff]
    %v2209 = vld [vmem:[#allocation2 + $0x508] sm:$0xff]
    %v2210 = vld [vmem:[#allocation2 + $0x510] sm:$0xff]
    %v2211 = vld [vmem:[#allocation2 + $0x518] sm:$0xff]
    %v2212 = vld [vmem:[#allocation2 + $0x520] sm:$0xff]
    %v2213 = vld [vmem:[#allocation2 + $0x528] sm:$0xff]
    %v2214 = vld [vmem:[#allocation2 + $0x530] sm:$0xff]
    %v2215 = vld [vmem:[#allocation2 + $0x538] sm:$0xff]
    %v2224 = vunpack.c.l.b16 %v2208
    %v2225 = vunpack.c.h.b16 %v2208
    %v2226 = vunpack.c.l.b16 %v2209
    %v2227 = vunpack.c.h.b16 %v2209
    %v2228 = vunpack.c.l.b16 %v2210
    %v2229 = vunpack.c.h.b16 %v2210
    %v2230 = vunpack.c.l.b16 %v2211
    %v2231 = vunpack.c.h.b16 %v2211
    %v2232 = vunpack.c.l.b16 %v2212
    %v2233 = vunpack.c.h.b16 %v2212
    %v2234 = vunpack.c.l.b16 %v2213
    %v2235 = vunpack.c.h.b16 %v2213
    %v2236 = vunpack.c.l.b16 %v2214
    %v2237 = vunpack.c.h.b16 %v2214
    %v2238 = vunpack.c.l.b16 %v2215
    %v2239 = vunpack.c.h.b16 %v2215
    %v2240 = vpack.c.b16 %v2226, %v2224
    %v2241 = vpack.c.b16 %v2227, %v2225
    %v2242 = vpack.c.b16 %v2230, %v2228
    %v2243 = vpack.c.b16 %v2231, %v2229
    %v2244 = vpack.c.b16 %v2234, %v2232
    %v2245 = vpack.c.b16 %v2235, %v2233
    %v2246 = vpack.c.b16 %v2238, %v2236
    %v2247 = vpack.c.b16 %v2239, %v2237
    %v2257 = vsel %vm253, %v2207, 0
    %2259 = vmatprep.subr.bf16.mxu0 %v2241
    %2260 = vmatpush1.bf16.msra.mxu0 %v2240
    %2261 = vmatprep.subr.bf16.mxu0 %v2243
    %2262 = vmatpush1.bf16.msra.mxu0 %v2242
    %2263 = vmatprep.subr.bf16.mxu0 %v2245
    %2264 = vmatpush1.bf16.msra.mxu0 %v2244
    %2265 = vmatprep.subr.bf16.mxu0 %v2247
    %2266 = vmatpush1.bf16.msra.mxu0 %v2246
    %2267 = vmatprep.subr.bf16.mxu0 0
    %2268 = vmatpush1.bf16.msra.mxu0 0
    %2269 = vmatprep.subr.bf16.mxu0 0
    %2270 = vmatpush1.bf16.msra.mxu0 0
    %2271 = vmatprep.subr.bf16.mxu0 0
    %2272 = vmatpush1.bf16.msra.mxu0 0
    %2273 = vmatprep.subr.bf16.mxu0 0
    %2274 = vmatpush1.bf16.msra.mxu0 0
    %2275 = vmatprep.subr.bf16.mxu0 0
    %2276 = vmatpush1.bf16.msra.mxu0 0
    %2277 = vmatprep.subr.bf16.mxu0 0
    %2278 = vmatpush1.bf16.msra.mxu0 0
    %2279 = vmatprep.subr.bf16.mxu0 0
    %2280 = vmatpush1.bf16.msra.mxu0 0
    %2281 = vmatprep.subr.bf16.mxu0 0
    %2282 = vmatpush1.bf16.msra.mxu0 0
    %2283 = vmatprep.subr.bf16.mxu0 0
    %2284 = vmatpush1.bf16.msra.mxu0 0
    %2285 = vmatprep.subr.bf16.mxu0 0
    %2286 = vmatpush1.bf16.msra.mxu0 0
    %2287 = vmatprep.subr.bf16.mxu0 0
    %2288 = vmatpush1.bf16.msra.mxu0 0
    %2289 = vmatprep.subr.bf16.mxu0 0
    %2290 = vmatpush1.bf16.msra.mxu0 0
    %2291 = vmatprep.mubr.bf16.mxu0 0
    %2292 = vmatmul.mubr.bf16.gmra.mrb[0].mxu0 %v2257
    %v2293 = vpop.f32.mrb[0].mxu0
    %v2294 = vadd.f32 0.0, %v2293
    %v2295 = vpop.f32.mrb[0].mxu0
    %v2296 = vadd.f32 0.0, %v2295
    %v2297 = vpop.f32.mrb[0].mxu0
    %v2298 = vpop.f32.mrb[0].mxu0
    %2299 = vdwg.mxu0
    %v2300 = vadd.f32 %v2200, %v2294
    %v2301 = vadd.f32 %v2201, %v2296
    %v2302 = vld [vmem:[%s0 + $0x54] sm:$0xff]
    %v2303 = vld [vmem:[%s0 + $0x5c] sm:$0x3f]
    %v2304 = vmul.f32 %v2302, %v158
    %v2305 = vmul.f32 %v2303, %v174
    %v2306 = vld [vmem:[%s0 + $0x62] sm:$0xff]
    %v2307 = vld [vmem:[%s0 + $0x6a] sm:$0x3f]
    %v2308 = vmul.f32 %v2306, %v158
    %v2309 = vmul.f32 %v2307, %v174
    %v2310 = vmax.f32 %v2304, %v2308
    %v2311 = vmax.f32 %v2305, %v2309
    %2313 = vrot.lane.b32.xlu0 %v2310, 64
    %v2314 = vpop.permute.xlu0 %2313
    %v2316 = vmax.f32 %v2310, %v2314
    %v2317 = vpack.c.bf16 %v2316, %v2316
    %v2318 = vld [vmem:[#allocation2 + $0x540] sm:$0xff]
    %v2319 = vld [vmem:[#allocation2 + $0x548] sm:$0xff]
    %v2320 = vld [vmem:[#allocation2 + $0x550] sm:$0xff]
    %v2321 = vld [vmem:[#allocation2 + $0x558] sm:$0xff]
    %v2322 = vld [vmem:[#allocation2 + $0x560] sm:$0xff]
    %v2323 = vld [vmem:[#allocation2 + $0x568] sm:$0xff]
    %v2324 = vld [vmem:[#allocation2 + $0x570] sm:$0xff]
    %v2325 = vld [vmem:[#allocation2 + $0x578] sm:$0xff]
    %v2334 = vunpack.c.l.b16 %v2318
    %v2335 = vunpack.c.h.b16 %v2318
    %v2336 = vunpack.c.l.b16 %v2319
    %v2337 = vunpack.c.h.b16 %v2319
    %v2338 = vunpack.c.l.b16 %v2320
    %v2339 = vunpack.c.h.b16 %v2320
    %v2340 = vunpack.c.l.b16 %v2321
    %v2341 = vunpack.c.h.b16 %v2321
    %v2342 = vunpack.c.l.b16 %v2322
    %v2343 = vunpack.c.h.b16 %v2322
    %v2344 = vunpack.c.l.b16 %v2323
    %v2345 = vunpack.c.h.b16 %v2323
    %v2346 = vunpack.c.l.b16 %v2324
    %v2347 = vunpack.c.h.b16 %v2324
    %v2348 = vunpack.c.l.b16 %v2325
    %v2349 = vunpack.c.h.b16 %v2325
    %v2350 = vpack.c.b16 %v2336, %v2334
    %v2351 = vpack.c.b16 %v2337, %v2335
    %v2352 = vpack.c.b16 %v2340, %v2338
    %v2353 = vpack.c.b16 %v2341, %v2339
    %v2354 = vpack.c.b16 %v2344, %v2342
    %v2355 = vpack.c.b16 %v2345, %v2343
    %v2356 = vpack.c.b16 %v2348, %v2346
    %v2357 = vpack.c.b16 %v2349, %v2347
    %v2367 = vsel %vm253, %v2317, 0
    %2369 = vmatprep.subr.bf16.mxu0 %v2351
    %2370 = vmatpush1.bf16.msra.mxu0 %v2350
    %2371 = vmatprep.subr.bf16.mxu0 %v2353
    %2372 = vmatpush1.bf16.msra.mxu0 %v2352
    %2373 = vmatprep.subr.bf16.mxu0 %v2355
    %2374 = vmatpush1.bf16.msra.mxu0 %v2354
    %2375 = vmatprep.subr.bf16.mxu0 %v2357
    %2376 = vmatpush1.bf16.msra.mxu0 %v2356
    %2377 = vmatprep.subr.bf16.mxu0 0
    %2378 = vmatpush1.bf16.msra.mxu0 0
    %2379 = vmatprep.subr.bf16.mxu0 0
    %2380 = vmatpush1.bf16.msra.mxu0 0
    %2381 = vmatprep.subr.bf16.mxu0 0
    %2382 = vmatpush1.bf16.msra.mxu0 0
    %2383 = vmatprep.subr.bf16.mxu0 0
    %2384 = vmatpush1.bf16.msra.mxu0 0
    %2385 = vmatprep.subr.bf16.mxu0 0
    %2386 = vmatpush1.bf16.msra.mxu0 0
    %2387 = vmatprep.subr.bf16.mxu0 0
    %2388 = vmatpush1.bf16.msra.mxu0 0
    %2389 = vmatprep.subr.bf16.mxu0 0
    %2390 = vmatpush1.bf16.msra.mxu0 0
    %2391 = vmatprep.subr.bf16.mxu0 0
    %2392 = vmatpush1.bf16.msra.mxu0 0
    %2393 = vmatprep.subr.bf16.mxu0 0
    %2394 = vmatpush1.bf16.msra.mxu0 0
    %2395 = vmatprep.subr.bf16.mxu0 0
    %2396 = vmatpush1.bf16.msra.mxu0 0
    %2397 = vmatprep.subr.bf16.mxu0 0
    %2398 = vmatpush1.bf16.msra.mxu0 0
    %2399 = vmatprep.subr.bf16.mxu0 0
    %2400 = vmatpush1.bf16.msra.mxu0 0
    %2401 = vmatprep.mubr.bf16.mxu0 0
    %2402 = vmatmul.mubr.bf16.gmra.mrb[0].mxu0 %v2367
    %v2403 = vpop.f32.mrb[0].mxu0
    %v2404 = vadd.f32 0.0, %v2403
    %v2405 = vpop.f32.mrb[0].mxu0
    %v2406 = vadd.f32 0.0, %v2405
    %v2407 = vpop.f32.mrb[0].mxu0
    %v2408 = vpop.f32.mrb[0].mxu0
    %2409 = vdwg.mxu0
    %v2410 = vadd.f32 %v2300, %v2404
    %v2411 = vadd.f32 %v2301, %v2406
    %v2412 = vrot.slane %v2310, 2
    %v2414 = vrot.slane %v2314, 2
    %v2416 = vmax.f32 %v2412, %v2414
    %v2417 = vpack.c.bf16 %v2416, %v2416
    %v2418 = vld [vmem:[#allocation2 + $0x580] sm:$0xff]
    %v2419 = vld [vmem:[#allocation2 + $0x588] sm:$0xff]
    %v2420 = vld [vmem:[#allocation2 + $0x590] sm:$0xff]
    %v2421 = vld [vmem:[#allocation2 + $0x598] sm:$0xff]
    %v2422 = vld [vmem:[#allocation2 + $0x5a0] sm:$0xff]
    %v2423 = vld [vmem:[#allocation2 + $0x5a8] sm:$0xff]
    %v2424 = vld [vmem:[#allocation2 + $0x5b0] sm:$0xff]
    %v2425 = vld [vmem:[#allocation2 + $0x5b8] sm:$0xff]
    %v2434 = vunpack.c.l.b16 %v2418
    %v2435 = vunpack.c.h.b16 %v2418
    %v2436 = vunpack.c.l.b16 %v2419
    %v2437 = vunpack.c.h.b16 %v2419
    %v2438 = vunpack.c.l.b16 %v2420
    %v2439 = vunpack.c.h.b16 %v2420
    %v2440 = vunpack.c.l.b16 %v2421
    %v2441 = vunpack.c.h.b16 %v2421
    %v2442 = vunpack.c.l.b16 %v2422
    %v2443 = vunpack.c.h.b16 %v2422
    %v2444 = vunpack.c.l.b16 %v2423
    %v2445 = vunpack.c.h.b16 %v2423
    %v2446 = vunpack.c.l.b16 %v2424
    %v2447 = vunpack.c.h.b16 %v2424
    %v2448 = vunpack.c.l.b16 %v2425
    %v2449 = vunpack.c.h.b16 %v2425
    %v2450 = vpack.c.b16 %v2436, %v2434
    %v2451 = vpack.c.b16 %v2437, %v2435
    %v2452 = vpack.c.b16 %v2440, %v2438
    %v2453 = vpack.c.b16 %v2441, %v2439
    %v2454 = vpack.c.b16 %v2444, %v2442
    %v2455 = vpack.c.b16 %v2445, %v2443
    %v2456 = vpack.c.b16 %v2448, %v2446
    %v2457 = vpack.c.b16 %v2449, %v2447
    %v2467 = vsel %vm253, %v2417, 0
    %2469 = vmatprep.subr.bf16.mxu0 %v2451
    %2470 = vmatpush1.bf16.msra.mxu0 %v2450
    %2471 = vmatprep.subr.bf16.mxu0 %v2453
    %2472 = vmatpush1.bf16.msra.mxu0 %v2452
    %2473 = vmatprep.subr.bf16.mxu0 %v2455
    %2474 = vmatpush1.bf16.msra.mxu0 %v2454
    %2475 = vmatprep.subr.bf16.mxu0 %v2457
    %2476 = vmatpush1.bf16.msra.mxu0 %v2456
    %2477 = vmatprep.subr.bf16.mxu0 0
    %2478 = vmatpush1.bf16.msra.mxu0 0
    %2479 = vmatprep.subr.bf16.mxu0 0
    %2480 = vmatpush1.bf16.msra.mxu0 0
    %2481 = vmatprep.subr.bf16.mxu0 0
    %2482 = vmatpush1.bf16.msra.mxu0 0
    %2483 = vmatprep.subr.bf16.mxu0 0
    %2484 = vmatpush1.bf16.msra.mxu0 0
    %2485 = vmatprep.subr.bf16.mxu0 0
    %2486 = vmatpush1.bf16.msra.mxu0 0
    %2487 = vmatprep.subr.bf16.mxu0 0
    %2488 = vmatpush1.bf16.msra.mxu0 0
    %2489 = vmatprep.subr.bf16.mxu0 0
    %2490 = vmatpush1.bf16.msra.mxu0 0
    %2491 = vmatprep.subr.bf16.mxu0 0
    %2492 = vmatpush1.bf16.msra.mxu0 0
    %2493 = vmatprep.subr.bf16.mxu0 0
    %2494 = vmatpush1.bf16.msra.mxu0 0
    %2495 = vmatprep.subr.bf16.mxu0 0
    %2496 = vmatpush1.bf16.msra.mxu0 0
    %2497 = vmatprep.subr.bf16.mxu0 0
    %2498 = vmatpush1.bf16.msra.mxu0 0
    %2499 = vmatprep.subr.bf16.mxu0 0
    %2500 = vmatpush1.bf16.msra.mxu0 0
    %2501 = vmatprep.mubr.bf16.mxu0 0
    %2502 = vmatmul.mubr.bf16.gmra.mrb[0].mxu0 %v2467
    %v2503 = vpop.f32.mrb[0].mxu0
    %v2504 = vadd.f32 0.0, %v2503
    %v2505 = vpop.f32.mrb[0].mxu0
    %v2506 = vadd.f32 0.0, %v2505
    %v2507 = vpop.f32.mrb[0].mxu0
    %v2508 = vpop.f32.mrb[0].mxu0
    %2509 = vdwg.mxu0
    %v2510 = vadd.f32 %v2410, %v2504
    %v2511 = vadd.f32 %v2411, %v2506
    %v2512 = vrot.slane %v2310, 4
    %v2514 = vrot.slane %v2314, 4
    %v2516 = vmax.f32 %v2512, %v2514
    %v2517 = vpack.c.bf16 %v2516, %v2516
    %v2518 = vld [vmem:[#allocation2 + $0x5c0] sm:$0xff]
    %v2519 = vld [vmem:[#allocation2 + $0x5c8] sm:$0xff]
    %v2520 = vld [vmem:[#allocation2 + $0x5d0] sm:$0xff]
    %v2521 = vld [vmem:[#allocation2 + $0x5d8] sm:$0xff]
    %v2522 = vld [vmem:[#allocation2 + $0x5e0] sm:$0xff]
    %v2523 = vld [vmem:[#allocation2 + $0x5e8] sm:$0xff]
    %v2524 = vld [vmem:[#allocation2 + $0x5f0] sm:$0xff]
    %v2525 = vld [vmem:[#allocation2 + $0x5f8] sm:$0xff]
    %v2534 = vunpack.c.l.b16 %v2518
    %v2535 = vunpack.c.h.b16 %v2518
    %v2536 = vunpack.c.l.b16 %v2519
    %v2537 = vunpack.c.h.b16 %v2519
    %v2538 = vunpack.c.l.b16 %v2520
    %v2539 = vunpack.c.h.b16 %v2520
    %v2540 = vunpack.c.l.b16 %v2521
    %v2541 = vunpack.c.h.b16 %v2521
    %v2542 = vunpack.c.l.b16 %v2522
    %v2543 = vunpack.c.h.b16 %v2522
    %v2544 = vunpack.c.l.b16 %v2523
    %v2545 = vunpack.c.h.b16 %v2523
    %v2546 = vunpack.c.l.b16 %v2524
    %v2547 = vunpack.c.h.b16 %v2524
    %v2548 = vunpack.c.l.b16 %v2525
    %v2549 = vunpack.c.h.b16 %v2525
    %v2550 = vpack.c.b16 %v2536, %v2534
    %v2551 = vpack.c.b16 %v2537, %v2535
    %v2552 = vpack.c.b16 %v2540, %v2538
    %v2553 = vpack.c.b16 %v2541, %v2539
    %v2554 = vpack.c.b16 %v2544, %v2542
    %v2555 = vpack.c.b16 %v2545, %v2543
    %v2556 = vpack.c.b16 %v2548, %v2546
    %v2557 = vpack.c.b16 %v2549, %v2547
    %v2567 = vsel %vm253, %v2517, 0
    %2569 = vmatprep.subr.bf16.mxu0 %v2551
    %2570 = vmatpush1.bf16.msra.mxu0 %v2550
    %2571 = vmatprep.subr.bf16.mxu0 %v2553
    %2572 = vmatpush1.bf16.msra.mxu0 %v2552
    %2573 = vmatprep.subr.bf16.mxu0 %v2555
    %2574 = vmatpush1.bf16.msra.mxu0 %v2554
    %2575 = vmatprep.subr.bf16.mxu0 %v2557
    %2576 = vmatpush1.bf16.msra.mxu0 %v2556
    %2577 = vmatprep.subr.bf16.mxu0 0
    %2578 = vmatpush1.bf16.msra.mxu0 0
    %2579 = vmatprep.subr.bf16.mxu0 0
    %2580 = vmatpush1.bf16.msra.mxu0 0
    %2581 = vmatprep.subr.bf16.mxu0 0
    %2582 = vmatpush1.bf16.msra.mxu0 0
    %2583 = vmatprep.subr.bf16.mxu0 0
    %2584 = vmatpush1.bf16.msra.mxu0 0
    %2585 = vmatprep.subr.bf16.mxu0 0
    %2586 = vmatpush1.bf16.msra.mxu0 0
    %2587 = vmatprep.subr.bf16.mxu0 0
    %2588 = vmatpush1.bf16.msra.mxu0 0
    %2589 = vmatprep.subr.bf16.mxu0 0
    %2590 = vmatpush1.bf16.msra.mxu0 0
    %2591 = vmatprep.subr.bf16.mxu0 0
    %2592 = vmatpush1.bf16.msra.mxu0 0
    %2593 = vmatprep.subr.bf16.mxu0 0
    %2594 = vmatpush1.bf16.msra.mxu0 0
    %2595 = vmatprep.subr.bf16.mxu0 0
    %2596 = vmatpush1.bf16.msra.mxu0 0
    %2597 = vmatprep.subr.bf16.mxu0 0
    %2598 = vmatpush1.bf16.msra.mxu0 0
    %2599 = vmatprep.subr.bf16.mxu0 0
    %2600 = vmatpush1.bf16.msra.mxu0 0
    %2601 = vmatprep.mubr.bf16.mxu0 0
    %2602 = vmatmul.mubr.bf16.gmra.mrb[0].mxu0 %v2567
    %v2603 = vpop.f32.mrb[0].mxu0
    %v2604 = vadd.f32 0.0, %v2603
    %v2605 = vpop.f32.mrb[0].mxu0
    %v2606 = vadd.f32 0.0, %v2605
    %v2607 = vpop.f32.mrb[0].mxu0
    %v2608 = vpop.f32.mrb[0].mxu0
    %2609 = vdwg.mxu0
    %v2610 = vadd.f32 %v2510, %v2604
    %v2611 = vadd.f32 %v2511, %v2606
    %v2612 = vrot.slane %v2310, 6
    %v2614 = vrot.slane %v2314, 6
    %v2616 = vmax.f32 %v2612, %v2614
    %v2617 = vpack.c.bf16 %v2616, %v2616
    %v2618 = vld [vmem:[#allocation2 + $0x600] sm:$0xff]
    %v2619 = vld [vmem:[#allocation2 + $0x608] sm:$0xff]
    %v2620 = vld [vmem:[#allocation2 + $0x610] sm:$0xff]
    %v2621 = vld [vmem:[#allocation2 + $0x618] sm:$0xff]
    %v2622 = vld [vmem:[#allocation2 + $0x620] sm:$0xff]
    %v2623 = vld [vmem:[#allocation2 + $0x628] sm:$0xff]
    %v2624 = vld [vmem:[#allocation2 + $0x630] sm:$0xff]
    %v2625 = vld [vmem:[#allocation2 + $0x638] sm:$0xff]
    %v2634 = vunpack.c.l.b16 %v2618
    %v2635 = vunpack.c.h.b16 %v2618
    %v2636 = vunpack.c.l.b16 %v2619
    %v2637 = vunpack.c.h.b16 %v2619
    %v2638 = vunpack.c.l.b16 %v2620
    %v2639 = vunpack.c.h.b16 %v2620
    %v2640 = vunpack.c.l.b16 %v2621
    %v2641 = vunpack.c.h.b16 %v2621
    %v2642 = vunpack.c.l.b16 %v2622
    %v2643 = vunpack.c.h.b16 %v2622
    %v2644 = vunpack.c.l.b16 %v2623
    %v2645 = vunpack.c.h.b16 %v2623
    %v2646 = vunpack.c.l.b16 %v2624
    %v2647 = vunpack.c.h.b16 %v2624
    %v2648 = vunpack.c.l.b16 %v2625
    %v2649 = vunpack.c.h.b16 %v2625
    %v2650 = vpack.c.b16 %v2636, %v2634
    %v2651 = vpack.c.b16 %v2637, %v2635
    %v2652 = vpack.c.b16 %v2640, %v2638
    %v2653 = vpack.c.b16 %v2641, %v2639
    %v2654 = vpack.c.b16 %v2644, %v2642
    %v2655 = vpack.c.b16 %v2645, %v2643
    %v2656 = vpack.c.b16 %v2648, %v2646
    %v2657 = vpack.c.b16 %v2649, %v2647
    %v2667 = vsel %vm253, %v2617, 0
    %2669 = vmatprep.subr.bf16.mxu0 %v2651
    %2670 = vmatpush1.bf16.msra.mxu0 %v2650
    %2671 = vmatprep.subr.bf16.mxu0 %v2653
    %2672 = vmatpush1.bf16.msra.mxu0 %v2652
    %2673 = vmatprep.subr.bf16.mxu0 %v2655
    %2674 = vmatpush1.bf16.msra.mxu0 %v2654
    %2675 = vmatprep.subr.bf16.mxu0 %v2657
    %2676 = vmatpush1.bf16.msra.mxu0 %v2656
    %2677 = vmatprep.subr.bf16.mxu0 0
    %2678 = vmatpush1.bf16.msra.mxu0 0
    %2679 = vmatprep.subr.bf16.mxu0 0
    %2680 = vmatpush1.bf16.msra.mxu0 0
    %2681 = vmatprep.subr.bf16.mxu0 0
    %2682 = vmatpush1.bf16.msra.mxu0 0
    %2683 = vmatprep.subr.bf16.mxu0 0
    %2684 = vmatpush1.bf16.msra.mxu0 0
    %2685 = vmatprep.subr.bf16.mxu0 0
    %2686 = vmatpush1.bf16.msra.mxu0 0
    %2687 = vmatprep.subr.bf16.mxu0 0
    %2688 = vmatpush1.bf16.msra.mxu0 0
    %2689 = vmatprep.subr.bf16.mxu0 0
    %2690 = vmatpush1.bf16.msra.mxu0 0
    %2691 = vmatprep.subr.bf16.mxu0 0
    %2692 = vmatpush1.bf16.msra.mxu0 0
    %2693 = vmatprep.subr.bf16.mxu0 0
    %2694 = vmatpush1.bf16.msra.mxu0 0
    %2695 = vmatprep.subr.bf16.mxu0 0
    %2696 = vmatpush1.bf16.msra.mxu0 0
    %2697 = vmatprep.subr.bf16.mxu0 0
    %2698 = vmatpush1.bf16.msra.mxu0 0
    %2699 = vmatprep.subr.bf16.mxu0 0
    %2700 = vmatpush1.bf16.msra.mxu0 0
    %2701 = vmatprep.mubr.bf16.mxu0 0
    %2702 = vmatmul.mubr.bf16.gmra.mrb[0].mxu0 %v2667
    %v2703 = vpop.f32.mrb[0].mxu0
    %v2704 = vadd.f32 0.0, %v2703
    %v2705 = vpop.f32.mrb[0].mxu0
    %v2706 = vadd.f32 0.0, %v2705
    %v2707 = vpop.f32.mrb[0].mxu0
    %v2708 = vpop.f32.mrb[0].mxu0
    %2709 = vdwg.mxu0
    %v2710 = vadd.f32 %v2610, %v2704
    %v2711 = vadd.f32 %v2611, %v2706
    %2713 = vrot.lane.b32.xlu0 %v2311, 64
    %v2714 = vpop.permute.xlu0 %2713
    %v2716 = vmax.f32 %v2311, %v2714
    %v2717 = vpack.c.bf16 %v2716, %v2716
    %v2718 = vld [vmem:[#allocation2 + $0x640] sm:$0xff]
    %v2719 = vld [vmem:[#allocation2 + $0x648] sm:$0xff]
    %v2720 = vld [vmem:[#allocation2 + $0x650] sm:$0xff]
    %v2721 = vld [vmem:[#allocation2 + $0x658] sm:$0xff]
    %v2722 = vld [vmem:[#allocation2 + $0x660] sm:$0xff]
    %v2723 = vld [vmem:[#allocation2 + $0x668] sm:$0xff]
    %v2724 = vld [vmem:[#allocation2 + $0x670] sm:$0xff]
    %v2725 = vld [vmem:[#allocation2 + $0x678] sm:$0xff]
    %v2734 = vunpack.c.l.b16 %v2718
    %v2735 = vunpack.c.h.b16 %v2718
    %v2736 = vunpack.c.l.b16 %v2719
    %v2737 = vunpack.c.h.b16 %v2719
    %v2738 = vunpack.c.l.b16 %v2720
    %v2739 = vunpack.c.h.b16 %v2720
    %v2740 = vunpack.c.l.b16 %v2721
    %v2741 = vunpack.c.h.b16 %v2721
    %v2742 = vunpack.c.l.b16 %v2722
    %v2743 = vunpack.c.h.b16 %v2722
    %v2744 = vunpack.c.l.b16 %v2723
    %v2745 = vunpack.c.h.b16 %v2723
    %v2746 = vunpack.c.l.b16 %v2724
    %v2747 = vunpack.c.h.b16 %v2724
    %v2748 = vunpack.c.l.b16 %v2725
    %v2749 = vunpack.c.h.b16 %v2725
    %v2750 = vpack.c.b16 %v2736, %v2734
    %v2751 = vpack.c.b16 %v2737, %v2735
    %v2752 = vpack.c.b16 %v2740, %v2738
    %v2753 = vpack.c.b16 %v2741, %v2739
    %v2754 = vpack.c.b16 %v2744, %v2742
    %v2755 = vpack.c.b16 %v2745, %v2743
    %v2756 = vpack.c.b16 %v2748, %v2746
    %v2757 = vpack.c.b16 %v2749, %v2747
    %v2767 = vsel %vm253, %v2717, 0
    %2769 = vmatprep.subr.bf16.mxu0 %v2751
    %2770 = vmatpush1.bf16.msra.mxu0 %v2750
    %2771 = vmatprep.subr.bf16.mxu0 %v2753
    %2772 = vmatpush1.bf16.msra.mxu0 %v2752
    %2773 = vmatprep.subr.bf16.mxu0 %v2755
    %2774 = vmatpush1.bf16.msra.mxu0 %v2754
    %2775 = vmatprep.subr.bf16.mxu0 %v2757
    %2776 = vmatpush1.bf16.msra.mxu0 %v2756
    %2777 = vmatprep.subr.bf16.mxu0 0
    %2778 = vmatpush1.bf16.msra.mxu0 0
    %2779 = vmatprep.subr.bf16.mxu0 0
    %2780 = vmatpush1.bf16.msra.mxu0 0
    %2781 = vmatprep.subr.bf16.mxu0 0
    %2782 = vmatpush1.bf16.msra.mxu0 0
    %2783 = vmatprep.subr.bf16.mxu0 0
    %2784 = vmatpush1.bf16.msra.mxu0 0
    %2785 = vmatprep.subr.bf16.mxu0 0
    %2786 = vmatpush1.bf16.msra.mxu0 0
    %2787 = vmatprep.subr.bf16.mxu0 0
    %2788 = vmatpush1.bf16.msra.mxu0 0
    %2789 = vmatprep.subr.bf16.mxu0 0
    %2790 = vmatpush1.bf16.msra.mxu0 0
    %2791 = vmatprep.subr.bf16.mxu0 0
    %2792 = vmatpush1.bf16.msra.mxu0 0
    %2793 = vmatprep.subr.bf16.mxu0 0
    %2794 = vmatpush1.bf16.msra.mxu0 0
    %2795 = vmatprep.subr.bf16.mxu0 0
    %2796 = vmatpush1.bf16.msra.mxu0 0
    %2797 = vmatprep.subr.bf16.mxu0 0
    %2798 = vmatpush1.bf16.msra.mxu0 0
    %2799 = vmatprep.subr.bf16.mxu0 0
    %2800 = vmatpush1.bf16.msra.mxu0 0
    %2801 = vmatprep.mubr.bf16.mxu0 0
    %2802 = vmatmul.mubr.bf16.gmra.mrb[0].mxu0 %v2767
    %v2803 = vpop.f32.mrb[0].mxu0
    %v2804 = vadd.f32 0.0, %v2803
    %v2805 = vpop.f32.mrb[0].mxu0
    %v2806 = vadd.f32 0.0, %v2805
    %v2807 = vpop.f32.mrb[0].mxu0
    %v2808 = vpop.f32.mrb[0].mxu0
    %2809 = vdwg.mxu0
    %v2810 = vadd.f32 %v2710, %v2804
    %v2811 = vadd.f32 %v2711, %v2806
    %v2812 = vrot.slane %v2311, 2
    %v2814 = vrot.slane %v2714, 2
    %v2816 = vmax.f32 %v2812, %v2814
    %v2817 = vpack.c.bf16 %v2816, %v2816
    %v2818 = vld [vmem:[#allocation2 + $0x680] sm:$0xff]
    %v2819 = vld [vmem:[#allocation2 + $0x688] sm:$0xff]
    %v2820 = vld [vmem:[#allocation2 + $0x690] sm:$0xff]
    %v2821 = vld [vmem:[#allocation2 + $0x698] sm:$0xff]
    %v2822 = vld [vmem:[#allocation2 + $0x6a0] sm:$0xff]
    %v2823 = vld [vmem:[#allocation2 + $0x6a8] sm:$0xff]
    %v2824 = vld [vmem:[#allocation2 + $0x6b0] sm:$0xff]
    %v2825 = vld [vmem:[#allocation2 + $0x6b8] sm:$0xff]
    %v2834 = vunpack.c.l.b16 %v2818
    %v2835 = vunpack.c.h.b16 %v2818
    %v2836 = vunpack.c.l.b16 %v2819
    %v2837 = vunpack.c.h.b16 %v2819
    %v2838 = vunpack.c.l.b16 %v2820
    %v2839 = vunpack.c.h.b16 %v2820
    %v2840 = vunpack.c.l.b16 %v2821
    %v2841 = vunpack.c.h.b16 %v2821
    %v2842 = vunpack.c.l.b16 %v2822
    %v2843 = vunpack.c.h.b16 %v2822
    %v2844 = vunpack.c.l.b16 %v2823
    %v2845 = vunpack.c.h.b16 %v2823
    %v2846 = vunpack.c.l.b16 %v2824
    %v2847 = vunpack.c.h.b16 %v2824
    %v2848 = vunpack.c.l.b16 %v2825
    %v2849 = vunpack.c.h.b16 %v2825
    %v2850 = vpack.c.b16 %v2836, %v2834
    %v2851 = vpack.c.b16 %v2837, %v2835
    %v2852 = vpack.c.b16 %v2840, %v2838
    %v2853 = vpack.c.b16 %v2841, %v2839
    %v2854 = vpack.c.b16 %v2844, %v2842
    %v2855 = vpack.c.b16 %v2845, %v2843
    %v2856 = vpack.c.b16 %v2848, %v2846
    %v2857 = vpack.c.b16 %v2849, %v2847
    %v2867 = vsel %vm253, %v2817, 0
    %2869 = vmatprep.subr.bf16.mxu0 %v2851
    %2870 = vmatpush1.bf16.msra.mxu0 %v2850
    %2871 = vmatprep.subr.bf16.mxu0 %v2853
    %2872 = vmatpush1.bf16.msra.mxu0 %v2852
    %2873 = vmatprep.subr.bf16.mxu0 %v2855
    %2874 = vmatpush1.bf16.msra.mxu0 %v2854
    %2875 = vmatprep.subr.bf16.mxu0 %v2857
    %2876 = vmatpush1.bf16.msra.mxu0 %v2856
    %2877 = vmatprep.subr.bf16.mxu0 0
    %2878 = vmatpush1.bf16.msra.mxu0 0
    %2879 = vmatprep.subr.bf16.mxu0 0
    %2880 = vmatpush1.bf16.msra.mxu0 0
    %2881 = vmatprep.subr.bf16.mxu0 0
    %2882 = vmatpush1.bf16.msra.mxu0 0
    %2883 = vmatprep.subr.bf16.mxu0 0
    %2884 = vmatpush1.bf16.msra.mxu0 0
    %2885 = vmatprep.subr.bf16.mxu0 0
    %2886 = vmatpush1.bf16.msra.mxu0 0
    %2887 = vmatprep.subr.bf16.mxu0 0
    %2888 = vmatpush1.bf16.msra.mxu0 0
    %2889 = vmatprep.subr.bf16.mxu0 0
    %2890 = vmatpush1.bf16.msra.mxu0 0
    %2891 = vmatprep.subr.bf16.mxu0 0
    %2892 = vmatpush1.bf16.msra.mxu0 0
    %2893 = vmatprep.subr.bf16.mxu0 0
    %2894 = vmatpush1.bf16.msra.mxu0 0
    %2895 = vmatprep.subr.bf16.mxu0 0
    %2896 = vmatpush1.bf16.msra.mxu0 0
    %2897 = vmatprep.subr.bf16.mxu0 0
    %2898 = vmatpush1.bf16.msra.mxu0 0
    %2899 = vmatprep.subr.bf16.mxu0 0
    %2900 = vmatpush1.bf16.msra.mxu0 0
    %2901 = vmatprep.mubr.bf16.mxu0 0
    %2902 = vmatmul.mubr.bf16.gmra.mrb[0].mxu0 %v2867
    %v2903 = vpop.f32.mrb[0].mxu0
    %v2904 = vadd.f32 0.0, %v2903
    %v2905 = vpop.f32.mrb[0].mxu0
    %v2906 = vadd.f32 0.0, %v2905
    %v2907 = vpop.f32.mrb[0].mxu0
    %v2908 = vpop.f32.mrb[0].mxu0
    %2909 = vdwg.mxu0
    %v2910 = vadd.f32 %v2810, %v2904
    %v2911 = vadd.f32 %v2811, %v2906
    %v2912 = vrot.slane %v2311, 4
    %v2914 = vrot.slane %v2714, 4
    %v2916 = vmax.f32 %v2912, %v2914
    %v2917 = vpack.c.bf16 %v2916, %v2916
    %v2918 = vld [vmem:[#allocation2 + $0x6c0] sm:$0xff]
    %v2919 = vld [vmem:[#allocation2 + $0x6c8] sm:$0xff]
    %v2920 = vld [vmem:[#allocation2 + $0x6d0] sm:$0xff]
    %v2921 = vld [vmem:[#allocation2 + $0x6d8] sm:$0xff]
    %v2922 = vld [vmem:[#allocation2 + $0x6e0] sm:$0xff]
    %v2923 = vld [vmem:[#allocation2 + $0x6e8] sm:$0xff]
    %v2924 = vld [vmem:[#allocation2 + $0x6f0] sm:$0xff]
    %v2925 = vld [vmem:[#allocation2 + $0x6f8] sm:$0xff]
    %v2934 = vunpack.c.l.b16 %v2918
    %v2935 = vunpack.c.h.b16 %v2918
    %v2936 = vunpack.c.l.b16 %v2919
    %v2937 = vunpack.c.h.b16 %v2919
    %v2938 = vunpack.c.l.b16 %v2920
    %v2939 = vunpack.c.h.b16 %v2920
    %v2940 = vunpack.c.l.b16 %v2921
    %v2941 = vunpack.c.h.b16 %v2921
    %v2942 = vunpack.c.l.b16 %v2922
    %v2943 = vunpack.c.h.b16 %v2922
    %v2944 = vunpack.c.l.b16 %v2923
    %v2945 = vunpack.c.h.b16 %v2923
    %v2946 = vunpack.c.l.b16 %v2924
    %v2947 = vunpack.c.h.b16 %v2924
    %v2948 = vunpack.c.l.b16 %v2925
    %v2949 = vunpack.c.h.b16 %v2925
    %v2950 = vpack.c.b16 %v2936, %v2934
    %v2951 = vpack.c.b16 %v2937, %v2935
    %v2952 = vpack.c.b16 %v2940, %v2938
    %v2953 = vpack.c.b16 %v2941, %v2939
    %v2954 = vpack.c.b16 %v2944, %v2942
    %v2955 = vpack.c.b16 %v2945, %v2943
    %v2956 = vpack.c.b16 %v2948, %v2946
    %v2957 = vpack.c.b16 %v2949, %v2947
    %v2967 = vsel %vm253, %v2917, 0
    %2969 = vmatprep.subr.bf16.mxu0 %v2951
    %2970 = vmatpush1.bf16.msra.mxu0 %v2950
    %2971 = vmatprep.subr.bf16.mxu0 %v2953
    %2972 = vmatpush1.bf16.msra.mxu0 %v2952
    %2973 = vmatprep.subr.bf16.mxu0 %v2955
    %2974 = vmatpush1.bf16.msra.mxu0 %v2954
    %2975 = vmatprep.subr.bf16.mxu0 %v2957
    %2976 = vmatpush1.bf16.msra.mxu0 %v2956
    %2977 = vmatprep.subr.bf16.mxu0 0
    %2978 = vmatpush1.bf16.msra.mxu0 0
    %2979 = vmatprep.subr.bf16.mxu0 0
    %2980 = vmatpush1.bf16.msra.mxu0 0
    %2981 = vmatprep.subr.bf16.mxu0 0
    %2982 = vmatpush1.bf16.msra.mxu0 0
    %2983 = vmatprep.subr.bf16.mxu0 0
    %2984 = vmatpush1.bf16.msra.mxu0 0
    %2985 = vmatprep.subr.bf16.mxu0 0
    %2986 = vmatpush1.bf16.msra.mxu0 0
    %2987 = vmatprep.subr.bf16.mxu0 0
    %2988 = vmatpush1.bf16.msra.mxu0 0
    %2989 = vmatprep.subr.bf16.mxu0 0
    %2990 = vmatpush1.bf16.msra.mxu0 0
    %2991 = vmatprep.subr.bf16.mxu0 0
    %2992 = vmatpush1.bf16.msra.mxu0 0
    %2993 = vmatprep.subr.bf16.mxu0 0
    %2994 = vmatpush1.bf16.msra.mxu0 0
    %2995 = vmatprep.subr.bf16.mxu0 0
    %2996 = vmatpush1.bf16.msra.mxu0 0
    %2997 = vmatprep.subr.bf16.mxu0 0
    %2998 = vmatpush1.bf16.msra.mxu0 0
    %2999 = vmatprep.subr.bf16.mxu0 0
    %3000 = vmatpush1.bf16.msra.mxu0 0
    %3001 = vmatprep.mubr.bf16.mxu0 0
    %3002 = vmatmul.mubr.bf16.gmra.mrb[0].mxu0 %v2967
    %v3003 = vpop.f32.mrb[0].mxu0
    %v3004 = vadd.f32 0.0, %v3003
    %v3005 = vpop.f32.mrb[0].mxu0
    %v3006 = vadd.f32 0.0, %v3005
    %v3007 = vpop.f32.mrb[0].mxu0
    %v3008 = vpop.f32.mrb[0].mxu0
    %3009 = vdwg.mxu0
    %v3010 = vadd.f32 %v2910, %v3004
    %v3011 = vadd.f32 %v2911, %v3006
    %v3012 = vld [vmem:[%s0 + $0x70] sm:$0xff]
    %v3013 = vld [vmem:[%s0 + $0x78] sm:$0x3f]
    %v3014 = vmul.f32 %v3012, %v158
    %v3015 = vmul.f32 %v3013, %v174
    %v3016 = vld [vmem:[%s0 + $0x7e] sm:$0xff]
    %v3017 = vld [vmem:[%s0 + $0x86] sm:$0x3f]
    %v3018 = vmul.f32 %v3016, %v158
    %v3019 = vmul.f32 %v3017, %v174
    %v3020 = vmax.f32 %v3014, %v3018
    %v3021 = vmax.f32 %v3015, %v3019
    %3023 = vrot.lane.b32.xlu0 %v3020, 64
    %v3024 = vpop.permute.xlu0 %3023
    %v3026 = vmax.f32 %v3020, %v3024
    %v3027 = vpack.c.bf16 %v3026, %v3026
    %v3028 = vld [vmem:[#allocation2 + $0x700] sm:$0xff]
    %v3029 = vld [vmem:[#allocation2 + $0x708] sm:$0xff]
    %v3030 = vld [vmem:[#allocation2 + $0x710] sm:$0xff]
    %v3031 = vld [vmem:[#allocation2 + $0x718] sm:$0xff]
    %v3032 = vld [vmem:[#allocation2 + $0x720] sm:$0xff]
    %v3033 = vld [vmem:[#allocation2 + $0x728] sm:$0xff]
    %v3034 = vld [vmem:[#allocation2 + $0x730] sm:$0xff]
    %v3035 = vld [vmem:[#allocation2 + $0x738] sm:$0xff]
    %v3044 = vunpack.c.l.b16 %v3028
    %v3045 = vunpack.c.h.b16 %v3028
    %v3046 = vunpack.c.l.b16 %v3029
    %v3047 = vunpack.c.h.b16 %v3029
    %v3048 = vunpack.c.l.b16 %v3030
    %v3049 = vunpack.c.h.b16 %v3030
    %v3050 = vunpack.c.l.b16 %v3031
    %v3051 = vunpack.c.h.b16 %v3031
    %v3052 = vunpack.c.l.b16 %v3032
    %v3053 = vunpack.c.h.b16 %v3032
    %v3054 = vunpack.c.l.b16 %v3033
    %v3055 = vunpack.c.h.b16 %v3033
    %v3056 = vunpack.c.l.b16 %v3034
    %v3057 = vunpack.c.h.b16 %v3034
    %v3058 = vunpack.c.l.b16 %v3035
    %v3059 = vunpack.c.h.b16 %v3035
    %v3060 = vpack.c.b16 %v3046, %v3044
    %v3061 = vpack.c.b16 %v3047, %v3045
    %v3062 = vpack.c.b16 %v3050, %v3048
    %v3063 = vpack.c.b16 %v3051, %v3049
    %v3064 = vpack.c.b16 %v3054, %v3052
    %v3065 = vpack.c.b16 %v3055, %v3053
    %v3066 = vpack.c.b16 %v3058, %v3056
    %v3067 = vpack.c.b16 %v3059, %v3057
    %v3077 = vsel %vm253, %v3027, 0
    %3079 = vmatprep.subr.bf16.mxu0 %v3061
    %3080 = vmatpush1.bf16.msra.mxu0 %v3060
    %3081 = vmatprep.subr.bf16.mxu0 %v3063
    %3082 = vmatpush1.bf16.msra.mxu0 %v3062
    %3083 = vmatprep.subr.bf16.mxu0 %v3065
    %3084 = vmatpush1.bf16.msra.mxu0 %v3064
    %3085 = vmatprep.subr.bf16.mxu0 %v3067
    %3086 = vmatpush1.bf16.msra.mxu0 %v3066
    %3087 = vmatprep.subr.bf16.mxu0 0
    %3088 = vmatpush1.bf16.msra.mxu0 0
    %3089 = vmatprep.subr.bf16.mxu0 0
    %3090 = vmatpush1.bf16.msra.mxu0 0
    %3091 = vmatprep.subr.bf16.mxu0 0
    %3092 = vmatpush1.bf16.msra.mxu0 0
    %3093 = vmatprep.subr.bf16.mxu0 0
    %3094 = vmatpush1.bf16.msra.mxu0 0
    %3095 = vmatprep.subr.bf16.mxu0 0
    %3096 = vmatpush1.bf16.msra.mxu0 0
    %3097 = vmatprep.subr.bf16.mxu0 0
    %3098 = vmatpush1.bf16.msra.mxu0 0
    %3099 = vmatprep.subr.bf16.mxu0 0
    %3100 = vmatpush1.bf16.msra.mxu0 0
    %3101 = vmatprep.subr.bf16.mxu0 0
    %3102 = vmatpush1.bf16.msra.mxu0 0
    %3103 = vmatprep.subr.bf16.mxu0 0
    %3104 = vmatpush1.bf16.msra.mxu0 0
    %3105 = vmatprep.subr.bf16.mxu0 0
    %3106 = vmatpush1.bf16.msra.mxu0 0
    %3107 = vmatprep.subr.bf16.mxu0 0
    %3108 = vmatpush1.bf16.msra.mxu0 0
    %3109 = vmatprep.subr.bf16.mxu0 0
    %3110 = vmatpush1.bf16.msra.mxu0 0
    %3111 = vmatprep.mubr.bf16.mxu0 0
    %3112 = vmatmul.mubr.bf16.gmra.mrb[0].mxu0 %v3077
    %v3113 = vpop.f32.mrb[0].mxu0
    %v3114 = vadd.f32 0.0, %v3113
    %v3115 = vpop.f32.mrb[0].mxu0
    %v3116 = vadd.f32 0.0, %v3115
    %v3117 = vpop.f32.mrb[0].mxu0
    %v3118 = vpop.f32.mrb[0].mxu0
    %3119 = vdwg.mxu0
    %v3120 = vadd.f32 %v3010, %v3114
    %v3121 = vadd.f32 %v3011, %v3116
    %v3122 = vrot.slane %v3020, 2
    %v3124 = vrot.slane %v3024, 2
    %v3126 = vmax.f32 %v3122, %v3124
    %v3127 = vpack.c.bf16 %v3126, %v3126
    %v3128 = vld [vmem:[#allocation2 + $0x740] sm:$0xff]
    %v3129 = vld [vmem:[#allocation2 + $0x748] sm:$0xff]
    %v3130 = vld [vmem:[#allocation2 + $0x750] sm:$0xff]
    %v3131 = vld [vmem:[#allocation2 + $0x758] sm:$0xff]
    %v3132 = vld [vmem:[#allocation2 + $0x760] sm:$0xff]
    %v3133 = vld [vmem:[#allocation2 + $0x768] sm:$0xff]
    %v3134 = vld [vmem:[#allocation2 + $0x770] sm:$0xff]
    %v3135 = vld [vmem:[#allocation2 + $0x778] sm:$0xff]
    %v3144 = vunpack.c.l.b16 %v3128
    %v3145 = vunpack.c.h.b16 %v3128
    %v3146 = vunpack.c.l.b16 %v3129
    %v3147 = vunpack.c.h.b16 %v3129
    %v3148 = vunpack.c.l.b16 %v3130
    %v3149 = vunpack.c.h.b16 %v3130
    %v3150 = vunpack.c.l.b16 %v3131
    %v3151 = vunpack.c.h.b16 %v3131
    %v3152 = vunpack.c.l.b16 %v3132
    %v3153 = vunpack.c.h.b16 %v3132
    %v3154 = vunpack.c.l.b16 %v3133
    %v3155 = vunpack.c.h.b16 %v3133
    %v3156 = vunpack.c.l.b16 %v3134
    %v3157 = vunpack.c.h.b16 %v3134
    %v3158 = vunpack.c.l.b16 %v3135
    %v3159 = vunpack.c.h.b16 %v3135
    %v3160 = vpack.c.b16 %v3146, %v3144
    %v3161 = vpack.c.b16 %v3147, %v3145
    %v3162 = vpack.c.b16 %v3150, %v3148
    %v3163 = vpack.c.b16 %v3151, %v3149
    %v3164 = vpack.c.b16 %v3154, %v3152
    %v3165 = vpack.c.b16 %v3155, %v3153
    %v3166 = vpack.c.b16 %v3158, %v3156
    %v3167 = vpack.c.b16 %v3159, %v3157
    %v3177 = vsel %vm253, %v3127, 0
    %3179 = vmatprep.subr.bf16.mxu0 %v3161
    %3180 = vmatpush1.bf16.msra.mxu0 %v3160
    %3181 = vmatprep.subr.bf16.mxu0 %v3163
    %3182 = vmatpush1.bf16.msra.mxu0 %v3162
    %3183 = vmatprep.subr.bf16.mxu0 %v3165
    %3184 = vmatpush1.bf16.msra.mxu0 %v3164
    %3185 = vmatprep.subr.bf16.mxu0 %v3167
    %3186 = vmatpush1.bf16.msra.mxu0 %v3166
    %3187 = vmatprep.subr.bf16.mxu0 0
    %3188 = vmatpush1.bf16.msra.mxu0 0
    %3189 = vmatprep.subr.bf16.mxu0 0
    %3190 = vmatpush1.bf16.msra.mxu0 0
    %3191 = vmatprep.subr.bf16.mxu0 0
    %3192 = vmatpush1.bf16.msra.mxu0 0
    %3193 = vmatprep.subr.bf16.mxu0 0
    %3194 = vmatpush1.bf16.msra.mxu0 0
    %3195 = vmatprep.subr.bf16.mxu0 0
    %3196 = vmatpush1.bf16.msra.mxu0 0
    %3197 = vmatprep.subr.bf16.mxu0 0
    %3198 = vmatpush1.bf16.msra.mxu0 0
    %3199 = vmatprep.subr.bf16.mxu0 0
    %3200 = vmatpush1.bf16.msra.mxu0 0
    %3201 = vmatprep.subr.bf16.mxu0 0
    %3202 = vmatpush1.bf16.msra.mxu0 0
    %3203 = vmatprep.subr.bf16.mxu0 0
    %3204 = vmatpush1.bf16.msra.mxu0 0
    %3205 = vmatprep.subr.bf16.mxu0 0
    %3206 = vmatpush1.bf16.msra.mxu0 0
    %3207 = vmatprep.subr.bf16.mxu0 0
    %3208 = vmatpush1.bf16.msra.mxu0 0
    %3209 = vmatprep.subr.bf16.mxu0 0
    %3210 = vmatpush1.bf16.msra.mxu0 0
    %3211 = vmatprep.mubr.bf16.mxu0 0
    %3212 = vmatmul.mubr.bf16.gmra.mrb[0].mxu0 %v3177
    %v3213 = vpop.f32.mrb[0].mxu0
    %v3214 = vadd.f32 0.0, %v3213
    %v3215 = vpop.f32.mrb[0].mxu0
    %v3216 = vadd.f32 0.0, %v3215
    %v3217 = vpop.f32.mrb[0].mxu0
    %v3218 = vpop.f32.mrb[0].mxu0
    %3219 = vdwg.mxu0
    %v3220 = vadd.f32 %v3120, %v3214
    %v3221 = vadd.f32 %v3121, %v3216
    %v3222 = vrot.slane %v3020, 4
    %v3224 = vrot.slane %v3024, 4
    %v3226 = vmax.f32 %v3222, %v3224
    %v3227 = vpack.c.bf16 %v3226, %v3226
    %v3228 = vld [vmem:[#allocation2 + $0x780] sm:$0xff]
    %v3229 = vld [vmem:[#allocation2 + $0x788] sm:$0xff]
    %v3230 = vld [vmem:[#allocation2 + $0x790] sm:$0xff]
    %v3231 = vld [vmem:[#allocation2 + $0x798] sm:$0xff]
    %v3232 = vld [vmem:[#allocation2 + $0x7a0] sm:$0xff]
    %v3233 = vld [vmem:[#allocation2 + $0x7a8] sm:$0xff]
    %v3234 = vld [vmem:[#allocation2 + $0x7b0] sm:$0xff]
    %v3235 = vld [vmem:[#allocation2 + $0x7b8] sm:$0xff]
    %v3244 = vunpack.c.l.b16 %v3228
    %v3245 = vunpack.c.h.b16 %v3228
    %v3246 = vunpack.c.l.b16 %v3229
    %v3247 = vunpack.c.h.b16 %v3229
    %v3248 = vunpack.c.l.b16 %v3230
    %v3249 = vunpack.c.h.b16 %v3230
    %v3250 = vunpack.c.l.b16 %v3231
    %v3251 = vunpack.c.h.b16 %v3231
    %v3252 = vunpack.c.l.b16 %v3232
    %v3253 = vunpack.c.h.b16 %v3232
    %v3254 = vunpack.c.l.b16 %v3233
    %v3255 = vunpack.c.h.b16 %v3233
    %v3256 = vunpack.c.l.b16 %v3234
    %v3257 = vunpack.c.h.b16 %v3234
    %v3258 = vunpack.c.l.b16 %v3235
    %v3259 = vunpack.c.h.b16 %v3235
    %v3260 = vpack.c.b16 %v3246, %v3244
    %v3261 = vpack.c.b16 %v3247, %v3245
    %v3262 = vpack.c.b16 %v3250, %v3248
    %v3263 = vpack.c.b16 %v3251, %v3249
    %v3264 = vpack.c.b16 %v3254, %v3252
    %v3265 = vpack.c.b16 %v3255, %v3253
    %v3266 = vpack.c.b16 %v3258, %v3256
    %v3267 = vpack.c.b16 %v3259, %v3257
    %v3277 = vsel %vm253, %v3227, 0
    %3279 = vmatprep.subr.bf16.mxu0 %v3261
    %3280 = vmatpush1.bf16.msra.mxu0 %v3260
    %3281 = vmatprep.subr.bf16.mxu0 %v3263
    %3282 = vmatpush1.bf16.msra.mxu0 %v3262
    %3283 = vmatprep.subr.bf16.mxu0 %v3265
    %3284 = vmatpush1.bf16.msra.mxu0 %v3264
    %3285 = vmatprep.subr.bf16.mxu0 %v3267
    %3286 = vmatpush1.bf16.msra.mxu0 %v3266
    %3287 = vmatprep.subr.bf16.mxu0 0
    %3288 = vmatpush1.bf16.msra.mxu0 0
    %3289 = vmatprep.subr.bf16.mxu0 0
    %3290 = vmatpush1.bf16.msra.mxu0 0
    %3291 = vmatprep.subr.bf16.mxu0 0
    %3292 = vmatpush1.bf16.msra.mxu0 0
    %3293 = vmatprep.subr.bf16.mxu0 0
    %3294 = vmatpush1.bf16.msra.mxu0 0
    %3295 = vmatprep.subr.bf16.mxu0 0
    %3296 = vmatpush1.bf16.msra.mxu0 0
    %3297 = vmatprep.subr.bf16.mxu0 0
    %3298 = vmatpush1.bf16.msra.mxu0 0
    %3299 = vmatprep.subr.bf16.mxu0 0
    %3300 = vmatpush1.bf16.msra.mxu0 0
    %3301 = vmatprep.subr.bf16.mxu0 0
    %3302 = vmatpush1.bf16.msra.mxu0 0
    %3303 = vmatprep.subr.bf16.mxu0 0
    %3304 = vmatpush1.bf16.msra.mxu0 0
    %3305 = vmatprep.subr.bf16.mxu0 0
    %3306 = vmatpush1.bf16.msra.mxu0 0
    %3307 = vmatprep.subr.bf16.mxu0 0
    %3308 = vmatpush1.bf16.msra.mxu0 0
    %3309 = vmatprep.subr.bf16.mxu0 0
    %3310 = vmatpush1.bf16.msra.mxu0 0
    %3311 = vmatprep.mubr.bf16.mxu0 0
    %3312 = vmatmul.mubr.bf16.gmra.mrb[0].mxu0 %v3277
    %v3313 = vpop.f32.mrb[0].mxu0
    %v3314 = vadd.f32 0.0, %v3313
    %v3315 = vpop.f32.mrb[0].mxu0
    %v3316 = vadd.f32 0.0, %v3315
    %v3317 = vpop.f32.mrb[0].mxu0
    %v3318 = vpop.f32.mrb[0].mxu0
    %3319 = vdwg.mxu0
    %v3320 = vadd.f32 %v3220, %v3314
    %v3321 = vadd.f32 %v3221, %v3316
    %v3322 = vrot.slane %v3020, 6
    %v3324 = vrot.slane %v3024, 6
    %v3326 = vmax.f32 %v3322, %v3324
    %v3327 = vpack.c.bf16 %v3326, %v3326
    %v3328 = vld [vmem:[#allocation2 + $0x7c0] sm:$0xff]
    %v3329 = vld [vmem:[#allocation2 + $0x7c8] sm:$0xff]
    %v3330 = vld [vmem:[#allocation2 + $0x7d0] sm:$0xff]
    %v3331 = vld [vmem:[#allocation2 + $0x7d8] sm:$0xff]
    %v3332 = vld [vmem:[#allocation2 + $0x7e0] sm:$0xff]
    %v3333 = vld [vmem:[#allocation2 + $0x7e8] sm:$0xff]
    %v3334 = vld [vmem:[#allocation2 + $0x7f0] sm:$0xff]
    %v3335 = vld [vmem:[#allocation2 + $0x7f8] sm:$0xff]
    %v3344 = vunpack.c.l.b16 %v3328
    %v3345 = vunpack.c.h.b16 %v3328
    %v3346 = vunpack.c.l.b16 %v3329
    %v3347 = vunpack.c.h.b16 %v3329
    %v3348 = vunpack.c.l.b16 %v3330
    %v3349 = vunpack.c.h.b16 %v3330
    %v3350 = vunpack.c.l.b16 %v3331
    %v3351 = vunpack.c.h.b16 %v3331
    %v3352 = vunpack.c.l.b16 %v3332
    %v3353 = vunpack.c.h.b16 %v3332
    %v3354 = vunpack.c.l.b16 %v3333
    %v3355 = vunpack.c.h.b16 %v3333
    %v3356 = vunpack.c.l.b16 %v3334
    %v3357 = vunpack.c.h.b16 %v3334
    %v3358 = vunpack.c.l.b16 %v3335
    %v3359 = vunpack.c.h.b16 %v3335
    %v3360 = vpack.c.b16 %v3346, %v3344
    %v3361 = vpack.c.b16 %v3347, %v3345
    %v3362 = vpack.c.b16 %v3350, %v3348
    %v3363 = vpack.c.b16 %v3351, %v3349
    %v3364 = vpack.c.b16 %v3354, %v3352
    %v3365 = vpack.c.b16 %v3355, %v3353
    %v3366 = vpack.c.b16 %v3358, %v3356
    %v3367 = vpack.c.b16 %v3359, %v3357
    %v3377 = vsel %vm253, %v3327, 0
    %3379 = vmatprep.subr.bf16.mxu0 %v3361
    %3380 = vmatpush1.bf16.msra.mxu0 %v3360
    %3381 = vmatprep.subr.bf16.mxu0 %v3363
    %3382 = vmatpush1.bf16.msra.mxu0 %v3362
    %3383 = vmatprep.subr.bf16.mxu0 %v3365
    %3384 = vmatpush1.bf16.msra.mxu0 %v3364
    %3385 = vmatprep.subr.bf16.mxu0 %v3367
    %3386 = vmatpush1.bf16.msra.mxu0 %v3366
    %3387 = vmatprep.subr.bf16.mxu0 0
    %3388 = vmatpush1.bf16.msra.mxu0 0
    %3389 = vmatprep.subr.bf16.mxu0 0
    %3390 = vmatpush1.bf16.msra.mxu0 0
    %3391 = vmatprep.subr.bf16.mxu0 0
    %3392 = vmatpush1.bf16.msra.mxu0 0
    %3393 = vmatprep.subr.bf16.mxu0 0
    %3394 = vmatpush1.bf16.msra.mxu0 0
    %3395 = vmatprep.subr.bf16.mxu0 0
    %3396 = vmatpush1.bf16.msra.mxu0 0
    %3397 = vmatprep.subr.bf16.mxu0 0
    %3398 = vmatpush1.bf16.msra.mxu0 0
    %3399 = vmatprep.subr.bf16.mxu0 0
    %3400 = vmatpush1.bf16.msra.mxu0 0
    %3401 = vmatprep.subr.bf16.mxu0 0
    %3402 = vmatpush1.bf16.msra.mxu0 0
    %3403 = vmatprep.subr.bf16.mxu0 0
    %3404 = vmatpush1.bf16.msra.mxu0 0
    %3405 = vmatprep.subr.bf16.mxu0 0
    %3406 = vmatpush1.bf16.msra.mxu0 0
    %3407 = vmatprep.subr.bf16.mxu0 0
    %3408 = vmatpush1.bf16.msra.mxu0 0
    %3409 = vmatprep.subr.bf16.mxu0 0
    %3410 = vmatpush1.bf16.msra.mxu0 0
    %3411 = vmatprep.mubr.bf16.mxu0 0
    %3412 = vmatmul.mubr.bf16.gmra.mrb[0].mxu0 %v3377
    %v3413 = vpop.f32.mrb[0].mxu0
    %v3414 = vadd.f32 0.0, %v3413
    %v3415 = vpop.f32.mrb[0].mxu0
    %v3416 = vadd.f32 0.0, %v3415
    %v3417 = vpop.f32.mrb[0].mxu0
    %v3418 = vpop.f32.mrb[0].mxu0
    %3419 = vdwg.mxu0
    %v3420 = vadd.f32 %v3320, %v3414
    %v3421 = vadd.f32 %v3321, %v3416
    %3423 = vrot.lane.b32.xlu0 %v3021, 64
    %v3424 = vpop.permute.xlu0 %3423
    %v3426 = vmax.f32 %v3021, %v3424
    %v3427 = vpack.c.bf16 %v3426, %v3426
    %v3428 = vld [vmem:[#allocation2 + $0x800] sm:$0xff]
    %v3429 = vld [vmem:[#allocation2 + $0x808] sm:$0xff]
    %v3430 = vld [vmem:[#allocation2 + $0x810] sm:$0xff]
    %v3431 = vld [vmem:[#allocation2 + $0x818] sm:$0xff]
    %v3432 = vld [vmem:[#allocation2 + $0x820] sm:$0xff]
    %v3433 = vld [vmem:[#allocation2 + $0x828] sm:$0xff]
    %v3434 = vld [vmem:[#allocation2 + $0x830] sm:$0xff]
    %v3435 = vld [vmem:[#allocation2 + $0x838] sm:$0xff]
    %v3444 = vunpack.c.l.b16 %v3428
    %v3445 = vunpack.c.h.b16 %v3428
    %v3446 = vunpack.c.l.b16 %v3429
    %v3447 = vunpack.c.h.b16 %v3429
    %v3448 = vunpack.c.l.b16 %v3430
    %v3449 = vunpack.c.h.b16 %v3430
    %v3450 = vunpack.c.l.b16 %v3431
    %v3451 = vunpack.c.h.b16 %v3431
    %v3452 = vunpack.c.l.b16 %v3432
    %v3453 = vunpack.c.h.b16 %v3432
    %v3454 = vunpack.c.l.b16 %v3433
    %v3455 = vunpack.c.h.b16 %v3433
    %v3456 = vunpack.c.l.b16 %v3434
    %v3457 = vunpack.c.h.b16 %v3434
    %v3458 = vunpack.c.l.b16 %v3435
    %v3459 = vunpack.c.h.b16 %v3435
    %v3460 = vpack.c.b16 %v3446, %v3444
    %v3461 = vpack.c.b16 %v3447, %v3445
    %v3462 = vpack.c.b16 %v3450, %v3448
    %v3463 = vpack.c.b16 %v3451, %v3449
    %v3464 = vpack.c.b16 %v3454, %v3452
    %v3465 = vpack.c.b16 %v3455, %v3453
    %v3466 = vpack.c.b16 %v3458, %v3456
    %v3467 = vpack.c.b16 %v3459, %v3457
    %v3477 = vsel %vm253, %v3427, 0
    %3479 = vmatprep.subr.bf16.mxu0 %v3461
    %3480 = vmatpush1.bf16.msra.mxu0 %v3460
    %3481 = vmatprep.subr.bf16.mxu0 %v3463
    %3482 = vmatpush1.bf16.msra.mxu0 %v3462
    %3483 = vmatprep.subr.bf16.mxu0 %v3465
    %3484 = vmatpush1.bf16.msra.mxu0 %v3464
    %3485 = vmatprep.subr.bf16.mxu0 %v3467
    %3486 = vmatpush1.bf16.msra.mxu0 %v3466
    %3487 = vmatprep.subr.bf16.mxu0 0
    %3488 = vmatpush1.bf16.msra.mxu0 0
    %3489 = vmatprep.subr.bf16.mxu0 0
    %3490 = vmatpush1.bf16.msra.mxu0 0
    %3491 = vmatprep.subr.bf16.mxu0 0
    %3492 = vmatpush1.bf16.msra.mxu0 0
    %3493 = vmatprep.subr.bf16.mxu0 0
    %3494 = vmatpush1.bf16.msra.mxu0 0
    %3495 = vmatprep.subr.bf16.mxu0 0
    %3496 = vmatpush1.bf16.msra.mxu0 0
    %3497 = vmatprep.subr.bf16.mxu0 0
    %3498 = vmatpush1.bf16.msra.mxu0 0
    %3499 = vmatprep.subr.bf16.mxu0 0
    %3500 = vmatpush1.bf16.msra.mxu0 0
    %3501 = vmatprep.subr.bf16.mxu0 0
    %3502 = vmatpush1.bf16.msra.mxu0 0
    %3503 = vmatprep.subr.bf16.mxu0 0
    %3504 = vmatpush1.bf16.msra.mxu0 0
    %3505 = vmatprep.subr.bf16.mxu0 0
    %3506 = vmatpush1.bf16.msra.mxu0 0
    %3507 = vmatprep.subr.bf16.mxu0 0
    %3508 = vmatpush1.bf16.msra.mxu0 0
    %3509 = vmatprep.subr.bf16.mxu0 0
    %3510 = vmatpush1.bf16.msra.mxu0 0
    %3511 = vmatprep.mubr.bf16.mxu0 0
    %3512 = vmatmul.mubr.bf16.gmra.mrb[0].mxu0 %v3477
    %v3513 = vpop.f32.mrb[0].mxu0
    %v3514 = vadd.f32 0.0, %v3513
    %v3515 = vpop.f32.mrb[0].mxu0
    %v3516 = vadd.f32 0.0, %v3515
    %v3517 = vpop.f32.mrb[0].mxu0
    %v3518 = vpop.f32.mrb[0].mxu0
    %3519 = vdwg.mxu0
    %v3520 = vadd.f32 %v3420, %v3514
    %v3521 = vadd.f32 %v3421, %v3516
    %v3522 = vrot.slane %v3021, 2
    %v3524 = vrot.slane %v3424, 2
    %v3526 = vmax.f32 %v3522, %v3524
    %v3527 = vpack.c.bf16 %v3526, %v3526
    %v3528 = vld [vmem:[#allocation2 + $0x840] sm:$0xff]
    %v3529 = vld [vmem:[#allocation2 + $0x848] sm:$0xff]
    %v3530 = vld [vmem:[#allocation2 + $0x850] sm:$0xff]
    %v3531 = vld [vmem:[#allocation2 + $0x858] sm:$0xff]
    %v3532 = vld [vmem:[#allocation2 + $0x860] sm:$0xff]
    %v3533 = vld [vmem:[#allocation2 + $0x868] sm:$0xff]
    %v3534 = vld [vmem:[#allocation2 + $0x870] sm:$0xff]
    %v3535 = vld [vmem:[#allocation2 + $0x878] sm:$0xff]
    %v3544 = vunpack.c.l.b16 %v3528
    %v3545 = vunpack.c.h.b16 %v3528
    %v3546 = vunpack.c.l.b16 %v3529
    %v3547 = vunpack.c.h.b16 %v3529
    %v3548 = vunpack.c.l.b16 %v3530
    %v3549 = vunpack.c.h.b16 %v3530
    %v3550 = vunpack.c.l.b16 %v3531
    %v3551 = vunpack.c.h.b16 %v3531
    %v3552 = vunpack.c.l.b16 %v3532
    %v3553 = vunpack.c.h.b16 %v3532
    %v3554 = vunpack.c.l.b16 %v3533
    %v3555 = vunpack.c.h.b16 %v3533
    %v3556 = vunpack.c.l.b16 %v3534
    %v3557 = vunpack.c.h.b16 %v3534
    %v3558 = vunpack.c.l.b16 %v3535
    %v3559 = vunpack.c.h.b16 %v3535
    %v3560 = vpack.c.b16 %v3546, %v3544
    %v3561 = vpack.c.b16 %v3547, %v3545
    %v3562 = vpack.c.b16 %v3550, %v3548
    %v3563 = vpack.c.b16 %v3551, %v3549
    %v3564 = vpack.c.b16 %v3554, %v3552
    %v3565 = vpack.c.b16 %v3555, %v3553
    %v3566 = vpack.c.b16 %v3558, %v3556
    %v3567 = vpack.c.b16 %v3559, %v3557
    %v3577 = vsel %vm253, %v3527, 0
    %3579 = vmatprep.subr.bf16.mxu0 %v3561
    %3580 = vmatpush1.bf16.msra.mxu0 %v3560
    %3581 = vmatprep.subr.bf16.mxu0 %v3563
    %3582 = vmatpush1.bf16.msra.mxu0 %v3562
    %3583 = vmatprep.subr.bf16.mxu0 %v3565
    %3584 = vmatpush1.bf16.msra.mxu0 %v3564
    %3585 = vmatprep.subr.bf16.mxu0 %v3567
    %3586 = vmatpush1.bf16.msra.mxu0 %v3566
    %3587 = vmatprep.subr.bf16.mxu0 0
    %3588 = vmatpush1.bf16.msra.mxu0 0
    %3589 = vmatprep.subr.bf16.mxu0 0
    %3590 = vmatpush1.bf16.msra.mxu0 0
    %3591 = vmatprep.subr.bf16.mxu0 0
    %3592 = vmatpush1.bf16.msra.mxu0 0
    %3593 = vmatprep.subr.bf16.mxu0 0
    %3594 = vmatpush1.bf16.msra.mxu0 0
    %3595 = vmatprep.subr.bf16.mxu0 0
    %3596 = vmatpush1.bf16.msra.mxu0 0
    %3597 = vmatprep.subr.bf16.mxu0 0
    %3598 = vmatpush1.bf16.msra.mxu0 0
    %3599 = vmatprep.subr.bf16.mxu0 0
    %3600 = vmatpush1.bf16.msra.mxu0 0
    %3601 = vmatprep.subr.bf16.mxu0 0
    %3602 = vmatpush1.bf16.msra.mxu0 0
    %3603 = vmatprep.subr.bf16.mxu0 0
    %3604 = vmatpush1.bf16.msra.mxu0 0
    %3605 = vmatprep.subr.bf16.mxu0 0
    %3606 = vmatpush1.bf16.msra.mxu0 0
    %3607 = vmatprep.subr.bf16.mxu0 0
    %3608 = vmatpush1.bf16.msra.mxu0 0
    %3609 = vmatprep.subr.bf16.mxu0 0
    %3610 = vmatpush1.bf16.msra.mxu0 0
    %3611 = vmatprep.mubr.bf16.mxu0 0
    %3612 = vmatmul.mubr.bf16.gmra.mrb[0].mxu0 %v3577
    %v3613 = vpop.f32.mrb[0].mxu0
    %v3614 = vadd.f32 0.0, %v3613
    %v3615 = vpop.f32.mrb[0].mxu0
    %v3616 = vadd.f32 0.0, %v3615
    %v3617 = vpop.f32.mrb[0].mxu0
    %v3618 = vpop.f32.mrb[0].mxu0
    %3619 = vdwg.mxu0
    %v3620 = vadd.f32 %v3520, %v3614
    %v3621 = vadd.f32 %v3521, %v3616
    %v3622 = vrot.slane %v3021, 4
    %v3624 = vrot.slane %v3424, 4
    %v3626 = vmax.f32 %v3622, %v3624
    %v3627 = vpack.c.bf16 %v3626, %v3626
    %v3628 = vld [vmem:[#allocation2 + $0x880] sm:$0xff]
    %v3629 = vld [vmem:[#allocation2 + $0x888] sm:$0xff]
    %v3630 = vld [vmem:[#allocation2 + $0x890] sm:$0xff]
    %v3631 = vld [vmem:[#allocation2 + $0x898] sm:$0xff]
    %v3632 = vld [vmem:[#allocation2 + $0x8a0] sm:$0xff]
    %v3633 = vld [vmem:[#allocation2 + $0x8a8] sm:$0xff]
    %v3634 = vld [vmem:[#allocation2 + $0x8b0] sm:$0xff]
    %v3635 = vld [vmem:[#allocation2 + $0x8b8] sm:$0xff]
    %v3644 = vunpack.c.l.b16 %v3628
    %v3645 = vunpack.c.h.b16 %v3628
    %v3646 = vunpack.c.l.b16 %v3629
    %v3647 = vunpack.c.h.b16 %v3629
    %v3648 = vunpack.c.l.b16 %v3630
    %v3649 = vunpack.c.h.b16 %v3630
    %v3650 = vunpack.c.l.b16 %v3631
    %v3651 = vunpack.c.h.b16 %v3631
    %v3652 = vunpack.c.l.b16 %v3632
    %v3653 = vunpack.c.h.b16 %v3632
    %v3654 = vunpack.c.l.b16 %v3633
    %v3655 = vunpack.c.h.b16 %v3633
    %v3656 = vunpack.c.l.b16 %v3634
    %v3657 = vunpack.c.h.b16 %v3634
    %v3658 = vunpack.c.l.b16 %v3635
    %v3659 = vunpack.c.h.b16 %v3635
    %v3660 = vpack.c.b16 %v3646, %v3644
    %v3661 = vpack.c.b16 %v3647, %v3645
    %v3662 = vpack.c.b16 %v3650, %v3648
    %v3663 = vpack.c.b16 %v3651, %v3649
    %v3664 = vpack.c.b16 %v3654, %v3652
    %v3665 = vpack.c.b16 %v3655, %v3653
    %v3666 = vpack.c.b16 %v3658, %v3656
    %v3667 = vpack.c.b16 %v3659, %v3657
    %v3677 = vsel %vm253, %v3627, 0
    %3679 = vmatprep.subr.bf16.mxu0 %v3661
    %3680 = vmatpush1.bf16.msra.mxu0 %v3660
    %3681 = vmatprep.subr.bf16.mxu0 %v3663
    %3682 = vmatpush1.bf16.msra.mxu0 %v3662
    %3683 = vmatprep.subr.bf16.mxu0 %v3665
    %3684 = vmatpush1.bf16.msra.mxu0 %v3664
    %3685 = vmatprep.subr.bf16.mxu0 %v3667
    %3686 = vmatpush1.bf16.msra.mxu0 %v3666
    %3687 = vmatprep.subr.bf16.mxu0 0
    %3688 = vmatpush1.bf16.msra.mxu0 0
    %3689 = vmatprep.subr.bf16.mxu0 0
    %3690 = vmatpush1.bf16.msra.mxu0 0
    %3691 = vmatprep.subr.bf16.mxu0 0
    %3692 = vmatpush1.bf16.msra.mxu0 0
    %3693 = vmatprep.subr.bf16.mxu0 0
    %3694 = vmatpush1.bf16.msra.mxu0 0
    %3695 = vmatprep.subr.bf16.mxu0 0
    %3696 = vmatpush1.bf16.msra.mxu0 0
    %3697 = vmatprep.subr.bf16.mxu0 0
    %3698 = vmatpush1.bf16.msra.mxu0 0
    %3699 = vmatprep.subr.bf16.mxu0 0
    %3700 = vmatpush1.bf16.msra.mxu0 0
    %3701 = vmatprep.subr.bf16.mxu0 0
    %3702 = vmatpush1.bf16.msra.mxu0 0
    %3703 = vmatprep.subr.bf16.mxu0 0
    %3704 = vmatpush1.bf16.msra.mxu0 0
    %3705 = vmatprep.subr.bf16.mxu0 0
    %3706 = vmatpush1.bf16.msra.mxu0 0
    %3707 = vmatprep.subr.bf16.mxu0 0
    %3708 = vmatpush1.bf16.msra.mxu0 0
    %3709 = vmatprep.subr.bf16.mxu0 0
    %3710 = vmatpush1.bf16.msra.mxu0 0
    %3711 = vmatprep.mubr.bf16.mxu0 0
    %3712 = vmatmul.mubr.bf16.gmra.mrb[0].mxu0 %v3677
    %v3713 = vpop.f32.mrb[0].mxu0
    %v3714 = vadd.f32 0.0, %v3713
    %v3715 = vpop.f32.mrb[0].mxu0
    %v3716 = vadd.f32 0.0, %v3715
    %v3717 = vpop.f32.mrb[0].mxu0
    %v3718 = vpop.f32.mrb[0].mxu0
    %3719 = vdwg.mxu0
    %v3720 = vadd.f32 %v3620, %v3714
    %v3721 = vadd.f32 %v3621, %v3716
    %v3722 = vld [vmem:[%s0 + $0x8c] sm:$0xff]
    %v3723 = vld [vmem:[%s0 + $0x94] sm:$0x3f]
    %v3724 = vmul.f32 %v3722, %v158
    %v3725 = vmul.f32 %v3723, %v174
    %v3726 = vld [vmem:[%s0 + $0x9a] sm:$0xff]
    %v3727 = vld [vmem:[%s0 + $0xa2] sm:$0x3f]
    %v3728 = vmul.f32 %v3726, %v158
    %v3729 = vmul.f32 %v3727, %v174
    %v3730 = vmax.f32 %v3724, %v3728
    %v3731 = vmax.f32 %v3725, %v3729
    %3733 = vrot.lane.b32.xlu0 %v3730, 64
    %v3734 = vpop.permute.xlu0 %3733
    %v3736 = vmax.f32 %v3730, %v3734
    %v3737 = vpack.c.bf16 %v3736, %v3736
    %v3738 = vld [vmem:[#allocation2 + $0x8c0] sm:$0xff]
    %v3739 = vld [vmem:[#allocation2 + $0x8c8] sm:$0xff]
    %v3740 = vld [vmem:[#allocation2 + $0x8d0] sm:$0xff]
    %v3741 = vld [vmem:[#allocation2 + $0x8d8] sm:$0xff]
    %v3742 = vld [vmem:[#allocation2 + $0x8e0] sm:$0xff]
    %v3743 = vld [vmem:[#allocation2 + $0x8e8] sm:$0xff]
    %v3744 = vld [vmem:[#allocation2 + $0x8f0] sm:$0xff]
    %v3745 = vld [vmem:[#allocation2 + $0x8f8] sm:$0xff]
    %v3754 = vunpack.c.l.b16 %v3738
    %v3755 = vunpack.c.h.b16 %v3738
    %v3756 = vunpack.c.l.b16 %v3739
    %v3757 = vunpack.c.h.b16 %v3739
    %v3758 = vunpack.c.l.b16 %v3740
    %v3759 = vunpack.c.h.b16 %v3740
    %v3760 = vunpack.c.l.b16 %v3741
    %v3761 = vunpack.c.h.b16 %v3741
    %v3762 = vunpack.c.l.b16 %v3742
    %v3763 = vunpack.c.h.b16 %v3742
    %v3764 = vunpack.c.l.b16 %v3743
    %v3765 = vunpack.c.h.b16 %v3743
    %v3766 = vunpack.c.l.b16 %v3744
    %v3767 = vunpack.c.h.b16 %v3744
    %v3768 = vunpack.c.l.b16 %v3745
    %v3769 = vunpack.c.h.b16 %v3745
    %v3770 = vpack.c.b16 %v3756, %v3754
    %v3771 = vpack.c.b16 %v3757, %v3755
    %v3772 = vpack.c.b16 %v3760, %v3758
    %v3773 = vpack.c.b16 %v3761, %v3759
    %v3774 = vpack.c.b16 %v3764, %v3762
    %v3775 = vpack.c.b16 %v3765, %v3763
    %v3776 = vpack.c.b16 %v3768, %v3766
    %v3777 = vpack.c.b16 %v3769, %v3767
    %v3787 = vsel %vm253, %v3737, 0
    %3789 = vmatprep.subr.bf16.mxu0 %v3771
    %3790 = vmatpush1.bf16.msra.mxu0 %v3770
    %3791 = vmatprep.subr.bf16.mxu0 %v3773
    %3792 = vmatpush1.bf16.msra.mxu0 %v3772
    %3793 = vmatprep.subr.bf16.mxu0 %v3775
    %3794 = vmatpush1.bf16.msra.mxu0 %v3774
    %3795 = vmatprep.subr.bf16.mxu0 %v3777
    %3796 = vmatpush1.bf16.msra.mxu0 %v3776
    %3797 = vmatprep.subr.bf16.mxu0 0
    %3798 = vmatpush1.bf16.msra.mxu0 0
    %3799 = vmatprep.subr.bf16.mxu0 0
    %3800 = vmatpush1.bf16.msra.mxu0 0
    %3801 = vmatprep.subr.bf16.mxu0 0
    %3802 = vmatpush1.bf16.msra.mxu0 0
    %3803 = vmatprep.subr.bf16.mxu0 0
    %3804 = vmatpush1.bf16.msra.mxu0 0
    %3805 = vmatprep.subr.bf16.mxu0 0
    %3806 = vmatpush1.bf16.msra.mxu0 0
    %3807 = vmatprep.subr.bf16.mxu0 0
    %3808 = vmatpush1.bf16.msra.mxu0 0
    %3809 = vmatprep.subr.bf16.mxu0 0
    %3810 = vmatpush1.bf16.msra.mxu0 0
    %3811 = vmatprep.subr.bf16.mxu0 0
    %3812 = vmatpush1.bf16.msra.mxu0 0
    %3813 = vmatprep.subr.bf16.mxu0 0
    %3814 = vmatpush1.bf16.msra.mxu0 0
    %3815 = vmatprep.subr.bf16.mxu0 0
    %3816 = vmatpush1.bf16.msra.mxu0 0
    %3817 = vmatprep.subr.bf16.mxu0 0
    %3818 = vmatpush1.bf16.msra.mxu0 0
    %3819 = vmatprep.subr.bf16.mxu0 0
    %3820 = vmatpush1.bf16.msra.mxu0 0
    %3821 = vmatprep.mubr.bf16.mxu0 0
    %3822 = vmatmul.mubr.bf16.gmra.mrb[0].mxu0 %v3787
    %v3823 = vpop.f32.mrb[0].mxu0
    %v3824 = vadd.f32 0.0, %v3823
    %v3825 = vpop.f32.mrb[0].mxu0
    %v3826 = vadd.f32 0.0, %v3825
    %v3827 = vpop.f32.mrb[0].mxu0
    %v3828 = vpop.f32.mrb[0].mxu0
    %3829 = vdwg.mxu0
    %v3830 = vadd.f32 %v3720, %v3824
    %v3831 = vadd.f32 %v3721, %v3826
    %v3832 = vrot.slane %v3730, 2
    %v3834 = vrot.slane %v3734, 2
    %v3836 = vmax.f32 %v3832, %v3834
    %v3837 = vpack.c.bf16 %v3836, %v3836
    %v3838 = vld [vmem:[#allocation2 + $0x900] sm:$0xff]
    %v3839 = vld [vmem:[#allocation2 + $0x908] sm:$0xff]
    %v3840 = vld [vmem:[#allocation2 + $0x910] sm:$0xff]
    %v3841 = vld [vmem:[#allocation2 + $0x918] sm:$0xff]
    %v3842 = vld [vmem:[#allocation2 + $0x920] sm:$0xff]
    %v3843 = vld [vmem:[#allocation2 + $0x928] sm:$0xff]
    %v3844 = vld [vmem:[#allocation2 + $0x930] sm:$0xff]
    %v3845 = vld [vmem:[#allocation2 + $0x938] sm:$0xff]
    %v3854 = vunpack.c.l.b16 %v3838
    %v3855 = vunpack.c.h.b16 %v3838
    %v3856 = vunpack.c.l.b16 %v3839
    %v3857 = vunpack.c.h.b16 %v3839
    %v3858 = vunpack.c.l.b16 %v3840
    %v3859 = vunpack.c.h.b16 %v3840
    %v3860 = vunpack.c.l.b16 %v3841
    %v3861 = vunpack.c.h.b16 %v3841
    %v3862 = vunpack.c.l.b16 %v3842
    %v3863 = vunpack.c.h.b16 %v3842
    %v3864 = vunpack.c.l.b16 %v3843
    %v3865 = vunpack.c.h.b16 %v3843
    %v3866 = vunpack.c.l.b16 %v3844
    %v3867 = vunpack.c.h.b16 %v3844
    %v3868 = vunpack.c.l.b16 %v3845
    %v3869 = vunpack.c.h.b16 %v3845
    %v3870 = vpack.c.b16 %v3856, %v3854
    %v3871 = vpack.c.b16 %v3857, %v3855
    %v3872 = vpack.c.b16 %v3860, %v3858
    %v3873 = vpack.c.b16 %v3861, %v3859
    %v3874 = vpack.c.b16 %v3864, %v3862
    %v3875 = vpack.c.b16 %v3865, %v3863
    %v3876 = vpack.c.b16 %v3868, %v3866
    %v3877 = vpack.c.b16 %v3869, %v3867
    %v3887 = vsel %vm253, %v3837, 0
    %3889 = vmatprep.subr.bf16.mxu0 %v3871
    %3890 = vmatpush1.bf16.msra.mxu0 %v3870
    %3891 = vmatprep.subr.bf16.mxu0 %v3873
    %3892 = vmatpush1.bf16.msra.mxu0 %v3872
    %3893 = vmatprep.subr.bf16.mxu0 %v3875
    %3894 = vmatpush1.bf16.msra.mxu0 %v3874
    %3895 = vmatprep.subr.bf16.mxu0 %v3877
    %3896 = vmatpush1.bf16.msra.mxu0 %v3876
    %3897 = vmatprep.subr.bf16.mxu0 0
    %3898 = vmatpush1.bf16.msra.mxu0 0
    %3899 = vmatprep.subr.bf16.mxu0 0
    %3900 = vmatpush1.bf16.msra.mxu0 0
    %3901 = vmatprep.subr.bf16.mxu0 0
    %3902 = vmatpush1.bf16.msra.mxu0 0
    %3903 = vmatprep.subr.bf16.mxu0 0
    %3904 = vmatpush1.bf16.msra.mxu0 0
    %3905 = vmatprep.subr.bf16.mxu0 0
    %3906 = vmatpush1.bf16.msra.mxu0 0
    %3907 = vmatprep.subr.bf16.mxu0 0
    %3908 = vmatpush1.bf16.msra.mxu0 0
    %3909 = vmatprep.subr.bf16.mxu0 0
    %3910 = vmatpush1.bf16.msra.mxu0 0
    %3911 = vmatprep.subr.bf16.mxu0 0
    %3912 = vmatpush1.bf16.msra.mxu0 0
    %3913 = vmatprep.subr.bf16.mxu0 0
    %3914 = vmatpush1.bf16.msra.mxu0 0
    %3915 = vmatprep.subr.bf16.mxu0 0
    %3916 = vmatpush1.bf16.msra.mxu0 0
    %3917 = vmatprep.subr.bf16.mxu0 0
    %3918 = vmatpush1.bf16.msra.mxu0 0
    %3919 = vmatprep.subr.bf16.mxu0 0
    %3920 = vmatpush1.bf16.msra.mxu0 0
    %3921 = vmatprep.mubr.bf16.mxu0 0
    %3922 = vmatmul.mubr.bf16.gmra.mrb[0].mxu0 %v3887
    %v3923 = vpop.f32.mrb[0].mxu0
    %v3924 = vadd.f32 0.0, %v3923
    %v3925 = vpop.f32.mrb[0].mxu0
    %v3926 = vadd.f32 0.0, %v3925
    %v3927 = vpop.f32.mrb[0].mxu0
    %v3928 = vpop.f32.mrb[0].mxu0
    %3929 = vdwg.mxu0
    %v3930 = vadd.f32 %v3830, %v3924
    %v3931 = vadd.f32 %v3831, %v3926
    %v3932 = vrot.slane %v3730, 4
    %v3934 = vrot.slane %v3734, 4
    %v3936 = vmax.f32 %v3932, %v3934
    %v3937 = vpack.c.bf16 %v3936, %v3936
    %v3938 = vld [vmem:[#allocation2 + $0x940] sm:$0xff]
    %v3939 = vld [vmem:[#allocation2 + $0x948] sm:$0xff]
    %v3940 = vld [vmem:[#allocation2 + $0x950] sm:$0xff]
    %v3941 = vld [vmem:[#allocation2 + $0x958] sm:$0xff]
    %v3942 = vld [vmem:[#allocation2 + $0x960] sm:$0xff]
    %v3943 = vld [vmem:[#allocation2 + $0x968] sm:$0xff]
    %v3944 = vld [vmem:[#allocation2 + $0x970] sm:$0xff]
    %v3945 = vld [vmem:[#allocation2 + $0x978] sm:$0xff]
    %v3954 = vunpack.c.l.b16 %v3938
    %v3955 = vunpack.c.h.b16 %v3938
    %v3956 = vunpack.c.l.b16 %v3939
    %v3957 = vunpack.c.h.b16 %v3939
    %v3958 = vunpack.c.l.b16 %v3940
    %v3959 = vunpack.c.h.b16 %v3940
    %v3960 = vunpack.c.l.b16 %v3941
    %v3961 = vunpack.c.h.b16 %v3941
    %v3962 = vunpack.c.l.b16 %v3942
    %v3963 = vunpack.c.h.b16 %v3942
    %v3964 = vunpack.c.l.b16 %v3943
    %v3965 = vunpack.c.h.b16 %v3943
    %v3966 = vunpack.c.l.b16 %v3944
    %v3967 = vunpack.c.h.b16 %v3944
    %v3968 = vunpack.c.l.b16 %v3945
    %v3969 = vunpack.c.h.b16 %v3945
    %v3970 = vpack.c.b16 %v3956, %v3954
    %v3971 = vpack.c.b16 %v3957, %v3955
    %v3972 = vpack.c.b16 %v3960, %v3958
    %v3973 = vpack.c.b16 %v3961, %v3959
    %v3974 = vpack.c.b16 %v3964, %v3962
    %v3975 = vpack.c.b16 %v3965, %v3963
    %v3976 = vpack.c.b16 %v3968, %v3966
    %v3977 = vpack.c.b16 %v3969, %v3967
    %v3987 = vsel %vm253, %v3937, 0
    %3989 = vmatprep.subr.bf16.mxu0 %v3971
    %3990 = vmatpush1.bf16.msra.mxu0 %v3970
    %3991 = vmatprep.subr.bf16.mxu0 %v3973
    %3992 = vmatpush1.bf16.msra.mxu0 %v3972
    %3993 = vmatprep.subr.bf16.mxu0 %v3975
    %3994 = vmatpush1.bf16.msra.mxu0 %v3974
    %3995 = vmatprep.subr.bf16.mxu0 %v3977
    %3996 = vmatpush1.bf16.msra.mxu0 %v3976
    %3997 = vmatprep.subr.bf16.mxu0 0
    %3998 = vmatpush1.bf16.msra.mxu0 0
    %3999 = vmatprep.subr.bf16.mxu0 0
    %4000 = vmatpush1.bf16.msra.mxu0 0
    %4001 = vmatprep.subr.bf16.mxu0 0
    %4002 = vmatpush1.bf16.msra.mxu0 0
    %4003 = vmatprep.subr.bf16.mxu0 0
    %4004 = vmatpush1.bf16.msra.mxu0 0
    %4005 = vmatprep.subr.bf16.mxu0 0
    %4006 = vmatpush1.bf16.msra.mxu0 0
    %4007 = vmatprep.subr.bf16.mxu0 0
    %4008 = vmatpush1.bf16.msra.mxu0 0
    %4009 = vmatprep.subr.bf16.mxu0 0
    %4010 = vmatpush1.bf16.msra.mxu0 0
    %4011 = vmatprep.subr.bf16.mxu0 0
    %4012 = vmatpush1.bf16.msra.mxu0 0
    %4013 = vmatprep.subr.bf16.mxu0 0
    %4014 = vmatpush1.bf16.msra.mxu0 0
    %4015 = vmatprep.subr.bf16.mxu0 0
    %4016 = vmatpush1.bf16.msra.mxu0 0
    %4017 = vmatprep.subr.bf16.mxu0 0
    %4018 = vmatpush1.bf16.msra.mxu0 0
    %4019 = vmatprep.subr.bf16.mxu0 0
    %4020 = vmatpush1.bf16.msra.mxu0 0
    %4021 = vmatprep.mubr.bf16.mxu0 0
    %4022 = vmatmul.mubr.bf16.gmra.mrb[0].mxu0 %v3987
    %v4023 = vpop.f32.mrb[0].mxu0
    %v4024 = vadd.f32 0.0, %v4023
    %v4025 = vpop.f32.mrb[0].mxu0
    %v4026 = vadd.f32 0.0, %v4025
    %v4027 = vpop.f32.mrb[0].mxu0
    %v4028 = vpop.f32.mrb[0].mxu0
    %4029 = vdwg.mxu0
    %v4030 = vadd.f32 %v3930, %v4024
    %v4031 = vadd.f32 %v3931, %v4026
    %v4032 = vrot.slane %v3730, 6
    %v4034 = vrot.slane %v3734, 6
    %v4036 = vmax.f32 %v4032, %v4034
    %v4037 = vpack.c.bf16 %v4036, %v4036
    %v4038 = vld [vmem:[#allocation2 + $0x980] sm:$0xff]
    %v4039 = vld [vmem:[#allocation2 + $0x988] sm:$0xff]
    %v4040 = vld [vmem:[#allocation2 + $0x990] sm:$0xff]
    %v4041 = vld [vmem:[#allocation2 + $0x998] sm:$0xff]
    %v4042 = vld [vmem:[#allocation2 + $0x9a0] sm:$0xff]
    %v4043 = vld [vmem:[#allocation2 + $0x9a8] sm:$0xff]
    %v4044 = vld [vmem:[#allocation2 + $0x9b0] sm:$0xff]
    %v4045 = vld [vmem:[#allocation2 + $0x9b8] sm:$0xff]
    %v4054 = vunpack.c.l.b16 %v4038
    %v4055 = vunpack.c.h.b16 %v4038
    %v4056 = vunpack.c.l.b16 %v4039
    %v4057 = vunpack.c.h.b16 %v4039
    %v4058 = vunpack.c.l.b16 %v4040
    %v4059 = vunpack.c.h.b16 %v4040
    %v4060 = vunpack.c.l.b16 %v4041
    %v4061 = vunpack.c.h.b16 %v4041
    %v4062 = vunpack.c.l.b16 %v4042
    %v4063 = vunpack.c.h.b16 %v4042
    %v4064 = vunpack.c.l.b16 %v4043
    %v4065 = vunpack.c.h.b16 %v4043
    %v4066 = vunpack.c.l.b16 %v4044
    %v4067 = vunpack.c.h.b16 %v4044
    %v4068 = vunpack.c.l.b16 %v4045
    %v4069 = vunpack.c.h.b16 %v4045
    %v4070 = vpack.c.b16 %v4056, %v4054
    %v4071 = vpack.c.b16 %v4057, %v4055
    %v4072 = vpack.c.b16 %v4060, %v4058
    %v4073 = vpack.c.b16 %v4061, %v4059
    %v4074 = vpack.c.b16 %v4064, %v4062
    %v4075 = vpack.c.b16 %v4065, %v4063
    %v4076 = vpack.c.b16 %v4068, %v4066
    %v4077 = vpack.c.b16 %v4069, %v4067
    %v4087 = vsel %vm253, %v4037, 0
    %4089 = vmatprep.subr.bf16.mxu0 %v4071
    %4090 = vmatpush1.bf16.msra.mxu0 %v4070
    %4091 = vmatprep.subr.bf16.mxu0 %v4073
    %4092 = vmatpush1.bf16.msra.mxu0 %v4072
    %4093 = vmatprep.subr.bf16.mxu0 %v4075
    %4094 = vmatpush1.bf16.msra.mxu0 %v4074
    %4095 = vmatprep.subr.bf16.mxu0 %v4077
    %4096 = vmatpush1.bf16.msra.mxu0 %v4076
    %4097 = vmatprep.subr.bf16.mxu0 0
    %4098 = vmatpush1.bf16.msra.mxu0 0
    %4099 = vmatprep.subr.bf16.mxu0 0
    %4100 = vmatpush1.bf16.msra.mxu0 0
    %4101 = vmatprep.subr.bf16.mxu0 0
    %4102 = vmatpush1.bf16.msra.mxu0 0
    %4103 = vmatprep.subr.bf16.mxu0 0
    %4104 = vmatpush1.bf16.msra.mxu0 0
    %4105 = vmatprep.subr.bf16.mxu0 0
    %4106 = vmatpush1.bf16.msra.mxu0 0
    %4107 = vmatprep.subr.bf16.mxu0 0
    %4108 = vmatpush1.bf16.msra.mxu0 0
    %4109 = vmatprep.subr.bf16.mxu0 0
    %4110 = vmatpush1.bf16.msra.mxu0 0
    %4111 = vmatprep.subr.bf16.mxu0 0
    %4112 = vmatpush1.bf16.msra.mxu0 0
    %4113 = vmatprep.subr.bf16.mxu0 0
    %4114 = vmatpush1.bf16.msra.mxu0 0
    %4115 = vmatprep.subr.bf16.mxu0 0
    %4116 = vmatpush1.bf16.msra.mxu0 0
    %4117 = vmatprep.subr.bf16.mxu0 0
    %4118 = vmatpush1.bf16.msra.mxu0 0
    %4119 = vmatprep.subr.bf16.mxu0 0
    %4120 = vmatpush1.bf16.msra.mxu0 0
    %4121 = vmatprep.mubr.bf16.mxu0 0
    %4122 = vmatmul.mubr.bf16.gmra.mrb[0].mxu0 %v4087
    %v4123 = vpop.f32.mrb[0].mxu0
    %v4124 = vadd.f32 0.0, %v4123
    %v4125 = vpop.f32.mrb[0].mxu0
    %v4126 = vadd.f32 0.0, %v4125
    %v4127 = vpop.f32.mrb[0].mxu0
    %v4128 = vpop.f32.mrb[0].mxu0
    %4129 = vdwg.mxu0
    %v4130 = vadd.f32 %v4030, %v4124
    %v4131 = vadd.f32 %v4031, %v4126
    %4133 = vrot.lane.b32.xlu0 %v3731, 64
    %v4134 = vpop.permute.xlu0 %4133
    %v4136 = vmax.f32 %v3731, %v4134
    %v4137 = vpack.c.bf16 %v4136, %v4136
    %v4138 = vld [vmem:[#allocation2 + $0x9c0] sm:$0xff]
    %v4139 = vld [vmem:[#allocation2 + $0x9c8] sm:$0xff]
    %v4140 = vld [vmem:[#allocation2 + $0x9d0] sm:$0xff]
    %v4141 = vld [vmem:[#allocation2 + $0x9d8] sm:$0xff]
    %v4142 = vld [vmem:[#allocation2 + $0x9e0] sm:$0xff]
    %v4143 = vld [vmem:[#allocation2 + $0x9e8] sm:$0xff]
    %v4144 = vld [vmem:[#allocation2 + $0x9f0] sm:$0xff]
    %v4145 = vld [vmem:[#allocation2 + $0x9f8] sm:$0xff]
    %v4154 = vunpack.c.l.b16 %v4138
    %v4155 = vunpack.c.h.b16 %v4138
    %v4156 = vunpack.c.l.b16 %v4139
    %v4157 = vunpack.c.h.b16 %v4139
    %v4158 = vunpack.c.l.b16 %v4140
    %v4159 = vunpack.c.h.b16 %v4140
    %v4160 = vunpack.c.l.b16 %v4141
    %v4161 = vunpack.c.h.b16 %v4141
    %v4162 = vunpack.c.l.b16 %v4142
    %v4163 = vunpack.c.h.b16 %v4142
    %v4164 = vunpack.c.l.b16 %v4143
    %v4165 = vunpack.c.h.b16 %v4143
    %v4166 = vunpack.c.l.b16 %v4144
    %v4167 = vunpack.c.h.b16 %v4144
    %v4168 = vunpack.c.l.b16 %v4145
    %v4169 = vunpack.c.h.b16 %v4145
    %v4170 = vpack.c.b16 %v4156, %v4154
    %v4171 = vpack.c.b16 %v4157, %v4155
    %v4172 = vpack.c.b16 %v4160, %v4158
    %v4173 = vpack.c.b16 %v4161, %v4159
    %v4174 = vpack.c.b16 %v4164, %v4162
    %v4175 = vpack.c.b16 %v4165, %v4163
    %v4176 = vpack.c.b16 %v4168, %v4166
    %v4177 = vpack.c.b16 %v4169, %v4167
    %v4187 = vsel %vm253, %v4137, 0
    %4189 = vmatprep.subr.bf16.mxu0 %v4171
    %4190 = vmatpush1.bf16.msra.mxu0 %v4170
    %4191 = vmatprep.subr.bf16.mxu0 %v4173
    %4192 = vmatpush1.bf16.msra.mxu0 %v4172
    %4193 = vmatprep.subr.bf16.mxu0 %v4175
    %4194 = vmatpush1.bf16.msra.mxu0 %v4174
    %4195 = vmatprep.subr.bf16.mxu0 %v4177
    %4196 = vmatpush1.bf16.msra.mxu0 %v4176
    %4197 = vmatprep.subr.bf16.mxu0 0
    %4198 = vmatpush1.bf16.msra.mxu0 0
    %4199 = vmatprep.subr.bf16.mxu0 0
    %4200 = vmatpush1.bf16.msra.mxu0 0
    %4201 = vmatprep.subr.bf16.mxu0 0
    %4202 = vmatpush1.bf16.msra.mxu0 0
    %4203 = vmatprep.subr.bf16.mxu0 0
    %4204 = vmatpush1.bf16.msra.mxu0 0
    %4205 = vmatprep.subr.bf16.mxu0 0
    %4206 = vmatpush1.bf16.msra.mxu0 0
    %4207 = vmatprep.subr.bf16.mxu0 0
    %4208 = vmatpush1.bf16.msra.mxu0 0
    %4209 = vmatprep.subr.bf16.mxu0 0
    %4210 = vmatpush1.bf16.msra.mxu0 0
    %4211 = vmatprep.subr.bf16.mxu0 0
    %4212 = vmatpush1.bf16.msra.mxu0 0
    %4213 = vmatprep.subr.bf16.mxu0 0
    %4214 = vmatpush1.bf16.msra.mxu0 0
    %4215 = vmatprep.subr.bf16.mxu0 0
    %4216 = vmatpush1.bf16.msra.mxu0 0
    %4217 = vmatprep.subr.bf16.mxu0 0
    %4218 = vmatpush1.bf16.msra.mxu0 0
    %4219 = vmatprep.subr.bf16.mxu0 0
    %4220 = vmatpush1.bf16.msra.mxu0 0
    %4221 = vmatprep.mubr.bf16.mxu0 0
    %4222 = vmatmul.mubr.bf16.gmra.mrb[0].mxu0 %v4187
    %v4223 = vpop.f32.mrb[0].mxu0
    %v4224 = vadd.f32 0.0, %v4223
    %v4225 = vpop.f32.mrb[0].mxu0
    %v4226 = vadd.f32 0.0, %v4225
    %v4227 = vpop.f32.mrb[0].mxu0
    %v4228 = vpop.f32.mrb[0].mxu0
    %4229 = vdwg.mxu0
    %v4230 = vadd.f32 %v4130, %v4224
    %v4231 = vadd.f32 %v4131, %v4226
    %v4232 = vrot.slane %v3731, 2
    %v4234 = vrot.slane %v4134, 2
    %v4236 = vmax.f32 %v4232, %v4234
    %v4237 = vpack.c.bf16 %v4236, %v4236
    %v4238 = vld [vmem:[#allocation2 + $0xa00] sm:$0xff]
    %v4239 = vld [vmem:[#allocation2 + $0xa08] sm:$0xff]
    %v4240 = vld [vmem:[#allocation2 + $0xa10] sm:$0xff]
    %v4241 = vld [vmem:[#allocation2 + $0xa18] sm:$0xff]
    %v4242 = vld [vmem:[#allocation2 + $0xa20] sm:$0xff]
    %v4243 = vld [vmem:[#allocation2 + $0xa28] sm:$0xff]
    %v4244 = vld [vmem:[#allocation2 + $0xa30] sm:$0xff]
    %v4245 = vld [vmem:[#allocation2 + $0xa38] sm:$0xff]
    %v4254 = vunpack.c.l.b16 %v4238
    %v4255 = vunpack.c.h.b16 %v4238
    %v4256 = vunpack.c.l.b16 %v4239
    %v4257 = vunpack.c.h.b16 %v4239
    %v4258 = vunpack.c.l.b16 %v4240
    %v4259 = vunpack.c.h.b16 %v4240
    %v4260 = vunpack.c.l.b16 %v4241
    %v4261 = vunpack.c.h.b16 %v4241
    %v4262 = vunpack.c.l.b16 %v4242
    %v4263 = vunpack.c.h.b16 %v4242
    %v4264 = vunpack.c.l.b16 %v4243
    %v4265 = vunpack.c.h.b16 %v4243
    %v4266 = vunpack.c.l.b16 %v4244
    %v4267 = vunpack.c.h.b16 %v4244
    %v4268 = vunpack.c.l.b16 %v4245
    %v4269 = vunpack.c.h.b16 %v4245
    %v4270 = vpack.c.b16 %v4256, %v4254
    %v4271 = vpack.c.b16 %v4257, %v4255
    %v4272 = vpack.c.b16 %v4260, %v4258
    %v4273 = vpack.c.b16 %v4261, %v4259
    %v4274 = vpack.c.b16 %v4264, %v4262
    %v4275 = vpack.c.b16 %v4265, %v4263
    %v4276 = vpack.c.b16 %v4268, %v4266
    %v4277 = vpack.c.b16 %v4269, %v4267
    %v4287 = vsel %vm253, %v4237, 0
    %4289 = vmatprep.subr.bf16.mxu0 %v4271
    %4290 = vmatpush1.bf16.msra.mxu0 %v4270
    %4291 = vmatprep.subr.bf16.mxu0 %v4273
    %4292 = vmatpush1.bf16.msra.mxu0 %v4272
    %4293 = vmatprep.subr.bf16.mxu0 %v4275
    %4294 = vmatpush1.bf16.msra.mxu0 %v4274
    %4295 = vmatprep.subr.bf16.mxu0 %v4277
    %4296 = vmatpush1.bf16.msra.mxu0 %v4276
    %4297 = vmatprep.subr.bf16.mxu0 0
    %4298 = vmatpush1.bf16.msra.mxu0 0
    %4299 = vmatprep.subr.bf16.mxu0 0
    %4300 = vmatpush1.bf16.msra.mxu0 0
    %4301 = vmatprep.subr.bf16.mxu0 0
    %4302 = vmatpush1.bf16.msra.mxu0 0
    %4303 = vmatprep.subr.bf16.mxu0 0
    %4304 = vmatpush1.bf16.msra.mxu0 0
    %4305 = vmatprep.subr.bf16.mxu0 0
    %4306 = vmatpush1.bf16.msra.mxu0 0
    %4307 = vmatprep.subr.bf16.mxu0 0
    %4308 = vmatpush1.bf16.msra.mxu0 0
    %4309 = vmatprep.subr.bf16.mxu0 0
    %4310 = vmatpush1.bf16.msra.mxu0 0
    %4311 = vmatprep.subr.bf16.mxu0 0
    %4312 = vmatpush1.bf16.msra.mxu0 0
    %4313 = vmatprep.subr.bf16.mxu0 0
    %4314 = vmatpush1.bf16.msra.mxu0 0
    %4315 = vmatprep.subr.bf16.mxu0 0
    %4316 = vmatpush1.bf16.msra.mxu0 0
    %4317 = vmatprep.subr.bf16.mxu0 0
    %4318 = vmatpush1.bf16.msra.mxu0 0
    %4319 = vmatprep.subr.bf16.mxu0 0
    %4320 = vmatpush1.bf16.msra.mxu0 0
    %4321 = vmatprep.mubr.bf16.mxu0 0
    %4322 = vmatmul.mubr.bf16.gmra.mrb[0].mxu0 %v4287
    %v4323 = vpop.f32.mrb[0].mxu0
    %v4324 = vadd.f32 0.0, %v4323
    %v4325 = vpop.f32.mrb[0].mxu0
    %v4326 = vadd.f32 0.0, %v4325
    %v4327 = vpop.f32.mrb[0].mxu0
    %v4328 = vpop.f32.mrb[0].mxu0
    %4329 = vdwg.mxu0
    %v4330 = vadd.f32 %v4230, %v4324
    %v4331 = vadd.f32 %v4231, %v4326
    %v4332 = vrot.slane %v3731, 4
    %v4334 = vrot.slane %v4134, 4
    %v4336 = vmax.f32 %v4332, %v4334
    %v4337 = vpack.c.bf16 %v4336, %v4336
    %v4338 = vld [vmem:[#allocation2 + $0xa40] sm:$0xff]
    %v4339 = vld [vmem:[#allocation2 + $0xa48] sm:$0xff]
    %v4340 = vld [vmem:[#allocation2 + $0xa50] sm:$0xff]
    %v4341 = vld [vmem:[#allocation2 + $0xa58] sm:$0xff]
    %v4342 = vld [vmem:[#allocation2 + $0xa60] sm:$0xff]
    %v4343 = vld [vmem:[#allocation2 + $0xa68] sm:$0xff]
    %v4344 = vld [vmem:[#allocation2 + $0xa70] sm:$0xff]
    %v4345 = vld [vmem:[#allocation2 + $0xa78] sm:$0xff]
    %v4354 = vunpack.c.l.b16 %v4338
    %v4355 = vunpack.c.h.b16 %v4338
    %v4356 = vunpack.c.l.b16 %v4339
    %v4357 = vunpack.c.h.b16 %v4339
    %v4358 = vunpack.c.l.b16 %v4340
    %v4359 = vunpack.c.h.b16 %v4340
    %v4360 = vunpack.c.l.b16 %v4341
    %v4361 = vunpack.c.h.b16 %v4341
    %v4362 = vunpack.c.l.b16 %v4342
    %v4363 = vunpack.c.h.b16 %v4342
    %v4364 = vunpack.c.l.b16 %v4343
    %v4365 = vunpack.c.h.b16 %v4343
    %v4366 = vunpack.c.l.b16 %v4344
    %v4367 = vunpack.c.h.b16 %v4344
    %v4368 = vunpack.c.l.b16 %v4345
    %v4369 = vunpack.c.h.b16 %v4345
    %v4370 = vpack.c.b16 %v4356, %v4354
    %v4371 = vpack.c.b16 %v4357, %v4355
    %v4372 = vpack.c.b16 %v4360, %v4358
    %v4373 = vpack.c.b16 %v4361, %v4359
    %v4374 = vpack.c.b16 %v4364, %v4362
    %v4375 = vpack.c.b16 %v4365, %v4363
    %v4376 = vpack.c.b16 %v4368, %v4366
    %v4377 = vpack.c.b16 %v4369, %v4367
    %v4387 = vsel %vm253, %v4337, 0
    %4389 = vmatprep.subr.bf16.mxu0 %v4371
    %4390 = vmatpush1.bf16.msra.mxu0 %v4370
    %4391 = vmatprep.subr.bf16.mxu0 %v4373
    %4392 = vmatpush1.bf16.msra.mxu0 %v4372
    %4393 = vmatprep.subr.bf16.mxu0 %v4375
    %4394 = vmatpush1.bf16.msra.mxu0 %v4374
    %4395 = vmatprep.subr.bf16.mxu0 %v4377
    %4396 = vmatpush1.bf16.msra.mxu0 %v4376
    %4397 = vmatprep.subr.bf16.mxu0 0
    %4398 = vmatpush1.bf16.msra.mxu0 0
    %4399 = vmatprep.subr.bf16.mxu0 0
    %4400 = vmatpush1.bf16.msra.mxu0 0
    %4401 = vmatprep.subr.bf16.mxu0 0
    %4402 = vmatpush1.bf16.msra.mxu0 0
    %4403 = vmatprep.subr.bf16.mxu0 0
    %4404 = vmatpush1.bf16.msra.mxu0 0
    %4405 = vmatprep.subr.bf16.mxu0 0
    %4406 = vmatpush1.bf16.msra.mxu0 0
    %4407 = vmatprep.subr.bf16.mxu0 0
    %4408 = vmatpush1.bf16.msra.mxu0 0
    %4409 = vmatprep.subr.bf16.mxu0 0
    %4410 = vmatpush1.bf16.msra.mxu0 0
    %4411 = vmatprep.subr.bf16.mxu0 0
    %4412 = vmatpush1.bf16.msra.mxu0 0
    %4413 = vmatprep.subr.bf16.mxu0 0
    %4414 = vmatpush1.bf16.msra.mxu0 0
    %4415 = vmatprep.subr.bf16.mxu0 0
    %4416 = vmatpush1.bf16.msra.mxu0 0
    %4417 = vmatprep.subr.bf16.mxu0 0
    %4418 = vmatpush1.bf16.msra.mxu0 0
    %4419 = vmatprep.subr.bf16.mxu0 0
    %4420 = vmatpush1.bf16.msra.mxu0 0
    %4421 = vmatprep.mubr.bf16.mxu0 0
    %4422 = vmatmul.mubr.bf16.gmra.mrb[0].mxu0 %v4387
    %v4423 = vpop.f32.mrb[0].mxu0
    %v4424 = vadd.f32 0.0, %v4423
    %v4425 = vpop.f32.mrb[0].mxu0
    %v4426 = vadd.f32 0.0, %v4425
    %v4427 = vpop.f32.mrb[0].mxu0
    %v4428 = vpop.f32.mrb[0].mxu0
    %4429 = vdwg.mxu0
    %v4430 = vadd.f32 %v4330, %v4424
    %v4431 = vadd.f32 %v4331, %v4426
    %v4432 = vld [vmem:[%s0 + $0xa8] sm:$0xff]
    %v4433 = vld [vmem:[%s0 + $0xb0] sm:$0x3f]
    %v4434 = vmul.f32 %v4432, %v158
    %v4435 = vmul.f32 %v4433, %v174
    %v4436 = vld [vmem:[%s0 + $0xb6] sm:$0xff]
    %v4437 = vld [vmem:[%s0 + $0xbe] sm:$0x3f]
    %v4438 = vmul.f32 %v4436, %v158
    %v4439 = vmul.f32 %v4437, %v174
    %v4440 = vmax.f32 %v4434, %v4438
    %v4441 = vmax.f32 %v4435, %v4439
    %4443 = vrot.lane.b32.xlu0 %v4440, 64
    %v4444 = vpop.permute.xlu0 %4443
    %v4446 = vmax.f32 %v4440, %v4444
    %v4447 = vpack.c.bf16 %v4446, %v4446
    %v4448 = vld [vmem:[#allocation2 + $0xa80] sm:$0xff]
    %v4449 = vld [vmem:[#allocation2 + $0xa88] sm:$0xff]
    %v4450 = vld [vmem:[#allocation2 + $0xa90] sm:$0xff]
    %v4451 = vld [vmem:[#allocation2 + $0xa98] sm:$0xff]
    %v4452 = vld [vmem:[#allocation2 + $0xaa0] sm:$0xff]
    %v4453 = vld [vmem:[#allocation2 + $0xaa8] sm:$0xff]
    %v4454 = vld [vmem:[#allocation2 + $0xab0] sm:$0xff]
    %v4455 = vld [vmem:[#allocation2 + $0xab8] sm:$0xff]
    %v4464 = vunpack.c.l.b16 %v4448
    %v4465 = vunpack.c.h.b16 %v4448
    %v4466 = vunpack.c.l.b16 %v4449
    %v4467 = vunpack.c.h.b16 %v4449
    %v4468 = vunpack.c.l.b16 %v4450
    %v4469 = vunpack.c.h.b16 %v4450
    %v4470 = vunpack.c.l.b16 %v4451
    %v4471 = vunpack.c.h.b16 %v4451
    %v4472 = vunpack.c.l.b16 %v4452
    %v4473 = vunpack.c.h.b16 %v4452
    %v4474 = vunpack.c.l.b16 %v4453
    %v4475 = vunpack.c.h.b16 %v4453
    %v4476 = vunpack.c.l.b16 %v4454
    %v4477 = vunpack.c.h.b16 %v4454
    %v4478 = vunpack.c.l.b16 %v4455
    %v4479 = vunpack.c.h.b16 %v4455
    %v4480 = vpack.c.b16 %v4466, %v4464
    %v4481 = vpack.c.b16 %v4467, %v4465
    %v4482 = vpack.c.b16 %v4470, %v4468
    %v4483 = vpack.c.b16 %v4471, %v4469
    %v4484 = vpack.c.b16 %v4474, %v4472
    %v4485 = vpack.c.b16 %v4475, %v4473
    %v4486 = vpack.c.b16 %v4478, %v4476
    %v4487 = vpack.c.b16 %v4479, %v4477
    %v4497 = vsel %vm253, %v4447, 0
    %4499 = vmatprep.subr.bf16.mxu0 %v4481
    %4500 = vmatpush1.bf16.msra.mxu0 %v4480
    %4501 = vmatprep.subr.bf16.mxu0 %v4483
    %4502 = vmatpush1.bf16.msra.mxu0 %v4482
    %4503 = vmatprep.subr.bf16.mxu0 %v4485
    %4504 = vmatpush1.bf16.msra.mxu0 %v4484
    %4505 = vmatprep.subr.bf16.mxu0 %v4487
    %4506 = vmatpush1.bf16.msra.mxu0 %v4486
    %4507 = vmatprep.subr.bf16.mxu0 0
    %4508 = vmatpush1.bf16.msra.mxu0 0
    %4509 = vmatprep.subr.bf16.mxu0 0
    %4510 = vmatpush1.bf16.msra.mxu0 0
    %4511 = vmatprep.subr.bf16.mxu0 0
    %4512 = vmatpush1.bf16.msra.mxu0 0
    %4513 = vmatprep.subr.bf16.mxu0 0
    %4514 = vmatpush1.bf16.msra.mxu0 0
    %4515 = vmatprep.subr.bf16.mxu0 0
    %4516 = vmatpush1.bf16.msra.mxu0 0
    %4517 = vmatprep.subr.bf16.mxu0 0
    %4518 = vmatpush1.bf16.msra.mxu0 0
    %4519 = vmatprep.subr.bf16.mxu0 0
    %4520 = vmatpush1.bf16.msra.mxu0 0
    %4521 = vmatprep.subr.bf16.mxu0 0
    %4522 = vmatpush1.bf16.msra.mxu0 0
    %4523 = vmatprep.subr.bf16.mxu0 0
    %4524 = vmatpush1.bf16.msra.mxu0 0
    %4525 = vmatprep.subr.bf16.mxu0 0
    %4526 = vmatpush1.bf16.msra.mxu0 0
    %4527 = vmatprep.subr.bf16.mxu0 0
    %4528 = vmatpush1.bf16.msra.mxu0 0
    %4529 = vmatprep.subr.bf16.mxu0 0
    %4530 = vmatpush1.bf16.msra.mxu0 0
    %4531 = vmatprep.mubr.bf16.mxu0 0
    %4532 = vmatmul.mubr.bf16.gmra.mrb[0].mxu0 %v4497
    %v4533 = vpop.f32.mrb[0].mxu0
    %v4534 = vadd.f32 0.0, %v4533
    %v4535 = vpop.f32.mrb[0].mxu0
    %v4536 = vadd.f32 0.0, %v4535
    %v4537 = vpop.f32.mrb[0].mxu0
    %v4538 = vpop.f32.mrb[0].mxu0
    %4539 = vdwg.mxu0
    %v4540 = vadd.f32 %v4430, %v4534
    %v4541 = vadd.f32 %v4431, %v4536
    %v4542 = vrot.slane %v4440, 2
    %v4544 = vrot.slane %v4444, 2
    %v4546 = vmax.f32 %v4542, %v4544
    %v4547 = vpack.c.bf16 %v4546, %v4546
    %v4548 = vld [vmem:[#allocation2 + $0xac0] sm:$0xff]
    %v4549 = vld [vmem:[#allocation2 + $0xac8] sm:$0xff]
    %v4550 = vld [vmem:[#allocation2 + $0xad0] sm:$0xff]
    %v4551 = vld [vmem:[#allocation2 + $0xad8] sm:$0xff]
    %v4552 = vld [vmem:[#allocation2 + $0xae0] sm:$0xff]
    %v4553 = vld [vmem:[#allocation2 + $0xae8] sm:$0xff]
    %v4554 = vld [vmem:[#allocation2 + $0xaf0] sm:$0xff]
    %v4555 = vld [vmem:[#allocation2 + $0xaf8] sm:$0xff]
    %v4564 = vunpack.c.l.b16 %v4548
    %v4565 = vunpack.c.h.b16 %v4548
    %v4566 = vunpack.c.l.b16 %v4549
    %v4567 = vunpack.c.h.b16 %v4549
    %v4568 = vunpack.c.l.b16 %v4550
    %v4569 = vunpack.c.h.b16 %v4550
    %v4570 = vunpack.c.l.b16 %v4551
    %v4571 = vunpack.c.h.b16 %v4551
    %v4572 = vunpack.c.l.b16 %v4552
    %v4573 = vunpack.c.h.b16 %v4552
    %v4574 = vunpack.c.l.b16 %v4553
    %v4575 = vunpack.c.h.b16 %v4553
    %v4576 = vunpack.c.l.b16 %v4554
    %v4577 = vunpack.c.h.b16 %v4554
    %v4578 = vunpack.c.l.b16 %v4555
    %v4579 = vunpack.c.h.b16 %v4555
    %v4580 = vpack.c.b16 %v4566, %v4564
    %v4581 = vpack.c.b16 %v4567, %v4565
    %v4582 = vpack.c.b16 %v4570, %v4568
    %v4583 = vpack.c.b16 %v4571, %v4569
    %v4584 = vpack.c.b16 %v4574, %v4572
    %v4585 = vpack.c.b16 %v4575, %v4573
    %v4586 = vpack.c.b16 %v4578, %v4576
    %v4587 = vpack.c.b16 %v4579, %v4577
    %v4597 = vsel %vm253, %v4547, 0
    %4599 = vmatprep.subr.bf16.mxu0 %v4581
    %4600 = vmatpush1.bf16.msra.mxu0 %v4580
    %4601 = vmatprep.subr.bf16.mxu0 %v4583
    %4602 = vmatpush1.bf16.msra.mxu0 %v4582
    %4603 = vmatprep.subr.bf16.mxu0 %v4585
    %4604 = vmatpush1.bf16.msra.mxu0 %v4584
    %4605 = vmatprep.subr.bf16.mxu0 %v4587
    %4606 = vmatpush1.bf16.msra.mxu0 %v4586
    %4607 = vmatprep.subr.bf16.mxu0 0
    %4608 = vmatpush1.bf16.msra.mxu0 0
    %4609 = vmatprep.subr.bf16.mxu0 0
    %4610 = vmatpush1.bf16.msra.mxu0 0
    %4611 = vmatprep.subr.bf16.mxu0 0
    %4612 = vmatpush1.bf16.msra.mxu0 0
    %4613 = vmatprep.subr.bf16.mxu0 0
    %4614 = vmatpush1.bf16.msra.mxu0 0
    %4615 = vmatprep.subr.bf16.mxu0 0
    %4616 = vmatpush1.bf16.msra.mxu0 0
    %4617 = vmatprep.subr.bf16.mxu0 0
    %4618 = vmatpush1.bf16.msra.mxu0 0
    %4619 = vmatprep.subr.bf16.mxu0 0
    %4620 = vmatpush1.bf16.msra.mxu0 0
    %4621 = vmatprep.subr.bf16.mxu0 0
    %4622 = vmatpush1.bf16.msra.mxu0 0
    %4623 = vmatprep.subr.bf16.mxu0 0
    %4624 = vmatpush1.bf16.msra.mxu0 0
    %4625 = vmatprep.subr.bf16.mxu0 0
    %4626 = vmatpush1.bf16.msra.mxu0 0
    %4627 = vmatprep.subr.bf16.mxu0 0
    %4628 = vmatpush1.bf16.msra.mxu0 0
    %4629 = vmatprep.subr.bf16.mxu0 0
    %4630 = vmatpush1.bf16.msra.mxu0 0
    %4631 = vmatprep.mubr.bf16.mxu0 0
    %4632 = vmatmul.mubr.bf16.gmra.mrb[0].mxu0 %v4597
    %v4633 = vpop.f32.mrb[0].mxu0
    %v4634 = vadd.f32 0.0, %v4633
    %v4635 = vpop.f32.mrb[0].mxu0
    %v4636 = vadd.f32 0.0, %v4635
    %v4637 = vpop.f32.mrb[0].mxu0
    %v4638 = vpop.f32.mrb[0].mxu0
    %4639 = vdwg.mxu0
    %v4640 = vadd.f32 %v4540, %v4634
    %v4641 = vadd.f32 %v4541, %v4636
    %v4642 = vrot.slane %v4440, 4
    %v4644 = vrot.slane %v4444, 4
    %v4646 = vmax.f32 %v4642, %v4644
    %v4647 = vpack.c.bf16 %v4646, %v4646
    %v4648 = vld [vmem:[#allocation2 + $0xb00] sm:$0xff]
    %v4649 = vld [vmem:[#allocation2 + $0xb08] sm:$0xff]
    %v4650 = vld [vmem:[#allocation2 + $0xb10] sm:$0xff]
    %v4651 = vld [vmem:[#allocation2 + $0xb18] sm:$0xff]
    %v4652 = vld [vmem:[#allocation2 + $0xb20] sm:$0xff]
    %v4653 = vld [vmem:[#allocation2 + $0xb28] sm:$0xff]
    %v4654 = vld [vmem:[#allocation2 + $0xb30] sm:$0xff]
    %v4655 = vld [vmem:[#allocation2 + $0xb38] sm:$0xff]
    %v4664 = vunpack.c.l.b16 %v4648
    %v4665 = vunpack.c.h.b16 %v4648
    %v4666 = vunpack.c.l.b16 %v4649
    %v4667 = vunpack.c.h.b16 %v4649
    %v4668 = vunpack.c.l.b16 %v4650
    %v4669 = vunpack.c.h.b16 %v4650
    %v4670 = vunpack.c.l.b16 %v4651
    %v4671 = vunpack.c.h.b16 %v4651
    %v4672 = vunpack.c.l.b16 %v4652
    %v4673 = vunpack.c.h.b16 %v4652
    %v4674 = vunpack.c.l.b16 %v4653
    %v4675 = vunpack.c.h.b16 %v4653
    %v4676 = vunpack.c.l.b16 %v4654
    %v4677 = vunpack.c.h.b16 %v4654
    %v4678 = vunpack.c.l.b16 %v4655
    %v4679 = vunpack.c.h.b16 %v4655
    %v4680 = vpack.c.b16 %v4666, %v4664
    %v4681 = vpack.c.b16 %v4667, %v4665
    %v4682 = vpack.c.b16 %v4670, %v4668
    %v4683 = vpack.c.b16 %v4671, %v4669
    %v4684 = vpack.c.b16 %v4674, %v4672
    %v4685 = vpack.c.b16 %v4675, %v4673
    %v4686 = vpack.c.b16 %v4678, %v4676
    %v4687 = vpack.c.b16 %v4679, %v4677
    %v4697 = vsel %vm253, %v4647, 0
    %4699 = vmatprep.subr.bf16.mxu0 %v4681
    %4700 = vmatpush1.bf16.msra.mxu0 %v4680
    %4701 = vmatprep.subr.bf16.mxu0 %v4683
    %4702 = vmatpush1.bf16.msra.mxu0 %v4682
    %4703 = vmatprep.subr.bf16.mxu0 %v4685
    %4704 = vmatpush1.bf16.msra.mxu0 %v4684
    %4705 = vmatprep.subr.bf16.mxu0 %v4687
    %4706 = vmatpush1.bf16.msra.mxu0 %v4686
    %4707 = vmatprep.subr.bf16.mxu0 0
    %4708 = vmatpush1.bf16.msra.mxu0 0
    %4709 = vmatprep.subr.bf16.mxu0 0
    %4710 = vmatpush1.bf16.msra.mxu0 0
    %4711 = vmatprep.subr.bf16.mxu0 0
    %4712 = vmatpush1.bf16.msra.mxu0 0
    %4713 = vmatprep.subr.bf16.mxu0 0
    %4714 = vmatpush1.bf16.msra.mxu0 0
    %4715 = vmatprep.subr.bf16.mxu0 0
    %4716 = vmatpush1.bf16.msra.mxu0 0
    %4717 = vmatprep.subr.bf16.mxu0 0
    %4718 = vmatpush1.bf16.msra.mxu0 0
    %4719 = vmatprep.subr.bf16.mxu0 0
    %4720 = vmatpush1.bf16.msra.mxu0 0
    %4721 = vmatprep.subr.bf16.mxu0 0
    %4722 = vmatpush1.bf16.msra.mxu0 0
    %4723 = vmatprep.subr.bf16.mxu0 0
    %4724 = vmatpush1.bf16.msra.mxu0 0
    %4725 = vmatprep.subr.bf16.mxu0 0
    %4726 = vmatpush1.bf16.msra.mxu0 0
    %4727 = vmatprep.subr.bf16.mxu0 0
    %4728 = vmatpush1.bf16.msra.mxu0 0
    %4729 = vmatprep.subr.bf16.mxu0 0
    %4730 = vmatpush1.bf16.msra.mxu0 0
    %4731 = vmatprep.mubr.bf16.mxu0 0
    %4732 = vmatmul.mubr.bf16.gmra.mrb[0].mxu0 %v4697
    %v4733 = vpop.f32.mrb[0].mxu0
    %v4734 = vadd.f32 0.0, %v4733
    %v4735 = vpop.f32.mrb[0].mxu0
    %v4736 = vadd.f32 0.0, %v4735
    %v4737 = vpop.f32.mrb[0].mxu0
    %v4738 = vpop.f32.mrb[0].mxu0
    %4739 = vdwg.mxu0
    %v4740 = vadd.f32 %v4640, %v4734
    %v4741 = vadd.f32 %v4641, %v4736
    %v4742 = vrot.slane %v4440, 6
    %v4744 = vrot.slane %v4444, 6
    %v4746 = vmax.f32 %v4742, %v4744
    %v4747 = vpack.c.bf16 %v4746, %v4746
    %v4748 = vld [vmem:[#allocation2 + $0xb40] sm:$0xff]
    %v4749 = vld [vmem:[#allocation2 + $0xb48] sm:$0xff]
    %v4750 = vld [vmem:[#allocation2 + $0xb50] sm:$0xff]
    %v4751 = vld [vmem:[#allocation2 + $0xb58] sm:$0xff]
    %v4752 = vld [vmem:[#allocation2 + $0xb60] sm:$0xff]
    %v4753 = vld [vmem:[#allocation2 + $0xb68] sm:$0xff]
    %v4754 = vld [vmem:[#allocation2 + $0xb70] sm:$0xff]
    %v4755 = vld [vmem:[#allocation2 + $0xb78] sm:$0xff]
    %v4764 = vunpack.c.l.b16 %v4748
    %v4765 = vunpack.c.h.b16 %v4748
    %v4766 = vunpack.c.l.b16 %v4749
    %v4767 = vunpack.c.h.b16 %v4749
    %v4768 = vunpack.c.l.b16 %v4750
    %v4769 = vunpack.c.h.b16 %v4750
    %v4770 = vunpack.c.l.b16 %v4751
    %v4771 = vunpack.c.h.b16 %v4751
    %v4772 = vunpack.c.l.b16 %v4752
    %v4773 = vunpack.c.h.b16 %v4752
    %v4774 = vunpack.c.l.b16 %v4753
    %v4775 = vunpack.c.h.b16 %v4753
    %v4776 = vunpack.c.l.b16 %v4754
    %v4777 = vunpack.c.h.b16 %v4754
    %v4778 = vunpack.c.l.b16 %v4755
    %v4779 = vunpack.c.h.b16 %v4755
    %v4780 = vpack.c.b16 %v4766, %v4764
    %v4781 = vpack.c.b16 %v4767, %v4765
    %v4782 = vpack.c.b16 %v4770, %v4768
    %v4783 = vpack.c.b16 %v4771, %v4769
    %v4784 = vpack.c.b16 %v4774, %v4772
    %v4785 = vpack.c.b16 %v4775, %v4773
    %v4786 = vpack.c.b16 %v4778, %v4776
    %v4787 = vpack.c.b16 %v4779, %v4777
    %v4797 = vsel %vm253, %v4747, 0
    %4799 = vmatprep.subr.bf16.mxu0 %v4781
    %4800 = vmatpush1.bf16.msra.mxu0 %v4780
    %4801 = vmatprep.subr.bf16.mxu0 %v4783
    %4802 = vmatpush1.bf16.msra.mxu0 %v4782
    %4803 = vmatprep.subr.bf16.mxu0 %v4785
    %4804 = vmatpush1.bf16.msra.mxu0 %v4784
    %4805 = vmatprep.subr.bf16.mxu0 %v4787
    %4806 = vmatpush1.bf16.msra.mxu0 %v4786
    %4807 = vmatprep.subr.bf16.mxu0 0
    %4808 = vmatpush1.bf16.msra.mxu0 0
    %4809 = vmatprep.subr.bf16.mxu0 0
    %4810 = vmatpush1.bf16.msra.mxu0 0
    %4811 = vmatprep.subr.bf16.mxu0 0
    %4812 = vmatpush1.bf16.msra.mxu0 0
    %4813 = vmatprep.subr.bf16.mxu0 0
    %4814 = vmatpush1.bf16.msra.mxu0 0
    %4815 = vmatprep.subr.bf16.mxu0 0
    %4816 = vmatpush1.bf16.msra.mxu0 0
    %4817 = vmatprep.subr.bf16.mxu0 0
    %4818 = vmatpush1.bf16.msra.mxu0 0
    %4819 = vmatprep.subr.bf16.mxu0 0
    %4820 = vmatpush1.bf16.msra.mxu0 0
    %4821 = vmatprep.subr.bf16.mxu0 0
    %4822 = vmatpush1.bf16.msra.mxu0 0
    %4823 = vmatprep.subr.bf16.mxu0 0
    %4824 = vmatpush1.bf16.msra.mxu0 0
    %4825 = vmatprep.subr.bf16.mxu0 0
    %4826 = vmatpush1.bf16.msra.mxu0 0
    %4827 = vmatprep.subr.bf16.mxu0 0
    %4828 = vmatpush1.bf16.msra.mxu0 0
    %4829 = vmatprep.subr.bf16.mxu0 0
    %4830 = vmatpush1.bf16.msra.mxu0 0
    %4831 = vmatprep.mubr.bf16.mxu0 0
    %4832 = vmatmul.mubr.bf16.gmra.mrb[0].mxu0 %v4797
    %v4833 = vpop.f32.mrb[0].mxu0
    %v4834 = vadd.f32 0.0, %v4833
    %v4835 = vpop.f32.mrb[0].mxu0
    %v4836 = vadd.f32 0.0, %v4835
    %v4837 = vpop.f32.mrb[0].mxu0
    %v4838 = vpop.f32.mrb[0].mxu0
    %4839 = vdwg.mxu0
    %v4840 = vadd.f32 %v4740, %v4834
    %v4841 = vadd.f32 %v4741, %v4836
    %4843 = vrot.lane.b32.xlu0 %v4441, 64
    %v4844 = vpop.permute.xlu0 %4843
    %v4846 = vmax.f32 %v4441, %v4844
    %v4847 = vpack.c.bf16 %v4846, %v4846
    %v4848 = vld [vmem:[#allocation2 + $0xb80] sm:$0xff]
    %v4849 = vld [vmem:[#allocation2 + $0xb88] sm:$0xff]
    %v4850 = vld [vmem:[#allocation2 + $0xb90] sm:$0xff]
    %v4851 = vld [vmem:[#allocation2 + $0xb98] sm:$0xff]
    %v4852 = vld [vmem:[#allocation2 + $0xba0] sm:$0xff]
    %v4853 = vld [vmem:[#allocation2 + $0xba8] sm:$0xff]
    %v4854 = vld [vmem:[#allocation2 + $0xbb0] sm:$0xff]
    %v4855 = vld [vmem:[#allocation2 + $0xbb8] sm:$0xff]
    %v4864 = vunpack.c.l.b16 %v4848
    %v4865 = vunpack.c.h.b16 %v4848
    %v4866 = vunpack.c.l.b16 %v4849
    %v4867 = vunpack.c.h.b16 %v4849
    %v4868 = vunpack.c.l.b16 %v4850
    %v4869 = vunpack.c.h.b16 %v4850
    %v4870 = vunpack.c.l.b16 %v4851
    %v4871 = vunpack.c.h.b16 %v4851
    %v4872 = vunpack.c.l.b16 %v4852
    %v4873 = vunpack.c.h.b16 %v4852
    %v4874 = vunpack.c.l.b16 %v4853
    %v4875 = vunpack.c.h.b16 %v4853
    %v4876 = vunpack.c.l.b16 %v4854
    %v4877 = vunpack.c.h.b16 %v4854
    %v4878 = vunpack.c.l.b16 %v4855
    %v4879 = vunpack.c.h.b16 %v4855
    %v4880 = vpack.c.b16 %v4866, %v4864
    %v4881 = vpack.c.b16 %v4867, %v4865
    %v4882 = vpack.c.b16 %v4870, %v4868
    %v4883 = vpack.c.b16 %v4871, %v4869
    %v4884 = vpack.c.b16 %v4874, %v4872
    %v4885 = vpack.c.b16 %v4875, %v4873
    %v4886 = vpack.c.b16 %v4878, %v4876
    %v4887 = vpack.c.b16 %v4879, %v4877
    %v4897 = vsel %vm253, %v4847, 0
    %4899 = vmatprep.subr.bf16.mxu0 %v4881
    %4900 = vmatpush1.bf16.msra.mxu0 %v4880
    %4901 = vmatprep.subr.bf16.mxu0 %v4883
    %4902 = vmatpush1.bf16.msra.mxu0 %v4882
    %4903 = vmatprep.subr.bf16.mxu0 %v4885
    %4904 = vmatpush1.bf16.msra.mxu0 %v4884
    %4905 = vmatprep.subr.bf16.mxu0 %v4887
    %4906 = vmatpush1.bf16.msra.mxu0 %v4886
    %4907 = vmatprep.subr.bf16.mxu0 0
    %4908 = vmatpush1.bf16.msra.mxu0 0
    %4909 = vmatprep.subr.bf16.mxu0 0
    %4910 = vmatpush1.bf16.msra.mxu0 0
    %4911 = vmatprep.subr.bf16.mxu0 0
    %4912 = vmatpush1.bf16.msra.mxu0 0
    %4913 = vmatprep.subr.bf16.mxu0 0
    %4914 = vmatpush1.bf16.msra.mxu0 0
    %4915 = vmatprep.subr.bf16.mxu0 0
    %4916 = vmatpush1.bf16.msra.mxu0 0
    %4917 = vmatprep.subr.bf16.mxu0 0
    %4918 = vmatpush1.bf16.msra.mxu0 0
    %4919 = vmatprep.subr.bf16.mxu0 0
    %4920 = vmatpush1.bf16.msra.mxu0 0
    %4921 = vmatprep.subr.bf16.mxu0 0
    %4922 = vmatpush1.bf16.msra.mxu0 0
    %4923 = vmatprep.subr.bf16.mxu0 0
    %4924 = vmatpush1.bf16.msra.mxu0 0
    %4925 = vmatprep.subr.bf16.mxu0 0
    %4926 = vmatpush1.bf16.msra.mxu0 0
    %4927 = vmatprep.subr.bf16.mxu0 0
    %4928 = vmatpush1.bf16.msra.mxu0 0
    %4929 = vmatprep.subr.bf16.mxu0 0
    %4930 = vmatpush1.bf16.msra.mxu0 0
    %4931 = vmatprep.mubr.bf16.mxu0 0
    %4932 = vmatmul.mubr.bf16.gmra.mrb[0].mxu0 %v4897
    %v4933 = vpop.f32.mrb[0].mxu0
    %v4934 = vadd.f32 0.0, %v4933
    %v4935 = vpop.f32.mrb[0].mxu0
    %v4936 = vadd.f32 0.0, %v4935
    %v4937 = vpop.f32.mrb[0].mxu0
    %v4938 = vpop.f32.mrb[0].mxu0
    %4939 = vdwg.mxu0
    %v4940 = vadd.f32 %v4840, %v4934
    %v4941 = vadd.f32 %v4841, %v4936
    %v4942 = vrot.slane %v4441, 2
    %v4944 = vrot.slane %v4844, 2
    %v4946 = vmax.f32 %v4942, %v4944
    %v4947 = vpack.c.bf16 %v4946, %v4946
    %v4948 = vld [vmem:[#allocation2 + $0xbc0] sm:$0xff]
    %v4949 = vld [vmem:[#allocation2 + $0xbc8] sm:$0xff]
    %v4950 = vld [vmem:[#allocation2 + $0xbd0] sm:$0xff]
    %v4951 = vld [vmem:[#allocation2 + $0xbd8] sm:$0xff]
    %v4952 = vld [vmem:[#allocation2 + $0xbe0] sm:$0xff]
    %v4953 = vld [vmem:[#allocation2 + $0xbe8] sm:$0xff]
    %v4954 = vld [vmem:[#allocation2 + $0xbf0] sm:$0xff]
    %v4955 = vld [vmem:[#allocation2 + $0xbf8] sm:$0xff]
    %v4964 = vunpack.c.l.b16 %v4948
    %v4965 = vunpack.c.h.b16 %v4948
    %v4966 = vunpack.c.l.b16 %v4949
    %v4967 = vunpack.c.h.b16 %v4949
    %v4968 = vunpack.c.l.b16 %v4950
    %v4969 = vunpack.c.h.b16 %v4950
    %v4970 = vunpack.c.l.b16 %v4951
    %v4971 = vunpack.c.h.b16 %v4951
    %v4972 = vunpack.c.l.b16 %v4952
    %v4973 = vunpack.c.h.b16 %v4952
    %v4974 = vunpack.c.l.b16 %v4953
    %v4975 = vunpack.c.h.b16 %v4953
    %v4976 = vunpack.c.l.b16 %v4954
    %v4977 = vunpack.c.h.b16 %v4954
    %v4978 = vunpack.c.l.b16 %v4955
    %v4979 = vunpack.c.h.b16 %v4955
    %v4980 = vpack.c.b16 %v4966, %v4964
    %v4981 = vpack.c.b16 %v4967, %v4965
    %v4982 = vpack.c.b16 %v4970, %v4968
    %v4983 = vpack.c.b16 %v4971, %v4969
    %v4984 = vpack.c.b16 %v4974, %v4972
    %v4985 = vpack.c.b16 %v4975, %v4973
    %v4986 = vpack.c.b16 %v4978, %v4976
    %v4987 = vpack.c.b16 %v4979, %v4977
    %v4997 = vsel %vm253, %v4947, 0
    %4999 = vmatprep.subr.bf16.mxu0 %v4981
    %5000 = vmatpush1.bf16.msra.mxu0 %v4980
    %5001 = vmatprep.subr.bf16.mxu0 %v4983
    %5002 = vmatpush1.bf16.msra.mxu0 %v4982
    %5003 = vmatprep.subr.bf16.mxu0 %v4985
    %5004 = vmatpush1.bf16.msra.mxu0 %v4984
    %5005 = vmatprep.subr.bf16.mxu0 %v4987
    %5006 = vmatpush1.bf16.msra.mxu0 %v4986
    %5007 = vmatprep.subr.bf16.mxu0 0
    %5008 = vmatpush1.bf16.msra.mxu0 0
    %5009 = vmatprep.subr.bf16.mxu0 0
    %5010 = vmatpush1.bf16.msra.mxu0 0
    %5011 = vmatprep.subr.bf16.mxu0 0
    %5012 = vmatpush1.bf16.msra.mxu0 0
    %5013 = vmatprep.subr.bf16.mxu0 0
    %5014 = vmatpush1.bf16.msra.mxu0 0
    %5015 = vmatprep.subr.bf16.mxu0 0
    %5016 = vmatpush1.bf16.msra.mxu0 0
    %5017 = vmatprep.subr.bf16.mxu0 0
    %5018 = vmatpush1.bf16.msra.mxu0 0
    %5019 = vmatprep.subr.bf16.mxu0 0
    %5020 = vmatpush1.bf16.msra.mxu0 0
    %5021 = vmatprep.subr.bf16.mxu0 0
    %5022 = vmatpush1.bf16.msra.mxu0 0
    %5023 = vmatprep.subr.bf16.mxu0 0
    %5024 = vmatpush1.bf16.msra.mxu0 0
    %5025 = vmatprep.subr.bf16.mxu0 0
    %5026 = vmatpush1.bf16.msra.mxu0 0
    %5027 = vmatprep.subr.bf16.mxu0 0
    %5028 = vmatpush1.bf16.msra.mxu0 0
    %5029 = vmatprep.subr.bf16.mxu0 0
    %5030 = vmatpush1.bf16.msra.mxu0 0
    %5031 = vmatprep.mubr.bf16.mxu0 0
    %5032 = vmatmul.mubr.bf16.gmra.mrb[0].mxu0 %v4997
    %v5033 = vpop.f32.mrb[0].mxu0
    %v5034 = vadd.f32 0.0, %v5033
    %v5035 = vpop.f32.mrb[0].mxu0
    %v5036 = vadd.f32 0.0, %v5035
    %v5037 = vpop.f32.mrb[0].mxu0
    %v5038 = vpop.f32.mrb[0].mxu0
    %5039 = vdwg.mxu0
    %v5040 = vadd.f32 %v4940, %v5034
    %v5041 = vadd.f32 %v4941, %v5036
    %v5042 = vrot.slane %v4441, 4
    %v5044 = vrot.slane %v4844, 4
    %v5046 = vmax.f32 %v5042, %v5044
    %v5047 = vpack.c.bf16 %v5046, %v5046
    %v5048 = vld [vmem:[#allocation2 + $0xc00] sm:$0xff]
    %v5049 = vld [vmem:[#allocation2 + $0xc08] sm:$0xff]
    %v5050 = vld [vmem:[#allocation2 + $0xc10] sm:$0xff]
    %v5051 = vld [vmem:[#allocation2 + $0xc18] sm:$0xff]
    %v5052 = vld [vmem:[#allocation2 + $0xc20] sm:$0xff]
    %v5053 = vld [vmem:[#allocation2 + $0xc28] sm:$0xff]
    %v5054 = vld [vmem:[#allocation2 + $0xc30] sm:$0xff]
    %v5055 = vld [vmem:[#allocation2 + $0xc38] sm:$0xff]
    %v5064 = vunpack.c.l.b16 %v5048
    %v5065 = vunpack.c.h.b16 %v5048
    %v5066 = vunpack.c.l.b16 %v5049
    %v5067 = vunpack.c.h.b16 %v5049
    %v5068 = vunpack.c.l.b16 %v5050
    %v5069 = vunpack.c.h.b16 %v5050
    %v5070 = vunpack.c.l.b16 %v5051
    %v5071 = vunpack.c.h.b16 %v5051
    %v5072 = vunpack.c.l.b16 %v5052
    %v5073 = vunpack.c.h.b16 %v5052
    %v5074 = vunpack.c.l.b16 %v5053
    %v5075 = vunpack.c.h.b16 %v5053
    %v5076 = vunpack.c.l.b16 %v5054
    %v5077 = vunpack.c.h.b16 %v5054
    %v5078 = vunpack.c.l.b16 %v5055
    %v5079 = vunpack.c.h.b16 %v5055
    %v5080 = vpack.c.b16 %v5066, %v5064
    %v5081 = vpack.c.b16 %v5067, %v5065
    %v5082 = vpack.c.b16 %v5070, %v5068
    %v5083 = vpack.c.b16 %v5071, %v5069
    %v5084 = vpack.c.b16 %v5074, %v5072
    %v5085 = vpack.c.b16 %v5075, %v5073
    %v5086 = vpack.c.b16 %v5078, %v5076
    %v5087 = vpack.c.b16 %v5079, %v5077
    %v5097 = vsel %vm253, %v5047, 0
    %5099 = vmatprep.subr.bf16.mxu0 %v5081
    %5100 = vmatpush1.bf16.msra.mxu0 %v5080
    %5101 = vmatprep.subr.bf16.mxu0 %v5083
    %5102 = vmatpush1.bf16.msra.mxu0 %v5082
    %5103 = vmatprep.subr.bf16.mxu0 %v5085
    %5104 = vmatpush1.bf16.msra.mxu0 %v5084
    %5105 = vmatprep.subr.bf16.mxu0 %v5087
    %5106 = vmatpush1.bf16.msra.mxu0 %v5086
    %5107 = vmatprep.subr.bf16.mxu0 0
    %5108 = vmatpush1.bf16.msra.mxu0 0
    %5109 = vmatprep.subr.bf16.mxu0 0
    %5110 = vmatpush1.bf16.msra.mxu0 0
    %5111 = vmatprep.subr.bf16.mxu0 0
    %5112 = vmatpush1.bf16.msra.mxu0 0
    %5113 = vmatprep.subr.bf16.mxu0 0
    %5114 = vmatpush1.bf16.msra.mxu0 0
    %5115 = vmatprep.subr.bf16.mxu0 0
    %5116 = vmatpush1.bf16.msra.mxu0 0
    %5117 = vmatprep.subr.bf16.mxu0 0
    %5118 = vmatpush1.bf16.msra.mxu0 0
    %5119 = vmatprep.subr.bf16.mxu0 0
    %5120 = vmatpush1.bf16.msra.mxu0 0
    %5121 = vmatprep.subr.bf16.mxu0 0
    %5122 = vmatpush1.bf16.msra.mxu0 0
    %5123 = vmatprep.subr.bf16.mxu0 0
    %5124 = vmatpush1.bf16.msra.mxu0 0
    %5125 = vmatprep.subr.bf16.mxu0 0
    %5126 = vmatpush1.bf16.msra.mxu0 0
    %5127 = vmatprep.subr.bf16.mxu0 0
    %5128 = vmatpush1.bf16.msra.mxu0 0
    %5129 = vmatprep.subr.bf16.mxu0 0
    %5130 = vmatpush1.bf16.msra.mxu0 0
    %5131 = vmatprep.mubr.bf16.mxu0 0
    %5132 = vmatmul.mubr.bf16.gmra.mrb[0].mxu0 %v5097
    %v5133 = vpop.f32.mrb[0].mxu0
    %v5134 = vadd.f32 0.0, %v5133
    %v5135 = vpop.f32.mrb[0].mxu0
    %v5136 = vadd.f32 0.0, %v5135
    %v5137 = vpop.f32.mrb[0].mxu0
    %v5138 = vpop.f32.mrb[0].mxu0
    %5139 = vdwg.mxu0
    %v5140 = vadd.f32 %v5040, %v5134
    %v5141 = vadd.f32 %v5041, %v5136
    %v5142 = vld [vmem:[#allocation5] sm:$0x3]
    %v5144 = vlaneseq
    %v5145 = vshrl.u32 %v5144, 7
    %v5146 = vsub.s32 0, %v5145
    %v5147 = vrot.slane %v5142, %v5146
    %v5148 = vlaneseq
    %v5149 = vshrl.u32 %v5148, 7
    %v5150 = vsub.s32 1, %v5149
    %v5151 = vrot.slane %v5142, %v5150
    %v5154 = vadd.f32 %v5140, %v5147
    %v5155 = vadd.f32 %v5141, %v5151
    %v5156 = vmax.f32 %v5154, 0.0
    %v5157 = vmax.f32 %v5155, 0.0
    %v5158 = vpack.c.bf16 %v5156, %v5156
    %v5159 = vpack.c.bf16 %v5157, %v5157
    %v5160 = vld [vmem:[#allocation7] sm:$0xff]
    %v5161 = vld [vmem:[#allocation7 + $0x8] sm:$0xff]
    %v5162 = vld [vmem:[#allocation7 + $0x10] sm:$0xff]
    %v5163 = vld [vmem:[#allocation7 + $0x18] sm:$0xff]
    %v5164 = vld [vmem:[#allocation7 + $0x20] sm:$0xff]
    %v5165 = vld [vmem:[#allocation7 + $0x28] sm:$0xff]
    %v5166 = vld [vmem:[#allocation7 + $0x30] sm:$0xff]
    %v5167 = vld [vmem:[#allocation7 + $0x38] sm:$0xff]
    %v5168 = vld [vmem:[#allocation7 + $0x40] sm:$0xff]
    %v5169 = vld [vmem:[#allocation7 + $0x48] sm:$0xff]
    %v5170 = vld [vmem:[#allocation7 + $0x50] sm:$0xff]
    %v5171 = vld [vmem:[#allocation7 + $0x58] sm:$0xff]
    %v5172 = vld [vmem:[#allocation7 + $0x60] sm:$0xff]
    %v5173 = vld [vmem:[#allocation7 + $0x68] sm:$0xff]
    %v5174 = vld [vmem:[#allocation7 + $0x70] sm:$0xff]
    %v5175 = vld [vmem:[#allocation7 + $0x78] sm:$0xff]
    %v5176 = vld [vmem:[#allocation7 + $0x80] sm:$0xff]
    %v5177 = vld [vmem:[#allocation7 + $0x88] sm:$0xff]
    %v5178 = vld [vmem:[#allocation7 + $0x90] sm:$0xff]
    %v5179 = vld [vmem:[#allocation7 + $0x98] sm:$0xff]
    %v5180 = vld [vmem:[#allocation7 + $0xa0] sm:$0xff]
    %v5181 = vld [vmem:[#allocation7 + $0xa8] sm:$0xff]
    %v5182 = vld [vmem:[#allocation7 + $0xb0] sm:$0xff]
    %v5183 = vld [vmem:[#allocation7 + $0xb8] sm:$0xff]
    %v5184 = vld [vmem:[#allocation7 + $0xc0] sm:$0xff]
    %v5185 = vld [vmem:[#allocation7 + $0xc8] sm:$0xff]
    %v5186 = vld [vmem:[#allocation7 + $0xd0] sm:$0xff]
    %v5187 = vld [vmem:[#allocation7 + $0xd8] sm:$0xff]
    %v5188 = vld [vmem:[#allocation7 + $0xe0] sm:$0xff]
    %v5189 = vld [vmem:[#allocation7 + $0xe8] sm:$0xff]
    %v5190 = vld [vmem:[#allocation7 + $0xf0] sm:$0xff]
    %v5191 = vld [vmem:[#allocation7 + $0xf8] sm:$0xff]
    %v5192 = vld [vmem:[#allocation8] sm:$0x3]
    %v5194 = vlaneseq
    %v5195 = vshrl.u32 %v5194, 7
    %v5196 = vsub.s32 0, %v5195
    %v5197 = vrot.slane %v5192, %v5196
    %v5198 = vlaneseq
    %v5199 = vshrl.u32 %v5198, 7
    %v5200 = vsub.s32 1, %v5199
    %v5201 = vrot.slane %v5192, %v5200
    %v5236 = vunpack.c.l.b16 %v5160
    %v5237 = vunpack.c.h.b16 %v5160
    %v5238 = vunpack.c.l.b16 %v5161
    %v5239 = vunpack.c.h.b16 %v5161
    %v5240 = vunpack.c.l.b16 %v5162
    %v5241 = vunpack.c.h.b16 %v5162
    %v5242 = vunpack.c.l.b16 %v5163
    %v5243 = vunpack.c.h.b16 %v5163
    %v5244 = vunpack.c.l.b16 %v5164
    %v5245 = vunpack.c.h.b16 %v5164
    %v5246 = vunpack.c.l.b16 %v5165
    %v5247 = vunpack.c.h.b16 %v5165
    %v5248 = vunpack.c.l.b16 %v5166
    %v5249 = vunpack.c.h.b16 %v5166
    %v5250 = vunpack.c.l.b16 %v5167
    %v5251 = vunpack.c.h.b16 %v5167
    %v5252 = vunpack.c.l.b16 %v5168
    %v5253 = vunpack.c.h.b16 %v5168
    %v5254 = vunpack.c.l.b16 %v5169
    %v5255 = vunpack.c.h.b16 %v5169
    %v5256 = vunpack.c.l.b16 %v5170
    %v5257 = vunpack.c.h.b16 %v5170
    %v5258 = vunpack.c.l.b16 %v5171
    %v5259 = vunpack.c.h.b16 %v5171
    %v5260 = vunpack.c.l.b16 %v5172
    %v5261 = vunpack.c.h.b16 %v5172
    %v5262 = vunpack.c.l.b16 %v5173
    %v5263 = vunpack.c.h.b16 %v5173
    %v5264 = vunpack.c.l.b16 %v5174
    %v5265 = vunpack.c.h.b16 %v5174
    %v5266 = vunpack.c.l.b16 %v5175
    %v5267 = vunpack.c.h.b16 %v5175
    %v5268 = vunpack.c.l.b16 %v5176
    %v5269 = vunpack.c.h.b16 %v5176
    %v5270 = vunpack.c.l.b16 %v5177
    %v5271 = vunpack.c.h.b16 %v5177
    %v5272 = vunpack.c.l.b16 %v5178
    %v5273 = vunpack.c.h.b16 %v5178
    %v5274 = vunpack.c.l.b16 %v5179
    %v5275 = vunpack.c.h.b16 %v5179
    %v5276 = vunpack.c.l.b16 %v5180
    %v5277 = vunpack.c.h.b16 %v5180
    %v5278 = vunpack.c.l.b16 %v5181
    %v5279 = vunpack.c.h.b16 %v5181
    %v5280 = vunpack.c.l.b16 %v5182
    %v5281 = vunpack.c.h.b16 %v5182
    %v5282 = vunpack.c.l.b16 %v5183
    %v5283 = vunpack.c.h.b16 %v5183
    %v5284 = vunpack.c.l.b16 %v5184
    %v5285 = vunpack.c.h.b16 %v5184
    %v5286 = vunpack.c.l.b16 %v5185
    %v5287 = vunpack.c.h.b16 %v5185
    %v5288 = vunpack.c.l.b16 %v5186
    %v5289 = vunpack.c.h.b16 %v5186
    %v5290 = vunpack.c.l.b16 %v5187
    %v5291 = vunpack.c.h.b16 %v5187
    %v5292 = vunpack.c.l.b16 %v5188
    %v5293 = vunpack.c.h.b16 %v5188
    %v5294 = vunpack.c.l.b16 %v5189
    %v5295 = vunpack.c.h.b16 %v5189
    %v5296 = vunpack.c.l.b16 %v5190
    %v5297 = vunpack.c.h.b16 %v5190
    %v5298 = vunpack.c.l.b16 %v5191
    %v5299 = vunpack.c.h.b16 %v5191
    %v5300 = vpack.c.b16 %v5238, %v5236
    %v5301 = vpack.c.b16 %v5239, %v5237
    %v5302 = vpack.c.b16 %v5242, %v5240
    %v5303 = vpack.c.b16 %v5243, %v5241
    %v5304 = vpack.c.b16 %v5246, %v5244
    %v5305 = vpack.c.b16 %v5247, %v5245
    %v5306 = vpack.c.b16 %v5250, %v5248
    %v5307 = vpack.c.b16 %v5251, %v5249
    %v5308 = vpack.c.b16 %v5254, %v5252
    %v5309 = vpack.c.b16 %v5255, %v5253
    %v5310 = vpack.c.b16 %v5258, %v5256
    %v5311 = vpack.c.b16 %v5259, %v5257
    %v5312 = vpack.c.b16 %v5262, %v5260
    %v5313 = vpack.c.b16 %v5263, %v5261
    %v5314 = vpack.c.b16 %v5266, %v5264
    %v5315 = vpack.c.b16 %v5267, %v5265
    %v5316 = vpack.c.b16 %v5270, %v5268
    %v5317 = vpack.c.b16 %v5271, %v5269
    %v5318 = vpack.c.b16 %v5274, %v5272
    %v5319 = vpack.c.b16 %v5275, %v5273
    %v5320 = vpack.c.b16 %v5278, %v5276
    %v5321 = vpack.c.b16 %v5279, %v5277
    %v5322 = vpack.c.b16 %v5282, %v5280
    %v5323 = vpack.c.b16 %v5283, %v5281
    %v5324 = vpack.c.b16 %v5286, %v5284
    %v5325 = vpack.c.b16 %v5287, %v5285
    %v5326 = vpack.c.b16 %v5290, %v5288
    %v5327 = vpack.c.b16 %v5291, %v5289
    %v5328 = vpack.c.b16 %v5294, %v5292
    %v5329 = vpack.c.b16 %v5295, %v5293
    %v5330 = vpack.c.b16 %v5298, %v5296
    %v5331 = vpack.c.b16 %v5299, %v5297
    %5364 = vmatprep.subr.bf16.mxu0 %v5301
    %5365 = vmatpush1.bf16.msra.mxu0 %v5300
    %5366 = vmatprep.subr.bf16.mxu0 %v5303
    %5367 = vmatpush1.bf16.msra.mxu0 %v5302
    %5368 = vmatprep.subr.bf16.mxu0 %v5305
    %5369 = vmatpush1.bf16.msra.mxu0 %v5304
    %5370 = vmatprep.subr.bf16.mxu0 %v5307
    %5371 = vmatpush1.bf16.msra.mxu0 %v5306
    %5372 = vmatprep.subr.bf16.mxu0 %v5309
    %5373 = vmatpush1.bf16.msra.mxu0 %v5308
    %5374 = vmatprep.subr.bf16.mxu0 %v5311
    %5375 = vmatpush1.bf16.msra.mxu0 %v5310
    %5376 = vmatprep.subr.bf16.mxu0 %v5313
    %5377 = vmatpush1.bf16.msra.mxu0 %v5312
    %5378 = vmatprep.subr.bf16.mxu0 %v5315
    %5379 = vmatpush1.bf16.msra.mxu0 %v5314
    %5380 = vmatprep.subr.bf16.mxu0 %v5317
    %5381 = vmatpush1.bf16.msra.mxu0 %v5316
    %5382 = vmatprep.subr.bf16.mxu0 %v5319
    %5383 = vmatpush1.bf16.msra.mxu0 %v5318
    %5384 = vmatprep.subr.bf16.mxu0 %v5321
    %5385 = vmatpush1.bf16.msra.mxu0 %v5320
    %5386 = vmatprep.subr.bf16.mxu0 %v5323
    %5387 = vmatpush1.bf16.msra.mxu0 %v5322
    %5388 = vmatprep.subr.bf16.mxu0 %v5325
    %5389 = vmatpush1.bf16.msra.mxu0 %v5324
    %5390 = vmatprep.subr.bf16.mxu0 %v5327
    %5391 = vmatpush1.bf16.msra.mxu0 %v5326
    %5392 = vmatprep.subr.bf16.mxu0 %v5329
    %5393 = vmatpush1.bf16.msra.mxu0 %v5328
    %5394 = vmatprep.subr.bf16.mxu0 %v5331
    %5395 = vmatpush1.bf16.msra.mxu0 %v5330
    %5396 = vmatprep.mubr.bf16.mxu0 %v5159
    %5397 = vmatmul.mubr.bf16.gmra.mrb[0].mxu0 %v5158
    %v5398 = vpop.f32.mrb[0].mxu0
    %v5399 = vadd.f32 %v5197, %v5398
    %v5400 = vpop.f32.mrb[0].mxu0
    %v5401 = vadd.f32 %v5201, %v5400
    %v5402 = vpop.f32.mrb[0].mxu0
    %v5403 = vpop.f32.mrb[0].mxu0
    %5404 = vdwg.mxu0
    %v5405 = vmax.f32 %v5399, 0.0
    %v5406 = vmax.f32 %v5401, 0.0
    %v5409 = vcombine.low %v5405, %v5406
    %v5411 = vunpack.c.l.s4 1983009808
    %v5412 = vunpack.c.0.s8 %v5411
    %v5413 = vlaneseq
    %v5414 = vshrl.u32 %v5413, 7
    %v5415 = vsub.s32 %v5412, %v5414
    %v5416 = vrot.slane %v5409, %v5415
    %5418 = vst [vmem:[#allocation13] sm:$0xf] %v5416
    %v5419 = vpack.c.bf16 %v5405, %v5405
    %v5420 = vpack.c.bf16 %v5406, %v5406
    %v5421 = vld [vmem:[#allocation10] sm:$0xf]
    %v5422 = vld [vmem:[#allocation10 + $0x4] sm:$0xf]
    %v5423 = vld [vmem:[#allocation10 + $0x8] sm:$0xf]
    %v5424 = vld [vmem:[#allocation10 + $0xc] sm:$0xf]
    %v5425 = vld [vmem:[#allocation10 + $0x10] sm:$0xf]
    %v5426 = vld [vmem:[#allocation10 + $0x14] sm:$0xf]
    %v5427 = vld [vmem:[#allocation10 + $0x18] sm:$0xf]
    %v5428 = vld [vmem:[#allocation10 + $0x1c] sm:$0xf]
    %v5429 = vld [vmem:[#allocation10 + $0x20] sm:$0xf]
    %v5430 = vld [vmem:[#allocation10 + $0x24] sm:$0xf]
    %v5431 = vld [vmem:[#allocation10 + $0x28] sm:$0xf]
    %v5432 = vld [vmem:[#allocation10 + $0x2c] sm:$0xf]
    %v5433 = vld [vmem:[#allocation10 + $0x30] sm:$0xf]
    %v5434 = vld [vmem:[#allocation10 + $0x34] sm:$0xf]
    %v5435 = vld [vmem:[#allocation10 + $0x38] sm:$0xf]
    %v5436 = vld [vmem:[#allocation10 + $0x3c] sm:$0xf]
    %v5437 = vld [vmem:[#allocation10 + $0x40] sm:$0xf]
    %v5438 = vld [vmem:[#allocation10 + $0x44] sm:$0xf]
    %v5439 = vld [vmem:[#allocation10 + $0x48] sm:$0xf]
    %v5440 = vld [vmem:[#allocation10 + $0x4c] sm:$0xf]
    %v5441 = vld [vmem:[#allocation10 + $0x50] sm:$0xf]
    %v5442 = vld [vmem:[#allocation10 + $0x54] sm:$0xf]
    %v5443 = vld [vmem:[#allocation10 + $0x58] sm:$0xf]
    %v5444 = vld [vmem:[#allocation10 + $0x5c] sm:$0xf]
    %v5445 = vld [vmem:[#allocation10 + $0x60] sm:$0xf]
    %v5446 = vld [vmem:[#allocation10 + $0x64] sm:$0xf]
    %v5447 = vld [vmem:[#allocation10 + $0x68] sm:$0xf]
    %v5448 = vld [vmem:[#allocation10 + $0x6c] sm:$0xf]
    %v5449 = vld [vmem:[#allocation10 + $0x70] sm:$0xf]
    %v5450 = vld [vmem:[#allocation10 + $0x74] sm:$0xf]
    %v5451 = vld [vmem:[#allocation10 + $0x78] sm:$0xf]
    %v5452 = vld [vmem:[#allocation10 + $0x7c] sm:$0xf]
    %v5453 = vld [vmem:[#allocation11] sm:$0x1]
    %v5455 = vlaneseq
    %v5456 = vshrl.u32 %v5455, 7
    %v5457 = vsub.s32 0, %v5456
    %v5458 = vrot.slane %v5453, %v5457
    %v5492 = vunpack.c.l.b16 %v5421
    %v5493 = vunpack.c.l.b16 %v5422
    %v5494 = vunpack.c.l.b16 %v5423
    %v5495 = vunpack.c.l.b16 %v5424
    %v5496 = vunpack.c.l.b16 %v5425
    %v5497 = vunpack.c.l.b16 %v5426
    %v5498 = vunpack.c.l.b16 %v5427
    %v5499 = vunpack.c.l.b16 %v5428
    %v5500 = vunpack.c.l.b16 %v5429
    %v5501 = vunpack.c.l.b16 %v5430
    %v5502 = vunpack.c.l.b16 %v5431
    %v5503 = vunpack.c.l.b16 %v5432
    %v5504 = vunpack.c.l.b16 %v5433
    %v5505 = vunpack.c.l.b16 %v5434
    %v5506 = vunpack.c.l.b16 %v5435
    %v5507 = vunpack.c.l.b16 %v5436
    %v5508 = vunpack.c.l.b16 %v5437
    %v5509 = vunpack.c.l.b16 %v5438
    %v5510 = vunpack.c.l.b16 %v5439
    %v5511 = vunpack.c.l.b16 %v5440
    %v5512 = vunpack.c.l.b16 %v5441
    %v5513 = vunpack.c.l.b16 %v5442
    %v5514 = vunpack.c.l.b16 %v5443
    %v5515 = vunpack.c.l.b16 %v5444
    %v5516 = vunpack.c.l.b16 %v5445
    %v5517 = vunpack.c.l.b16 %v5446
    %v5518 = vunpack.c.l.b16 %v5447
    %v5519 = vunpack.c.l.b16 %v5448
    %v5520 = vunpack.c.l.b16 %v5449
    %v5521 = vunpack.c.l.b16 %v5450
    %v5522 = vunpack.c.l.b16 %v5451
    %v5523 = vunpack.c.l.b16 %v5452
    %v5524 = vpack.c.b16 %v5493, %v5492
    %v5525 = vpack.c.b16 %v5495, %v5494
    %v5526 = vpack.c.b16 %v5497, %v5496
    %v5527 = vpack.c.b16 %v5499, %v5498
    %v5528 = vpack.c.b16 %v5501, %v5500
    %v5529 = vpack.c.b16 %v5503, %v5502
    %v5530 = vpack.c.b16 %v5505, %v5504
    %v5531 = vpack.c.b16 %v5507, %v5506
    %v5532 = vpack.c.b16 %v5509, %v5508
    %v5533 = vpack.c.b16 %v5511, %v5510
    %v5534 = vpack.c.b16 %v5513, %v5512
    %v5535 = vpack.c.b16 %v5515, %v5514
    %v5536 = vpack.c.b16 %v5517, %v5516
    %v5537 = vpack.c.b16 %v5519, %v5518
    %v5538 = vpack.c.b16 %v5521, %v5520
    %v5539 = vpack.c.b16 %v5523, %v5522
    %5556 = vmatprep.subr.bf16.mxu0 0
    %5557 = vmatpush1.bf16.msra.mxu0 %v5524
    %5558 = vmatprep.subr.bf16.mxu0 0
    %5559 = vmatpush1.bf16.msra.mxu0 %v5525
    %5560 = vmatprep.subr.bf16.mxu0 0
    %5561 = vmatpush1.bf16.msra.mxu0 %v5526
    %5562 = vmatprep.subr.bf16.mxu0 0
    %5563 = vmatpush1.bf16.msra.mxu0 %v5527
    %5564 = vmatprep.subr.bf16.mxu0 0
    %5565 = vmatpush1.bf16.msra.mxu0 %v5528
    %5566 = vmatprep.subr.bf16.mxu0 0
    %5567 = vmatpush1.bf16.msra.mxu0 %v5529
    %5568 = vmatprep.subr.bf16.mxu0 0
    %5569 = vmatpush1.bf16.msra.mxu0 %v5530
    %5570 = vmatprep.subr.bf16.mxu0 0
    %5571 = vmatpush1.bf16.msra.mxu0 %v5531
    %5572 = vmatprep.subr.bf16.mxu0 0
    %5573 = vmatpush1.bf16.msra.mxu0 %v5532
    %5574 = vmatprep.subr.bf16.mxu0 0
    %5575 = vmatpush1.bf16.msra.mxu0 %v5533
    %5576 = vmatprep.subr.bf16.mxu0 0
    %5577 = vmatpush1.bf16.msra.mxu0 %v5534
    %5578 = vmatprep.subr.bf16.mxu0 0
    %5579 = vmatpush1.bf16.msra.mxu0 %v5535
    %5580 = vmatprep.subr.bf16.mxu0 0
    %5581 = vmatpush1.bf16.msra.mxu0 %v5536
    %5582 = vmatprep.subr.bf16.mxu0 0
    %5583 = vmatpush1.bf16.msra.mxu0 %v5537
    %5584 = vmatprep.subr.bf16.mxu0 0
    %5585 = vmatpush1.bf16.msra.mxu0 %v5538
    %5586 = vmatprep.subr.bf16.mxu0 0
    %5587 = vmatpush1.bf16.msra.mxu0 %v5539
    %5588 = vmatprep.mubr.bf16.mxu0 %v5420
    %5589 = vmatmul.mubr.bf16.gmra.mrb[0].mxu0 %v5419
    %v5590 = vpop.f32.mrb[0].mxu0
    %v5591 = vadd.f32 %v5458, %v5590
    %v5592 = vpop.f32.mrb[0].mxu0
    %v5593 = vpop.f32.mrb[0].mxu0
    %v5594 = vpop.f32.mrb[0].mxu0
    %5595 = vdwg.mxu0
    %5596 = vst [vmem:[#allocation14] sm:$0x3] %v5591
    // Predicated region
    $region58: #{vgg16prune_forward.1} parent=1 // pred_check
      _
    $region59: #{vgg16prune_forward.1} parent=1 // pred_check_branch
      %5598 = sbr.rel (0) target = $region61
    $region60: #{vgg16prune_forward.1} parent=1 // pred_region
      %s5600 = ssub.s32 64, 64
      %5601 = vsyncadd [#allocation4], %s5600
      %s5603 = sshll.u32 [#allocation13], 4
      %s5604 = int_to_ptr.vmem [resolvable:$true] %s5603
      %5606 = dma.vmem_to_hbm [thread:$0]  %s5604, 64, %s8, [#allocation4]
    $region61: #{vgg16prune_forward.1} parent=1 // pred_fallthru
      _
    // Predicated region
    $region62: #{vgg16prune_forward.1} parent=1 // pred_check
      _
    $region63: #{vgg16prune_forward.1} parent=1 // pred_check_branch
      %5608 = sbr.rel (0) target = $region65
    $region64: #{vgg16prune_forward.1} parent=1 // pred_region
      %s5610 = ssub.s32 32, 32
      %5611 = vsyncadd [#allocation15], %s5610
      %s5613 = sshll.u32 [#allocation14], 4
      %s5614 = int_to_ptr.vmem [resolvable:$true] %s5613
      %5616 = dma.vmem_to_hbm [thread:$0]  %s5614, 32, %s9, [#allocation15]
    $region65: #{vgg16prune_forward.1} parent=1 // pred_fallthru
      _
    // Predicated region
    $region66: #{vgg16prune_forward.1} parent=1 // pred_check
      _
    $region67: #{vgg16prune_forward.1} parent=1 // pred_check_branch
      %5618 = sbr.rel (0) target = $region69
    $region68: #{vgg16prune_forward.1} parent=1 // pred_region
      %5619 = dma.done [#allocation4], 64
    $region69: #{vgg16prune_forward.1} parent=1 // pred_fallthru
      _
    // Predicated region
    $region70: #{vgg16prune_forward.1} parent=1 // pred_check
      _
    $region71: #{vgg16prune_forward.1} parent=1 // pred_check_branch
      %5621 = sbr.rel (0) target = $region73
    $region72: #{vgg16prune_forward.1} parent=1 // pred_region
      %5622 = dma.done [#allocation15], 32
    $region73: #{vgg16prune_forward.1} parent=1 // pred_fallthru
      _
    %5623 = vsyncpa [#allocation3], 1
    %5624 = vsyncpa [#allocation6], 1
    %5625 = vsyncpa [#allocation9], 1
    %5626 = vsyncpa [#allocation12], 1
    %5627 = vsyncpa [#allocation4], 1
    %5628 = vsyncpa [#allocation15], 1

</llo_original>
